<compile_context>
chip_gen: v6e
topology: v6e:2x2x1
jax: 0.10.0
libtpu: 0.0.40
codegen_flags: <defaults>
</compile_context>

<pallas_src>
import math

import jax
import jax.numpy as jnp
import numpy as np
from jax.experimental import pallas as pl
from jax.experimental.pallas import tpu as pltpu

# ----- hyper params (bert_dim == hidden_dim is implicitly required by the torch code) -----
B = 2            # batch
C = 4            # number of answer choices
S = 8            # sentence_num per choice (concepts / passages)
H = 32           # bert_dim == hidden_dim
HOP = 3          # hop_num
NH = 4           # head_num
HD = H // NH     # head dim
T = HOP + 1      # number of stacked hop states
CB = B * C       # rows are b*C + c
STATS_HALF = 64  # lanes per field in the merged stats output

# ----- packed weight slab layout: [SLAB_ROWS, 128] f32, carved with static slices -----
_SLOT = {
    # [32,32] matrices, four per 32-row band
    "w_inter": (0, 0),   "wk": (0, 32),     "wv": (0, 64),     "wq": (0, 96),
    "whh_r": (32, 0),    "whh_z": (32, 32), "whh_n": (32, 64), "wih_r": (32, 96),
    "wih_z": (64, 0),    "wih_n": (64, 32), "w1_ac": (64, 64), "w1_bc": (64, 96),
    "w1_d": (96, 0),     "ones": (96, 32),  "mhead": (96, 64), "w2t": (96, 96),
    # [64,64] (cb,s) -> (s,cb) permutation (MXU gather)
    "perm": (128, 0),
    # bias rows [1,32] (b2 is [1,1])
    "bk": (192, 0), "bv": (192, 32), "bq": (192, 64), "br": (192, 96),
    "bz": (193, 0), "bn_i": (193, 32), "bn_h": (193, 64), "b1": (193, 96),
    "b2": (194, 0),
}
SLAB_ROWS = 200


# ===================== Fused kernel: multi-hop encoder + classifier =====================
def _attend(logit_flat, val_flat):
    """Softmax over the S row-tiles (per cb, per lane) and weighted sum of val rows.

    logit_flat/val_flat: [S*CB, H] with row = s*CB + cb; logits are already
    broadcast across the lanes they apply to, so everything is element-wise.
    """
    ls = [logit_flat[i * CB:(i + 1) * CB, :] for i in range(S)]
    vs = [val_flat[i * CB:(i + 1) * CB, :] for i in range(S)]
    m = ls[0]
    for i in range(1, S):
        m = jnp.maximum(m, ls[i])
    es = [jnp.exp(x - m) for x in ls]
    den = es[0]
    num = es[0] * vs[0]
    for i in range(1, S):
        den = den + es[i]
        num = num + es[i] * vs[i]
    return num * pl.reciprocal(den, approx=True)        # [CB, H]


def _fused_kernel(a_ref, con_ref, pas_ref, w_ref, q_out_ref, stats_ref):
    def mat(name, rows=H, cols=H):
        r, c = _SLOT[name]
        return w_ref[r:r + rows, c:c + cols]

    a = a_ref[...]                                   # [CB, H]
    con2 = con_ref[...]                              # [CB*S, H]  row = cb*S + s
    pas2 = pas_ref[...]                              # [CB*S, H]

    # ---- one-time (cb,s) -> (s,cb) reorder on the idle MXU; rows become s*CB+cb ----
    perm = mat("perm", CB * S, CB * S)               # [64, 64]
    con_sm = jnp.dot(perm, con2, preferred_element_type=jnp.float32)     # [64, 32]
    pas_sm = jnp.dot(perm, pas2, preferred_element_type=jnp.float32)     # [64, 32]

    # ---- K/V projections for all hops (computed once) ----
    k_sm = jnp.dot(pas_sm, mat("wk"), preferred_element_type=jnp.float32) + mat("bk", 1, H)
    v_sm = jnp.dot(pas_sm, mat("wv"), preferred_element_type=jnp.float32) + mat("bv", 1, H)

    # ---- InterAttention: answer attends over concept sentences (bilinear) ----
    qp = jnp.dot(a, mat("w_inter"), preferred_element_type=jnp.float32)   # [CB, H]
    qp_rep = jnp.concatenate([qp] * S, axis=0)                            # [64, 32]
    inter_logit = jnp.dot(qp_rep * con_sm, mat("ones"),
                          preferred_element_type=jnp.float32)             # logits bcast over lanes
    h = _attend(inter_logit, con_sm)                                      # [CB, H] == h_states[0]

    # ---- hop-invariant weight carves (hoisted out of the hop loop) ----
    wq, bq = mat("wq"), mat("bq", 1, H)
    whh_r, whh_z, whh_n = mat("whh_r"), mat("whh_z"), mat("whh_n")
    wih_r, wih_z, wih_n = mat("wih_r"), mat("wih_z"), mat("wih_n")
    br, bz = mat("br", 1, H), mat("bz", 1, H)
    bn_i, bn_h = mat("bn_i", 1, H), mat("bn_h", 1, H)
    mhead = mat("mhead")                                                  # block-diag, scale folded

    h_list = [h]
    for _ in range(HOP):
        # ---- AttentionRank: multi-head attention of h over passage sentences ----
        q = jnp.dot(h, wq, preferred_element_type=jnp.float32) + bq       # [CB, H]
        q_rep = jnp.concatenate([q] * S, axis=0)                          # [64, 32]
        logit = jnp.dot(q_rep * k_sm, mhead,
                        preferred_element_type=jnp.float32)               # per-head logits, bcast
        ctx = _attend(logit, v_sm)                                        # [CB, H]

        # ---- GRUCell (PyTorch gate order r, z, n); Wo/bo folded into W_ih ----
        r = jax.nn.sigmoid(jnp.dot(ctx, wih_r, preferred_element_type=jnp.float32)
                           + jnp.dot(h, whh_r, preferred_element_type=jnp.float32) + br)
        z = jax.nn.sigmoid(jnp.dot(ctx, wih_z, preferred_element_type=jnp.float32)
                           + jnp.dot(h, whh_z, preferred_element_type=jnp.float32) + bz)
        n = jnp.tanh(jnp.dot(ctx, wih_n, preferred_element_type=jnp.float32) + bn_i
                     + r * (jnp.dot(h, whh_n, preferred_element_type=jnp.float32) + bn_h))
        h = (1.0 - z) * n + z * h
        h_list.append(h)

    # ---- lane-dense hop-state output: [CB, T*H] = [8, 128] (single unmasked store) ----
    q_out_ref[...] = jnp.concatenate(h_list, axis=-1)

    # ---- classifier, decomposed: [a|h|a-h|a*h]@W1 = a@(W1a+W1c) + h@(W1b-W1c) + (a*h)@W1d ----
    w1_bc, w1_d = mat("w1_bc"), mat("w1_d")
    w2t, b2 = mat("w2t", H, 1), mat("b2", 1, 1)
    const_a = jnp.dot(a, mat("w1_ac"), preferred_element_type=jnp.float32) + mat("b1", 1, H)

    best_val = None
    best_idx = jnp.zeros((CB, 1), jnp.float32)
    for t, ht in enumerate(h_list):
        hdn = jnp.tanh(const_a
                       + jnp.dot(ht, w1_bc, preferred_element_type=jnp.float32)
                       + jnp.dot(a * ht, w1_d, preferred_element_type=jnp.float32))
        s_t = jnp.dot(hdn, w2t, preferred_element_type=jnp.float32) + b2   # [CB, 1]
        if t == 0:
            best_val = s_t
        else:
            upd = s_t > best_val
            best_val = jnp.where(upd, s_t, best_val)
            best_idx = jnp.where(upd, jnp.full_like(best_idx, float(t)), best_idx)

    # ---- merged lane-dense stats output: [val x64 | argmax-as-f32 x64] = [8, 128] ----
    stats_ref[...] = jnp.concatenate(
        [jnp.broadcast_to(best_val, (CB, STATS_HALF)),
         jnp.broadcast_to(best_idx, (CB, STATS_HALF))], axis=-1)


# ===================== Host-side weight packing (done ONCE, outside jit) =====================
def pack_weight_slab(p):
    def n(x):
        return np.asarray(x, np.float32)

    slab = np.zeros((SLAB_ROWS, 128), np.float32)

    def put(name, m):
        r, c = _SLOT[name]
        m = np.atleast_2d(n(m))
        slab[r:r + m.shape[0], c:c + m.shape[1]] = m

    # fold the GRU output projection Wo/bo into W_ih / b_ih (valid at inference: no
    # nonlinearity / dropout between the projection and the GRU input).
    wih = n(p["wo"]) @ n(p["w_ih"])                     # [H, 3H]
    bih = n(p["bo"]) @ n(p["w_ih"]) + n(p["b_ih"])      # [1, 3H]
    whh, bhh = n(p["w_hh"]), n(p["b_hh"])
    w1 = n(p["w1"])

    head = np.arange(H) // HD
    mhead = (head[:, None] == head[None, :]).astype(np.float32) / math.sqrt(HD)
    perm = np.zeros((S * CB, CB * S), np.float32)       # (cb,s) -> (s,cb)
    for cb in range(CB):
        for s in range(S):
            perm[s * CB + cb, cb * S + s] = 1.0

    put("w_inter", p["w_inter"])
    put("wk", p["wk"]); put("bk", p["bk"])
    put("wv", p["wv"]); put("bv", p["bv"])
    put("wq", p["wq"]); put("bq", p["bq"])
    put("whh_r", whh[:, 0:H]); put("whh_z", whh[:, H:2 * H]); put("whh_n", whh[:, 2 * H:3 * H])
    put("wih_r", wih[:, 0:H]); put("wih_z", wih[:, H:2 * H]); put("wih_n", wih[:, 2 * H:3 * H])
    put("br", bih[:, 0:H] + bhh[:, 0:H])
    put("bz", bih[:, H:2 * H] + bhh[:, H:2 * H])
    put("bn_i", bih[:, 2 * H:3 * H]); put("bn_h", bhh[:, 2 * H:3 * H])
    put("w1_ac", w1[0:H] + w1[2 * H:3 * H])
    put("w1_bc", w1[H:2 * H] - w1[2 * H:3 * H])
    put("w1_d", w1[3 * H:4 * H])
    put("b1", p["b1"])
    put("w2t", n(p["w2"]).T); put("b2", p["b2"])
    put("ones", np.ones((H, H), np.float32))
    put("mhead", mhead)
    put("perm", perm)
    return slab


# ===================== Full forward =====================
@jax.jit
def infohopnet_forward(ans_bch, con_bcsh, pas_bcsh, slab):
    vmem = pl.BlockSpec(memory_space=pltpu.MemorySpace.VMEM)
    q_flat, stats = pl.pallas_call(
        _fused_kernel,
        in_specs=[vmem] * 4,
        out_specs=(vmem, vmem),
        out_shape=(jax.ShapeDtypeStruct((CB, T * H), jnp.float32),
                   jax.ShapeDtypeStruct((CB, 2 * STATS_HALF), jnp.float32)),
    )(ans_bch.reshape(CB, H),
      con_bcsh.reshape(CB * S, H),
      pas_bcsh.reshape(CB * S, H),
      slab)

    q_bcth = q_flat.reshape(B, C, T, H)                 # rows are b*C + c -> free reshape
    vals_bc = stats[:, 0].reshape(B, C)
    idxs_bc = stats[:, STATS_HALF].astype(jnp.int32).reshape(B, C)
    return vals_bc, idxs_bc, q_bcth


# ===================== Pure-JAX reference (same math, no Pallas, no weight folding) =====================
def reference_forward(ans_bch, con_bcsh, pas_bcsh, p):
    def one_choice(a, con, pas):                        # a [B,H], con/pas [B,S,H]
        qp = a @ p["w_inter"]
        att0 = jax.nn.softmax(jnp.einsum("bh,bsh->bs", qp, con), axis=-1)
        h = jnp.einsum("bs,bsh->bh", att0, con)
        hs = [h]
        k = (jnp.einsum("bsh,hd->bsd", pas, p["wk"]) + p["bk"][0]).reshape(B, S, NH, HD)
        v = (jnp.einsum("bsh,hd->bsd", pas, p["wv"]) + p["bv"][0]).reshape(B, S, NH, HD)
        for _ in range(HOP):
            q = (h @ p["wq"] + p["bq"][0]).reshape(B, NH, HD)
            sc = jnp.einsum("bnd,bsnd->bsn", q, k) / math.sqrt(HD)
            att = jax.nn.softmax(sc, axis=1)
            ctx = jnp.einsum("bsn,bsnd->bnd", att, v).reshape(B, H)
            sel = ctx @ p["wo"] + p["bo"][0]
            gi = sel @ p["w_ih"] + p["b_ih"][0]
            gh = h @ p["w_hh"] + p["b_hh"][0]
            r = jax.nn.sigmoid(gi[:, :H] + gh[:, :H])
            z = jax.nn.sigmoid(gi[:, H:2 * H] + gh[:, H:2 * H])
            n = jnp.tanh(gi[:, 2 * H:] + r * gh[:, 2 * H:])
            h = (1.0 - z) * n + z * h
            hs.append(h)
        return jnp.stack(hs, axis=1)                    # [B, T, H]

    q_hiddens = jnp.stack([one_choice(ans_bch[:, c], con_bcsh[:, c], pas_bcsh[:, c])
                           for c in range(C)], axis=1)  # [B, C, T, H]
    a_rep = jnp.broadcast_to(ans_bch[:, :, None, :], (B, C, T, H))
    cat = jnp.concatenate([a_rep, q_hiddens, a_rep - q_hiddens, a_rep * q_hiddens], axis=-1)
    hid = jnp.tanh(cat @ p["w1"] + p["b1"][0])
    score = jnp.sum(hid * p["w2"][0], axis=-1) + p["b2"][0, 0]   # [B, C, T]
    return jnp.max(score, axis=2), jnp.argmax(score, axis=2), q_hiddens


# ===================== Deterministic parameter init =====================
def init_params(key):
    keys = jax.random.split(key, 16)

    def w(k, shape, scale=0.2):
        return (scale * jax.random.normal(k, shape)).astype(jnp.float32)

    p = {}
    p["w_inter"] = w(keys[0], (H, H))                                     # InterAttention bilinear
    p["wq"] = w(keys[1], (H, H)); p["bq"] = w(keys[2], (1, H), 0.05)      # AttentionRank
    p["wk"] = w(keys[3], (H, H)); p["bk"] = w(keys[4], (1, H), 0.05)
    p["wv"] = w(keys[5], (H, H)); p["bv"] = w(keys[6], (1, H), 0.05)
    p["wo"] = w(keys[7], (H, H)); p["bo"] = w(keys[8], (1, H), 0.05)
    p["w_ih"] = w(keys[9], (H, 3 * H)); p["b_ih"] = w(keys[10], (1, 3 * H), 0.05)   # GRUCell
    p["w_hh"] = w(keys[11], (H, 3 * H)); p["b_hh"] = w(keys[12], (1, 3 * H), 0.05)
    p["w1"] = w(keys[13], (4 * H, H)); p["b1"] = w(keys[14], (1, H), 0.05)          # classifier
    p["w2"] = w(keys[15], (1, H)); p["b2"] = jnp.zeros((1, 1), jnp.float32)
    return p


if __name__ == "__main__":
    root = jax.random.PRNGKey(0)
    k_ans, k_con, k_pas, k_par = jax.random.split(root, 4)

    # Pre-computed "BERT [CLS]" encodings (stand-ins for the frozen text encoder).
    ans_bch = jax.random.normal(k_ans, (B, C, H), dtype=jnp.float32)
    con_bcsh = jax.random.normal(k_con, (B, C, S, H), dtype=jnp.float32)
    pas_bcsh = jax.random.normal(k_pas, (B, C, S, H), dtype=jnp.float32)
    params = init_params(k_par)
    slab = jnp.asarray(pack_weight_slab(params))        # packed once on the host

    vals_k, idx_k, qh_k = infohopnet_forward(ans_bch, con_bcsh, pas_bcsh, slab)
    jax.block_until_ready((vals_k, idx_k, qh_k))

    vals_r, idx_r, qh_r = reference_forward(ans_bch, con_bcsh, pas_bcsh, params)
    np.testing.assert_allclose(np.asarray(qh_k), np.asarray(qh_r), rtol=2e-2, atol=2e-2)
    np.testing.assert_allclose(np.asarray(vals_k), np.asarray(vals_r), rtol=2e-2, atol=2e-2)

    print("KERNEL_OK")
</pallas_src>

<mosaic_0001>
module attributes {stable_mosaic.version = 11 : i64} {
  func.func @_fused_kernel(%arg0: memref<8x32xf32, #tpu.memory_space<vmem>>, %arg1: memref<64x32xf32, #tpu.memory_space<vmem>>, %arg2: memref<64x32xf32, #tpu.memory_space<vmem>>, %arg3: memref<200x128xf32, #tpu.memory_space<vmem>>, %arg4: memref<8x128xf32, #tpu.memory_space<vmem>>, %arg5: memref<8x128xf32, #tpu.memory_space<vmem>>) attributes {dimension_semantics = [], scalar_prefetch = 0 : i64, scratch_operands = 0 : i64, tpu.core_type = #tpu.core_type<tc>} {
    %c0 = arith.constant 0 : index
    %c0_0 = arith.constant 0 : index
    %0 = vector.load %arg0[%c0, %c0_0] : memref<8x32xf32, #tpu.memory_space<vmem>>, vector<8x32xf32>
    %c0_1 = arith.constant 0 : index
    %c0_2 = arith.constant 0 : index
    %1 = vector.load %arg1[%c0_1, %c0_2] : memref<64x32xf32, #tpu.memory_space<vmem>>, vector<64x32xf32>
    %c0_3 = arith.constant 0 : index
    %c0_4 = arith.constant 0 : index
    %2 = vector.load %arg2[%c0_3, %c0_4] : memref<64x32xf32, #tpu.memory_space<vmem>>, vector<64x32xf32>
    %c128 = arith.constant 128 : index
    %c0_5 = arith.constant 0 : index
    %3 = vector.load %arg3[%c128, %c0_5] : memref<200x128xf32, #tpu.memory_space<vmem>>, vector<64x64xf32>
    %cst = arith.constant dense<0.000000e+00> : vector<64x32xf32>
    %4 = tpu.matmul %3, %1, %cst {dimension_numbers = #tpu.dot_dimension_numbers<[1], [0], [0], [1], [0, 0, 1, 1], [], []>} : vector<64x64xf32>, vector<64x32xf32>, vector<64x32xf32> -> vector<64x32xf32>
    %cst_6 = arith.constant dense<0.000000e+00> : vector<64x32xf32>
    %5 = tpu.matmul %3, %2, %cst_6 {dimension_numbers = #tpu.dot_dimension_numbers<[1], [0], [0], [1], [0, 0, 1, 1], [], []>} : vector<64x64xf32>, vector<64x32xf32>, vector<64x32xf32> -> vector<64x32xf32>
    %c0_7 = arith.constant 0 : index
    %c32 = arith.constant 32 : index
    %6 = vector.load %arg3[%c0_7, %c32] : memref<200x128xf32, #tpu.memory_space<vmem>>, vector<32x32xf32>
    %cst_8 = arith.constant dense<0.000000e+00> : vector<64x32xf32>
    %7 = tpu.matmul %5, %6, %cst_8 {dimension_numbers = #tpu.dot_dimension_numbers<[1], [0], [0], [1], [0, 0, 1, 1], [], []>} : vector<64x32xf32>, vector<32x32xf32>, vector<64x32xf32> -> vector<64x32xf32>
    %c192 = arith.constant 192 : index
    %c0_9 = arith.constant 0 : index
    %8 = vector.load %arg3[%c192, %c0_9] : memref<200x128xf32, #tpu.memory_space<vmem>>, vector<1x32xf32>
    %9 = vector.broadcast %8 : vector<1x32xf32> to vector<64x32xf32>
    %10 = arith.addf %7, %9 : vector<64x32xf32>
    %c0_10 = arith.constant 0 : index
    %c64 = arith.constant 64 : index
    %11 = vector.load %arg3[%c0_10, %c64] : memref<200x128xf32, #tpu.memory_space<vmem>>, vector<32x32xf32>
    %cst_11 = arith.constant dense<0.000000e+00> : vector<64x32xf32>
    %12 = tpu.matmul %5, %11, %cst_11 {dimension_numbers = #tpu.dot_dimension_numbers<[1], [0], [0], [1], [0, 0, 1, 1], [], []>} : vector<64x32xf32>, vector<32x32xf32>, vector<64x32xf32> -> vector<64x32xf32>
    %c192_12 = arith.constant 192 : index
    %c32_13 = arith.constant 32 : index
    %13 = vector.load %arg3[%c192_12, %c32_13] : memref<200x128xf32, #tpu.memory_space<vmem>>, vector<1x32xf32>
    %14 = vector.broadcast %13 : vector<1x32xf32> to vector<64x32xf32>
    %15 = arith.addf %12, %14 : vector<64x32xf32>
    %c0_14 = arith.constant 0 : index
    %c0_15 = arith.constant 0 : index
    %16 = vector.load %arg3[%c0_14, %c0_15] : memref<200x128xf32, #tpu.memory_space<vmem>>, vector<32x32xf32>
    %cst_16 = arith.constant dense<0.000000e+00> : vector<8x32xf32>
    %17 = tpu.matmul %0, %16, %cst_16 {dimension_numbers = #tpu.dot_dimension_numbers<[1], [0], [0], [1], [0, 0, 1, 1], [], []>} : vector<8x32xf32>, vector<32x32xf32>, vector<8x32xf32> -> vector<8x32xf32>
    %18 = tpu.concatenate %17, %17, %17, %17, %17, %17, %17, %17 in 0 : vector<8x32xf32>, vector<8x32xf32>, vector<8x32xf32>, vector<8x32xf32>, vector<8x32xf32>, vector<8x32xf32>, vector<8x32xf32>, vector<8x32xf32> -> vector<64x32xf32>
    %19 = arith.mulf %18, %4 : vector<64x32xf32>
    %c96 = arith.constant 96 : index
    %c32_17 = arith.constant 32 : index
    %20 = vector.load %arg3[%c96, %c32_17] : memref<200x128xf32, #tpu.memory_space<vmem>>, vector<32x32xf32>
    %cst_18 = arith.constant dense<0.000000e+00> : vector<64x32xf32>
    %21 = tpu.matmul %19, %20, %cst_18 {dimension_numbers = #tpu.dot_dimension_numbers<[1], [0], [0], [1], [0, 0, 1, 1], [], []>} : vector<64x32xf32>, vector<32x32xf32>, vector<64x32xf32> -> vector<64x32xf32>
    %22 = vector.extract_strided_slice %21 {offsets = [0, 0], sizes = [8, 32], strides = [1, 1]} : vector<64x32xf32> to vector<8x32xf32>
    %23 = vector.extract_strided_slice %21 {offsets = [8, 0], sizes = [8, 32], strides = [1, 1]} : vector<64x32xf32> to vector<8x32xf32>
    %24 = vector.extract_strided_slice %21 {offsets = [16, 0], sizes = [8, 32], strides = [1, 1]} : vector<64x32xf32> to vector<8x32xf32>
    %25 = vector.extract_strided_slice %21 {offsets = [24, 0], sizes = [8, 32], strides = [1, 1]} : vector<64x32xf32> to vector<8x32xf32>
    %26 = vector.extract_strided_slice %21 {offsets = [32, 0], sizes = [8, 32], strides = [1, 1]} : vector<64x32xf32> to vector<8x32xf32>
    %27 = vector.extract_strided_slice %21 {offsets = [40, 0], sizes = [8, 32], strides = [1, 1]} : vector<64x32xf32> to vector<8x32xf32>
    %28 = vector.extract_strided_slice %21 {offsets = [48, 0], sizes = [8, 32], strides = [1, 1]} : vector<64x32xf32> to vector<8x32xf32>
    %29 = vector.extract_strided_slice %21 {offsets = [56, 0], sizes = [8, 32], strides = [1, 1]} : vector<64x32xf32> to vector<8x32xf32>
    %30 = vector.extract_strided_slice %4 {offsets = [0, 0], sizes = [8, 32], strides = [1, 1]} : vector<64x32xf32> to vector<8x32xf32>
    %31 = vector.extract_strided_slice %4 {offsets = [8, 0], sizes = [8, 32], strides = [1, 1]} : vector<64x32xf32> to vector<8x32xf32>
    %32 = vector.extract_strided_slice %4 {offsets = [16, 0], sizes = [8, 32], strides = [1, 1]} : vector<64x32xf32> to vector<8x32xf32>
    %33 = vector.extract_strided_slice %4 {offsets = [24, 0], sizes = [8, 32], strides = [1, 1]} : vector<64x32xf32> to vector<8x32xf32>
    %34 = vector.extract_strided_slice %4 {offsets = [32, 0], sizes = [8, 32], strides = [1, 1]} : vector<64x32xf32> to vector<8x32xf32>
    %35 = vector.extract_strided_slice %4 {offsets = [40, 0], sizes = [8, 32], strides = [1, 1]} : vector<64x32xf32> to vector<8x32xf32>
    %36 = vector.extract_strided_slice %4 {offsets = [48, 0], sizes = [8, 32], strides = [1, 1]} : vector<64x32xf32> to vector<8x32xf32>
    %37 = vector.extract_strided_slice %4 {offsets = [56, 0], sizes = [8, 32], strides = [1, 1]} : vector<64x32xf32> to vector<8x32xf32>
    %38 = arith.maximumf %22, %23 : vector<8x32xf32>
    %39 = arith.maximumf %38, %24 : vector<8x32xf32>
    %40 = arith.maximumf %39, %25 : vector<8x32xf32>
    %41 = arith.maximumf %40, %26 : vector<8x32xf32>
    %42 = arith.maximumf %41, %27 : vector<8x32xf32>
    %43 = arith.maximumf %42, %28 : vector<8x32xf32>
    %44 = arith.maximumf %43, %29 : vector<8x32xf32>
    %45 = arith.subf %22, %44 : vector<8x32xf32>
    %46 = math.exp %45 : vector<8x32xf32>
    %47 = arith.subf %23, %44 : vector<8x32xf32>
    %48 = math.exp %47 : vector<8x32xf32>
    %49 = arith.subf %24, %44 : vector<8x32xf32>
    %50 = math.exp %49 : vector<8x32xf32>
    %51 = arith.subf %25, %44 : vector<8x32xf32>
    %52 = math.exp %51 : vector<8x32xf32>
    %53 = arith.subf %26, %44 : vector<8x32xf32>
    %54 = math.exp %53 : vector<8x32xf32>
    %55 = arith.subf %27, %44 : vector<8x32xf32>
    %56 = math.exp %55 : vector<8x32xf32>
    %57 = arith.subf %28, %44 : vector<8x32xf32>
    %58 = math.exp %57 : vector<8x32xf32>
    %59 = arith.subf %29, %44 : vector<8x32xf32>
    %60 = math.exp %59 : vector<8x32xf32>
    %61 = arith.mulf %46, %30 : vector<8x32xf32>
    %62 = arith.addf %46, %48 : vector<8x32xf32>
    %63 = arith.mulf %48, %31 : vector<8x32xf32>
    %64 = arith.addf %61, %63 : vector<8x32xf32>
    %65 = arith.addf %62, %50 : vector<8x32xf32>
    %66 = arith.mulf %50, %32 : vector<8x32xf32>
    %67 = arith.addf %64, %66 : vector<8x32xf32>
    %68 = arith.addf %65, %52 : vector<8x32xf32>
    %69 = arith.mulf %52, %33 : vector<8x32xf32>
    %70 = arith.addf %67, %69 : vector<8x32xf32>
    %71 = arith.addf %68, %54 : vector<8x32xf32>
    %72 = arith.mulf %54, %34 : vector<8x32xf32>
    %73 = arith.addf %70, %72 : vector<8x32xf32>
    %74 = arith.addf %71, %56 : vector<8x32xf32>
    %75 = arith.mulf %56, %35 : vector<8x32xf32>
    %76 = arith.addf %73, %75 : vector<8x32xf32>
    %77 = arith.addf %74, %58 : vector<8x32xf32>
    %78 = arith.mulf %58, %36 : vector<8x32xf32>
    %79 = arith.addf %76, %78 : vector<8x32xf32>
    %80 = arith.addf %77, %60 : vector<8x32xf32>
    %81 = arith.mulf %60, %37 : vector<8x32xf32>
    %82 = arith.addf %79, %81 : vector<8x32xf32>
    %83 = tpu.reciprocal %80 {approx = true} : vector<8x32xf32> -> vector<8x32xf32>
    %84 = arith.mulf %82, %83 : vector<8x32xf32>
    %c0_19 = arith.constant 0 : index
    %c96_20 = arith.constant 96 : index
    %85 = vector.load %arg3[%c0_19, %c96_20] : memref<200x128xf32, #tpu.memory_space<vmem>>, vector<32x32xf32>
    %c192_21 = arith.constant 192 : index
    %c64_22 = arith.constant 64 : index
    %86 = vector.load %arg3[%c192_21, %c64_22] : memref<200x128xf32, #tpu.memory_space<vmem>>, vector<1x32xf32>
    %c32_23 = arith.constant 32 : index
    %c0_24 = arith.constant 0 : index
    %87 = vector.load %arg3[%c32_23, %c0_24] : memref<200x128xf32, #tpu.memory_space<vmem>>, vector<32x32xf32>
    %c32_25 = arith.constant 32 : index
    %c32_26 = arith.constant 32 : index
    %88 = vector.load %arg3[%c32_25, %c32_26] : memref<200x128xf32, #tpu.memory_space<vmem>>, vector<32x32xf32>
    %c32_27 = arith.constant 32 : index
    %c64_28 = arith.constant 64 : index
    %89 = vector.load %arg3[%c32_27, %c64_28] : memref<200x128xf32, #tpu.memory_space<vmem>>, vector<32x32xf32>
    %c32_29 = arith.constant 32 : index
    %c96_30 = arith.constant 96 : index
    %90 = vector.load %arg3[%c32_29, %c96_30] : memref<200x128xf32, #tpu.memory_space<vmem>>, vector<32x32xf32>
    %c64_31 = arith.constant 64 : index
    %c0_32 = arith.constant 0 : index
    %91 = vector.load %arg3[%c64_31, %c0_32] : memref<200x128xf32, #tpu.memory_space<vmem>>, vector<32x32xf32>
    %c64_33 = arith.constant 64 : index
    %c32_34 = arith.constant 32 : index
    %92 = vector.load %arg3[%c64_33, %c32_34] : memref<200x128xf32, #tpu.memory_space<vmem>>, vector<32x32xf32>
    %c192_35 = arith.constant 192 : index
    %c96_36 = arith.constant 96 : index
    %93 = vector.load %arg3[%c192_35, %c96_36] : memref<200x128xf32, #tpu.memory_space<vmem>>, vector<1x32xf32>
    %c193 = arith.constant 193 : index
    %c0_37 = arith.constant 0 : index
    %94 = vector.load %arg3[%c193, %c0_37] : memref<200x128xf32, #tpu.memory_space<vmem>>, vector<1x32xf32>
    %c193_38 = arith.constant 193 : index
    %c32_39 = arith.constant 32 : index
    %95 = vector.load %arg3[%c193_38, %c32_39] : memref<200x128xf32, #tpu.memory_space<vmem>>, vector<1x32xf32>
    %c193_40 = arith.constant 193 : index
    %c64_41 = arith.constant 64 : index
    %96 = vector.load %arg3[%c193_40, %c64_41] : memref<200x128xf32, #tpu.memory_space<vmem>>, vector<1x32xf32>
    %c96_42 = arith.constant 96 : index
    %c64_43 = arith.constant 64 : index
    %97 = vector.load %arg3[%c96_42, %c64_43] : memref<200x128xf32, #tpu.memory_space<vmem>>, vector<32x32xf32>
    %cst_44 = arith.constant dense<0.000000e+00> : vector<8x32xf32>
    %98 = tpu.matmul %84, %85, %cst_44 {dimension_numbers = #tpu.dot_dimension_numbers<[1], [0], [0], [1], [0, 0, 1, 1], [], []>} : vector<8x32xf32>, vector<32x32xf32>, vector<8x32xf32> -> vector<8x32xf32>
    %99 = vector.broadcast %86 : vector<1x32xf32> to vector<8x32xf32>
    %100 = arith.addf %98, %99 : vector<8x32xf32>
    %101 = tpu.concatenate %100, %100, %100, %100, %100, %100, %100, %100 in 0 : vector<8x32xf32>, vector<8x32xf32>, vector<8x32xf32>, vector<8x32xf32>, vector<8x32xf32>, vector<8x32xf32>, vector<8x32xf32>, vector<8x32xf32> -> vector<64x32xf32>
    %102 = arith.mulf %101, %10 : vector<64x32xf32>
    %cst_45 = arith.constant dense<0.000000e+00> : vector<64x32xf32>
    %103 = tpu.matmul %102, %97, %cst_45 {dimension_numbers = #tpu.dot_dimension_numbers<[1], [0], [0], [1], [0, 0, 1, 1], [], []>} : vector<64x32xf32>, vector<32x32xf32>, vector<64x32xf32> -> vector<64x32xf32>
    %104 = vector.extract_strided_slice %103 {offsets = [0, 0], sizes = [8, 32], strides = [1, 1]} : vector<64x32xf32> to vector<8x32xf32>
    %105 = vector.extract_strided_slice %103 {offsets = [8, 0], sizes = [8, 32], strides = [1, 1]} : vector<64x32xf32> to vector<8x32xf32>
    %106 = vector.extract_strided_slice %103 {offsets = [16, 0], sizes = [8, 32], strides = [1, 1]} : vector<64x32xf32> to vector<8x32xf32>
    %107 = vector.extract_strided_slice %103 {offsets = [24, 0], sizes = [8, 32], strides = [1, 1]} : vector<64x32xf32> to vector<8x32xf32>
    %108 = vector.extract_strided_slice %103 {offsets = [32, 0], sizes = [8, 32], strides = [1, 1]} : vector<64x32xf32> to vector<8x32xf32>
    %109 = vector.extract_strided_slice %103 {offsets = [40, 0], sizes = [8, 32], strides = [1, 1]} : vector<64x32xf32> to vector<8x32xf32>
    %110 = vector.extract_strided_slice %103 {offsets = [48, 0], sizes = [8, 32], strides = [1, 1]} : vector<64x32xf32> to vector<8x32xf32>
    %111 = vector.extract_strided_slice %103 {offsets = [56, 0], sizes = [8, 32], strides = [1, 1]} : vector<64x32xf32> to vector<8x32xf32>
    %112 = vector.extract_strided_slice %15 {offsets = [0, 0], sizes = [8, 32], strides = [1, 1]} : vector<64x32xf32> to vector<8x32xf32>
    %113 = vector.extract_strided_slice %15 {offsets = [8, 0], sizes = [8, 32], strides = [1, 1]} : vector<64x32xf32> to vector<8x32xf32>
    %114 = vector.extract_strided_slice %15 {offsets = [16, 0], sizes = [8, 32], strides = [1, 1]} : vector<64x32xf32> to vector<8x32xf32>
    %115 = vector.extract_strided_slice %15 {offsets = [24, 0], sizes = [8, 32], strides = [1, 1]} : vector<64x32xf32> to vector<8x32xf32>
    %116 = vector.extract_strided_slice %15 {offsets = [32, 0], sizes = [8, 32], strides = [1, 1]} : vector<64x32xf32> to vector<8x32xf32>
    %117 = vector.extract_strided_slice %15 {offsets = [40, 0], sizes = [8, 32], strides = [1, 1]} : vector<64x32xf32> to vector<8x32xf32>
    %118 = vector.extract_strided_slice %15 {offsets = [48, 0], sizes = [8, 32], strides = [1, 1]} : vector<64x32xf32> to vector<8x32xf32>
    %119 = vector.extract_strided_slice %15 {offsets = [56, 0], sizes = [8, 32], strides = [1, 1]} : vector<64x32xf32> to vector<8x32xf32>
    %120 = arith.maximumf %104, %105 : vector<8x32xf32>
    %121 = arith.maximumf %120, %106 : vector<8x32xf32>
    %122 = arith.maximumf %121, %107 : vector<8x32xf32>
    %123 = arith.maximumf %122, %108 : vector<8x32xf32>
    %124 = arith.maximumf %123, %109 : vector<8x32xf32>
    %125 = arith.maximumf %124, %110 : vector<8x32xf32>
    %126 = arith.maximumf %125, %111 : vector<8x32xf32>
    %127 = arith.subf %104, %126 : vector<8x32xf32>
    %128 = math.exp %127 : vector<8x32xf32>
    %129 = arith.subf %105, %126 : vector<8x32xf32>
    %130 = math.exp %129 : vector<8x32xf32>
    %131 = arith.subf %106, %126 : vector<8x32xf32>
    %132 = math.exp %131 : vector<8x32xf32>
    %133 = arith.subf %107, %126 : vector<8x32xf32>
    %134 = math.exp %133 : vector<8x32xf32>
    %135 = arith.subf %108, %126 : vector<8x32xf32>
    %136 = math.exp %135 : vector<8x32xf32>
    %137 = arith.subf %109, %126 : vector<8x32xf32>
    %138 = math.exp %137 : vector<8x32xf32>
    %139 = arith.subf %110, %126 : vector<8x32xf32>
    %140 = math.exp %139 : vector<8x32xf32>
    %141 = arith.subf %111, %126 : vector<8x32xf32>
    %142 = math.exp %141 : vector<8x32xf32>
    %143 = arith.mulf %128, %112 : vector<8x32xf32>
    %144 = arith.addf %128, %130 : vector<8x32xf32>
    %145 = arith.mulf %130, %113 : vector<8x32xf32>
    %146 = arith.addf %143, %145 : vector<8x32xf32>
    %147 = arith.addf %144, %132 : vector<8x32xf32>
    %148 = arith.mulf %132, %114 : vector<8x32xf32>
    %149 = arith.addf %146, %148 : vector<8x32xf32>
    %150 = arith.addf %147, %134 : vector<8x32xf32>
    %151 = arith.mulf %134, %115 : vector<8x32xf32>
    %152 = arith.addf %149, %151 : vector<8x32xf32>
    %153 = arith.addf %150, %136 : vector<8x32xf32>
    %154 = arith.mulf %136, %116 : vector<8x32xf32>
    %155 = arith.addf %152, %154 : vector<8x32xf32>
    %156 = arith.addf %153, %138 : vector<8x32xf32>
    %157 = arith.mulf %138, %117 : vector<8x32xf32>
    %158 = arith.addf %155, %157 : vector<8x32xf32>
    %159 = arith.addf %156, %140 : vector<8x32xf32>
    %160 = arith.mulf %140, %118 : vector<8x32xf32>
    %161 = arith.addf %158, %160 : vector<8x32xf32>
    %162 = arith.addf %159, %142 : vector<8x32xf32>
    %163 = arith.mulf %142, %119 : vector<8x32xf32>
    %164 = arith.addf %161, %163 : vector<8x32xf32>
    %165 = tpu.reciprocal %162 {approx = true} : vector<8x32xf32> -> vector<8x32xf32>
    %166 = arith.mulf %164, %165 : vector<8x32xf32>
    %cst_46 = arith.constant dense<0.000000e+00> : vector<8x32xf32>
    %167 = tpu.matmul %166, %90, %cst_46 {dimension_numbers = #tpu.dot_dimension_numbers<[1], [0], [0], [1], [0, 0, 1, 1], [], []>} : vector<8x32xf32>, vector<32x32xf32>, vector<8x32xf32> -> vector<8x32xf32>
    %cst_47 = arith.constant dense<0.000000e+00> : vector<8x32xf32>
    %168 = tpu.matmul %84, %87, %cst_47 {dimension_numbers = #tpu.dot_dimension_numbers<[1], [0], [0], [1], [0, 0, 1, 1], [], []>} : vector<8x32xf32>, vector<32x32xf32>, vector<8x32xf32> -> vector<8x32xf32>
    %169 = arith.addf %167, %168 : vector<8x32xf32>
    %170 = vector.broadcast %93 : vector<1x32xf32> to vector<8x32xf32>
    %171 = arith.addf %169, %170 : vector<8x32xf32>
    %172 = arith.negf %171 : vector<8x32xf32>
    %173 = math.exp %172 : vector<8x32xf32>
    %cst_48 = arith.constant 1.000000e+00 : f32
    %174 = vector.broadcast %cst_48 : f32 to vector<8x32xf32>
    %175 = arith.addf %174, %173 : vector<8x32xf32>
    %176 = arith.divf %174, %175 : vector<8x32xf32>
    %cst_49 = arith.constant dense<0.000000e+00> : vector<8x32xf32>
    %177 = tpu.matmul %166, %91, %cst_49 {dimension_numbers = #tpu.dot_dimension_numbers<[1], [0], [0], [1], [0, 0, 1, 1], [], []>} : vector<8x32xf32>, vector<32x32xf32>, vector<8x32xf32> -> vector<8x32xf32>
    %cst_50 = arith.constant dense<0.000000e+00> : vector<8x32xf32>
    %178 = tpu.matmul %84, %88, %cst_50 {dimension_numbers = #tpu.dot_dimension_numbers<[1], [0], [0], [1], [0, 0, 1, 1], [], []>} : vector<8x32xf32>, vector<32x32xf32>, vector<8x32xf32> -> vector<8x32xf32>
    %179 = arith.addf %177, %178 : vector<8x32xf32>
    %180 = vector.broadcast %94 : vector<1x32xf32> to vector<8x32xf32>
    %181 = arith.addf %179, %180 : vector<8x32xf32>
    %182 = arith.negf %181 : vector<8x32xf32>
    %183 = math.exp %182 : vector<8x32xf32>
    %cst_51 = arith.constant 1.000000e+00 : f32
    %184 = vector.broadcast %cst_51 : f32 to vector<8x32xf32>
    %185 = arith.addf %184, %183 : vector<8x32xf32>
    %186 = arith.divf %184, %185 : vector<8x32xf32>
    %cst_52 = arith.constant dense<0.000000e+00> : vector<8x32xf32>
    %187 = tpu.matmul %166, %92, %cst_52 {dimension_numbers = #tpu.dot_dimension_numbers<[1], [0], [0], [1], [0, 0, 1, 1], [], []>} : vector<8x32xf32>, vector<32x32xf32>, vector<8x32xf32> -> vector<8x32xf32>
    %188 = vector.broadcast %95 : vector<1x32xf32> to vector<8x32xf32>
    %189 = arith.addf %187, %188 : vector<8x32xf32>
    %cst_53 = arith.constant dense<0.000000e+00> : vector<8x32xf32>
    %190 = tpu.matmul %84, %89, %cst_53 {dimension_numbers = #tpu.dot_dimension_numbers<[1], [0], [0], [1], [0, 0, 1, 1], [], []>} : vector<8x32xf32>, vector<32x32xf32>, vector<8x32xf32> -> vector<8x32xf32>
    %191 = vector.broadcast %96 : vector<1x32xf32> to vector<8x32xf32>
    %192 = arith.addf %190, %191 : vector<8x32xf32>
    %193 = arith.mulf %176, %192 : vector<8x32xf32>
    %194 = arith.addf %189, %193 : vector<8x32xf32>
    %195 = math.tanh %194 : vector<8x32xf32>
    %cst_54 = arith.constant 1.000000e+00 : f32
    %196 = vector.broadcast %cst_54 : f32 to vector<8x32xf32>
    %197 = arith.subf %196, %186 : vector<8x32xf32>
    %198 = arith.mulf %197, %195 : vector<8x32xf32>
    %199 = arith.mulf %186, %84 : vector<8x32xf32>
    %200 = arith.addf %198, %199 : vector<8x32xf32>
    %cst_55 = arith.constant dense<0.000000e+00> : vector<8x32xf32>
    %201 = tpu.matmul %200, %85, %cst_55 {dimension_numbers = #tpu.dot_dimension_numbers<[1], [0], [0], [1], [0, 0, 1, 1], [], []>} : vector<8x32xf32>, vector<32x32xf32>, vector<8x32xf32> -> vector<8x32xf32>
    %202 = vector.broadcast %86 : vector<1x32xf32> to vector<8x32xf32>
    %203 = arith.addf %201, %202 : vector<8x32xf32>
    %204 = tpu.concatenate %203, %203, %203, %203, %203, %203, %203, %203 in 0 : vector<8x32xf32>, vector<8x32xf32>, vector<8x32xf32>, vector<8x32xf32>, vector<8x32xf32>, vector<8x32xf32>, vector<8x32xf32>, vector<8x32xf32> -> vector<64x32xf32>
    %205 = arith.mulf %204, %10 : vector<64x32xf32>
    %cst_56 = arith.constant dense<0.000000e+00> : vector<64x32xf32>
    %206 = tpu.matmul %205, %97, %cst_56 {dimension_numbers = #tpu.dot_dimension_numbers<[1], [0], [0], [1], [0, 0, 1, 1], [], []>} : vector<64x32xf32>, vector<32x32xf32>, vector<64x32xf32> -> vector<64x32xf32>
    %207 = vector.extract_strided_slice %206 {offsets = [0, 0], sizes = [8, 32], strides = [1, 1]} : vector<64x32xf32> to vector<8x32xf32>
    %208 = vector.extract_strided_slice %206 {offsets = [8, 0], sizes = [8, 32], strides = [1, 1]} : vector<64x32xf32> to vector<8x32xf32>
    %209 = vector.extract_strided_slice %206 {offsets = [16, 0], sizes = [8, 32], strides = [1, 1]} : vector<64x32xf32> to vector<8x32xf32>
    %210 = vector.extract_strided_slice %206 {offsets = [24, 0], sizes = [8, 32], strides = [1, 1]} : vector<64x32xf32> to vector<8x32xf32>
    %211 = vector.extract_strided_slice %206 {offsets = [32, 0], sizes = [8, 32], strides = [1, 1]} : vector<64x32xf32> to vector<8x32xf32>
    %212 = vector.extract_strided_slice %206 {offsets = [40, 0], sizes = [8, 32], strides = [1, 1]} : vector<64x32xf32> to vector<8x32xf32>
    %213 = vector.extract_strided_slice %206 {offsets = [48, 0], sizes = [8, 32], strides = [1, 1]} : vector<64x32xf32> to vector<8x32xf32>
    %214 = vector.extract_strided_slice %206 {offsets = [56, 0], sizes = [8, 32], strides = [1, 1]} : vector<64x32xf32> to vector<8x32xf32>
    %215 = vector.extract_strided_slice %15 {offsets = [0, 0], sizes = [8, 32], strides = [1, 1]} : vector<64x32xf32> to vector<8x32xf32>
    %216 = vector.extract_strided_slice %15 {offsets = [8, 0], sizes = [8, 32], strides = [1, 1]} : vector<64x32xf32> to vector<8x32xf32>
    %217 = vector.extract_strided_slice %15 {offsets = [16, 0], sizes = [8, 32], strides = [1, 1]} : vector<64x32xf32> to vector<8x32xf32>
    %218 = vector.extract_strided_slice %15 {offsets = [24, 0], sizes = [8, 32], strides = [1, 1]} : vector<64x32xf32> to vector<8x32xf32>
    %219 = vector.extract_strided_slice %15 {offsets = [32, 0], sizes = [8, 32], strides = [1, 1]} : vector<64x32xf32> to vector<8x32xf32>
    %220 = vector.extract_strided_slice %15 {offsets = [40, 0], sizes = [8, 32], strides = [1, 1]} : vector<64x32xf32> to vector<8x32xf32>
    %221 = vector.extract_strided_slice %15 {offsets = [48, 0], sizes = [8, 32], strides = [1, 1]} : vector<64x32xf32> to vector<8x32xf32>
    %222 = vector.extract_strided_slice %15 {offsets = [56, 0], sizes = [8, 32], strides = [1, 1]} : vector<64x32xf32> to vector<8x32xf32>
    %223 = arith.maximumf %207, %208 : vector<8x32xf32>
    %224 = arith.maximumf %223, %209 : vector<8x32xf32>
    %225 = arith.maximumf %224, %210 : vector<8x32xf32>
    %226 = arith.maximumf %225, %211 : vector<8x32xf32>
    %227 = arith.maximumf %226, %212 : vector<8x32xf32>
    %228 = arith.maximumf %227, %213 : vector<8x32xf32>
    %229 = arith.maximumf %228, %214 : vector<8x32xf32>
    %230 = arith.subf %207, %229 : vector<8x32xf32>
    %231 = math.exp %230 : vector<8x32xf32>
    %232 = arith.subf %208, %229 : vector<8x32xf32>
    %233 = math.exp %232 : vector<8x32xf32>
    %234 = arith.subf %209, %229 : vector<8x32xf32>
    %235 = math.exp %234 : vector<8x32xf32>
    %236 = arith.subf %210, %229 : vector<8x32xf32>
    %237 = math.exp %236 : vector<8x32xf32>
    %238 = arith.subf %211, %229 : vector<8x32xf32>
    %239 = math.exp %238 : vector<8x32xf32>
    %240 = arith.subf %212, %229 : vector<8x32xf32>
    %241 = math.exp %240 : vector<8x32xf32>
    %242 = arith.subf %213, %229 : vector<8x32xf32>
    %243 = math.exp %242 : vector<8x32xf32>
    %244 = arith.subf %214, %229 : vector<8x32xf32>
    %245 = math.exp %244 : vector<8x32xf32>
    %246 = arith.mulf %231, %215 : vector<8x32xf32>
    %247 = arith.addf %231, %233 : vector<8x32xf32>
    %248 = arith.mulf %233, %216 : vector<8x32xf32>
    %249 = arith.addf %246, %248 : vector<8x32xf32>
    %250 = arith.addf %247, %235 : vector<8x32xf32>
    %251 = arith.mulf %235, %217 : vector<8x32xf32>
    %252 = arith.addf %249, %251 : vector<8x32xf32>
    %253 = arith.addf %250, %237 : vector<8x32xf32>
    %254 = arith.mulf %237, %218 : vector<8x32xf32>
    %255 = arith.addf %252, %254 : vector<8x32xf32>
    %256 = arith.addf %253, %239 : vector<8x32xf32>
    %257 = arith.mulf %239, %219 : vector<8x32xf32>
    %258 = arith.addf %255, %257 : vector<8x32xf32>
    %259 = arith.addf %256, %241 : vector<8x32xf32>
    %260 = arith.mulf %241, %220 : vector<8x32xf32>
    %261 = arith.addf %258, %260 : vector<8x32xf32>
    %262 = arith.addf %259, %243 : vector<8x32xf32>
    %263 = arith.mulf %243, %221 : vector<8x32xf32>
    %264 = arith.addf %261, %263 : vector<8x32xf32>
    %265 = arith.addf %262, %245 : vector<8x32xf32>
    %266 = arith.mulf %245, %222 : vector<8x32xf32>
    %267 = arith.addf %264, %266 : vector<8x32xf32>
    %268 = tpu.reciprocal %265 {approx = true} : vector<8x32xf32> -> vector<8x32xf32>
    %269 = arith.mulf %267, %268 : vector<8x32xf32>
    %cst_57 = arith.constant dense<0.000000e+00> : vector<8x32xf32>
    %270 = tpu.matmul %269, %90, %cst_57 {dimension_numbers = #tpu.dot_dimension_numbers<[1], [0], [0], [1], [0, 0, 1, 1], [], []>} : vector<8x32xf32>, vector<32x32xf32>, vector<8x32xf32> -> vector<8x32xf32>
    %cst_58 = arith.constant dense<0.000000e+00> : vector<8x32xf32>
    %271 = tpu.matmul %200, %87, %cst_58 {dimension_numbers = #tpu.dot_dimension_numbers<[1], [0], [0], [1], [0, 0, 1, 1], [], []>} : vector<8x32xf32>, vector<32x32xf32>, vector<8x32xf32> -> vector<8x32xf32>
    %272 = arith.addf %270, %271 : vector<8x32xf32>
    %273 = vector.broadcast %93 : vector<1x32xf32> to vector<8x32xf32>
    %274 = arith.addf %272, %273 : vector<8x32xf32>
    %275 = arith.negf %274 : vector<8x32xf32>
    %276 = math.exp %275 : vector<8x32xf32>
    %cst_59 = arith.constant 1.000000e+00 : f32
    %277 = vector.broadcast %cst_59 : f32 to vector<8x32xf32>
    %278 = arith.addf %277, %276 : vector<8x32xf32>
    %279 = arith.divf %277, %278 : vector<8x32xf32>
    %cst_60 = arith.constant dense<0.000000e+00> : vector<8x32xf32>
    %280 = tpu.matmul %269, %91, %cst_60 {dimension_numbers = #tpu.dot_dimension_numbers<[1], [0], [0], [1], [0, 0, 1, 1], [], []>} : vector<8x32xf32>, vector<32x32xf32>, vector<8x32xf32> -> vector<8x32xf32>
    %cst_61 = arith.constant dense<0.000000e+00> : vector<8x32xf32>
    %281 = tpu.matmul %200, %88, %cst_61 {dimension_numbers = #tpu.dot_dimension_numbers<[1], [0], [0], [1], [0, 0, 1, 1], [], []>} : vector<8x32xf32>, vector<32x32xf32>, vector<8x32xf32> -> vector<8x32xf32>
    %282 = arith.addf %280, %281 : vector<8x32xf32>
    %283 = vector.broadcast %94 : vector<1x32xf32> to vector<8x32xf32>
    %284 = arith.addf %282, %283 : vector<8x32xf32>
    %285 = arith.negf %284 : vector<8x32xf32>
    %286 = math.exp %285 : vector<8x32xf32>
    %cst_62 = arith.constant 1.000000e+00 : f32
    %287 = vector.broadcast %cst_62 : f32 to vector<8x32xf32>
    %288 = arith.addf %287, %286 : vector<8x32xf32>
    %289 = arith.divf %287, %288 : vector<8x32xf32>
    %cst_63 = arith.constant dense<0.000000e+00> : vector<8x32xf32>
    %290 = tpu.matmul %269, %92, %cst_63 {dimension_numbers = #tpu.dot_dimension_numbers<[1], [0], [0], [1], [0, 0, 1, 1], [], []>} : vector<8x32xf32>, vector<32x32xf32>, vector<8x32xf32> -> vector<8x32xf32>
    %291 = vector.broadcast %95 : vector<1x32xf32> to vector<8x32xf32>
    %292 = arith.addf %290, %291 : vector<8x32xf32>
    %cst_64 = arith.constant dense<0.000000e+00> : vector<8x32xf32>
    %293 = tpu.matmul %200, %89, %cst_64 {dimension_numbers = #tpu.dot_dimension_numbers<[1], [0], [0], [1], [0, 0, 1, 1], [], []>} : vector<8x32xf32>, vector<32x32xf32>, vector<8x32xf32> -> vector<8x32xf32>
    %294 = vector.broadcast %96 : vector<1x32xf32> to vector<8x32xf32>
    %295 = arith.addf %293, %294 : vector<8x32xf32>
    %296 = arith.mulf %279, %295 : vector<8x32xf32>
    %297 = arith.addf %292, %296 : vector<8x32xf32>
    %298 = math.tanh %297 : vector<8x32xf32>
    %cst_65 = arith.constant 1.000000e+00 : f32
    %299 = vector.broadcast %cst_65 : f32 to vector<8x32xf32>
    %300 = arith.subf %299, %289 : vector<8x32xf32>
    %301 = arith.mulf %300, %298 : vector<8x32xf32>
    %302 = arith.mulf %289, %200 : vector<8x32xf32>
    %303 = arith.addf %301, %302 : vector<8x32xf32>
    %cst_66 = arith.constant dense<0.000000e+00> : vector<8x32xf32>
    %304 = tpu.matmul %303, %85, %cst_66 {dimension_numbers = #tpu.dot_dimension_numbers<[1], [0], [0], [1], [0, 0, 1, 1], [], []>} : vector<8x32xf32>, vector<32x32xf32>, vector<8x32xf32> -> vector<8x32xf32>
    %305 = vector.broadcast %86 : vector<1x32xf32> to vector<8x32xf32>
    %306 = arith.addf %304, %305 : vector<8x32xf32>
    %307 = tpu.concatenate %306, %306, %306, %306, %306, %306, %306, %306 in 0 : vector<8x32xf32>, vector<8x32xf32>, vector<8x32xf32>, vector<8x32xf32>, vector<8x32xf32>, vector<8x32xf32>, vector<8x32xf32>, vector<8x32xf32> -> vector<64x32xf32>
    %308 = arith.mulf %307, %10 : vector<64x32xf32>
    %cst_67 = arith.constant dense<0.000000e+00> : vector<64x32xf32>
    %309 = tpu.matmul %308, %97, %cst_67 {dimension_numbers = #tpu.dot_dimension_numbers<[1], [0], [0], [1], [0, 0, 1, 1], [], []>} : vector<64x32xf32>, vector<32x32xf32>, vector<64x32xf32> -> vector<64x32xf32>
    %310 = vector.extract_strided_slice %309 {offsets = [0, 0], sizes = [8, 32], strides = [1, 1]} : vector<64x32xf32> to vector<8x32xf32>
    %311 = vector.extract_strided_slice %309 {offsets = [8, 0], sizes = [8, 32], strides = [1, 1]} : vector<64x32xf32> to vector<8x32xf32>
    %312 = vector.extract_strided_slice %309 {offsets = [16, 0], sizes = [8, 32], strides = [1, 1]} : vector<64x32xf32> to vector<8x32xf32>
    %313 = vector.extract_strided_slice %309 {offsets = [24, 0], sizes = [8, 32], strides = [1, 1]} : vector<64x32xf32> to vector<8x32xf32>
    %314 = vector.extract_strided_slice %309 {offsets = [32, 0], sizes = [8, 32], strides = [1, 1]} : vector<64x32xf32> to vector<8x32xf32>
    %315 = vector.extract_strided_slice %309 {offsets = [40, 0], sizes = [8, 32], strides = [1, 1]} : vector<64x32xf32> to vector<8x32xf32>
    %316 = vector.extract_strided_slice %309 {offsets = [48, 0], sizes = [8, 32], strides = [1, 1]} : vector<64x32xf32> to vector<8x32xf32>
    %317 = vector.extract_strided_slice %309 {offsets = [56, 0], sizes = [8, 32], strides = [1, 1]} : vector<64x32xf32> to vector<8x32xf32>
    %318 = vector.extract_strided_slice %15 {offsets = [0, 0], sizes = [8, 32], strides = [1, 1]} : vector<64x32xf32> to vector<8x32xf32>
    %319 = vector.extract_strided_slice %15 {offsets = [8, 0], sizes = [8, 32], strides = [1, 1]} : vector<64x32xf32> to vector<8x32xf32>
    %320 = vector.extract_strided_slice %15 {offsets = [16, 0], sizes = [8, 32], strides = [1, 1]} : vector<64x32xf32> to vector<8x32xf32>
    %321 = vector.extract_strided_slice %15 {offsets = [24, 0], sizes = [8, 32], strides = [1, 1]} : vector<64x32xf32> to vector<8x32xf32>
    %322 = vector.extract_strided_slice %15 {offsets = [32, 0], sizes = [8, 32], strides = [1, 1]} : vector<64x32xf32> to vector<8x32xf32>
    %323 = vector.extract_strided_slice %15 {offsets = [40, 0], sizes = [8, 32], strides = [1, 1]} : vector<64x32xf32> to vector<8x32xf32>
    %324 = vector.extract_strided_slice %15 {offsets = [48, 0], sizes = [8, 32], strides = [1, 1]} : vector<64x32xf32> to vector<8x32xf32>
    %325 = vector.extract_strided_slice %15 {offsets = [56, 0], sizes = [8, 32], strides = [1, 1]} : vector<64x32xf32> to vector<8x32xf32>
    %326 = arith.maximumf %310, %311 : vector<8x32xf32>
    %327 = arith.maximumf %326, %312 : vector<8x32xf32>
    %328 = arith.maximumf %327, %313 : vector<8x32xf32>
    %329 = arith.maximumf %328, %314 : vector<8x32xf32>
    %330 = arith.maximumf %329, %315 : vector<8x32xf32>
    %331 = arith.maximumf %330, %316 : vector<8x32xf32>
    %332 = arith.maximumf %331, %317 : vector<8x32xf32>
    %333 = arith.subf %310, %332 : vector<8x32xf32>
    %334 = math.exp %333 : vector<8x32xf32>
    %335 = arith.subf %311, %332 : vector<8x32xf32>
    %336 = math.exp %335 : vector<8x32xf32>
    %337 = arith.subf %312, %332 : vector<8x32xf32>
    %338 = math.exp %337 : vector<8x32xf32>
    %339 = arith.subf %313, %332 : vector<8x32xf32>
    %340 = math.exp %339 : vector<8x32xf32>
    %341 = arith.subf %314, %332 : vector<8x32xf32>
    %342 = math.exp %341 : vector<8x32xf32>
    %343 = arith.subf %315, %332 : vector<8x32xf32>
    %344 = math.exp %343 : vector<8x32xf32>
    %345 = arith.subf %316, %332 : vector<8x32xf32>
    %346 = math.exp %345 : vector<8x32xf32>
    %347 = arith.subf %317, %332 : vector<8x32xf32>
    %348 = math.exp %347 : vector<8x32xf32>
    %349 = arith.mulf %334, %318 : vector<8x32xf32>
    %350 = arith.addf %334, %336 : vector<8x32xf32>
    %351 = arith.mulf %336, %319 : vector<8x32xf32>
    %352 = arith.addf %349, %351 : vector<8x32xf32>
    %353 = arith.addf %350, %338 : vector<8x32xf32>
    %354 = arith.mulf %338, %320 : vector<8x32xf32>
    %355 = arith.addf %352, %354 : vector<8x32xf32>
    %356 = arith.addf %353, %340 : vector<8x32xf32>
    %357 = arith.mulf %340, %321 : vector<8x32xf32>
    %358 = arith.addf %355, %357 : vector<8x32xf32>
    %359 = arith.addf %356, %342 : vector<8x32xf32>
    %360 = arith.mulf %342, %322 : vector<8x32xf32>
    %361 = arith.addf %358, %360 : vector<8x32xf32>
    %362 = arith.addf %359, %344 : vector<8x32xf32>
    %363 = arith.mulf %344, %323 : vector<8x32xf32>
    %364 = arith.addf %361, %363 : vector<8x32xf32>
    %365 = arith.addf %362, %346 : vector<8x32xf32>
    %366 = arith.mulf %346, %324 : vector<8x32xf32>
    %367 = arith.addf %364, %366 : vector<8x32xf32>
    %368 = arith.addf %365, %348 : vector<8x32xf32>
    %369 = arith.mulf %348, %325 : vector<8x32xf32>
    %370 = arith.addf %367, %369 : vector<8x32xf32>
    %371 = tpu.reciprocal %368 {approx = true} : vector<8x32xf32> -> vector<8x32xf32>
    %372 = arith.mulf %370, %371 : vector<8x32xf32>
    %cst_68 = arith.constant dense<0.000000e+00> : vector<8x32xf32>
    %373 = tpu.matmul %372, %90, %cst_68 {dimension_numbers = #tpu.dot_dimension_numbers<[1], [0], [0], [1], [0, 0, 1, 1], [], []>} : vector<8x32xf32>, vector<32x32xf32>, vector<8x32xf32> -> vector<8x32xf32>
    %cst_69 = arith.constant dense<0.000000e+00> : vector<8x32xf32>
    %374 = tpu.matmul %303, %87, %cst_69 {dimension_numbers = #tpu.dot_dimension_numbers<[1], [0], [0], [1], [0, 0, 1, 1], [], []>} : vector<8x32xf32>, vector<32x32xf32>, vector<8x32xf32> -> vector<8x32xf32>
    %375 = arith.addf %373, %374 : vector<8x32xf32>
    %376 = vector.broadcast %93 : vector<1x32xf32> to vector<8x32xf32>
    %377 = arith.addf %375, %376 : vector<8x32xf32>
    %378 = arith.negf %377 : vector<8x32xf32>
    %379 = math.exp %378 : vector<8x32xf32>
    %cst_70 = arith.constant 1.000000e+00 : f32
    %380 = vector.broadcast %cst_70 : f32 to vector<8x32xf32>
    %381 = arith.addf %380, %379 : vector<8x32xf32>
    %382 = arith.divf %380, %381 : vector<8x32xf32>
    %cst_71 = arith.constant dense<0.000000e+00> : vector<8x32xf32>
    %383 = tpu.matmul %372, %91, %cst_71 {dimension_numbers = #tpu.dot_dimension_numbers<[1], [0], [0], [1], [0, 0, 1, 1], [], []>} : vector<8x32xf32>, vector<32x32xf32>, vector<8x32xf32> -> vector<8x32xf32>
    %cst_72 = arith.constant dense<0.000000e+00> : vector<8x32xf32>
    %384 = tpu.matmul %303, %88, %cst_72 {dimension_numbers = #tpu.dot_dimension_numbers<[1], [0], [0], [1], [0, 0, 1, 1], [], []>} : vector<8x32xf32>, vector<32x32xf32>, vector<8x32xf32> -> vector<8x32xf32>
    %385 = arith.addf %383, %384 : vector<8x32xf32>
    %386 = vector.broadcast %94 : vector<1x32xf32> to vector<8x32xf32>
    %387 = arith.addf %385, %386 : vector<8x32xf32>
    %388 = arith.negf %387 : vector<8x32xf32>
    %389 = math.exp %388 : vector<8x32xf32>
    %cst_73 = arith.constant 1.000000e+00 : f32
    %390 = vector.broadcast %cst_73 : f32 to vector<8x32xf32>
    %391 = arith.addf %390, %389 : vector<8x32xf32>
    %392 = arith.divf %390, %391 : vector<8x32xf32>
    %cst_74 = arith.constant dense<0.000000e+00> : vector<8x32xf32>
    %393 = tpu.matmul %372, %92, %cst_74 {dimension_numbers = #tpu.dot_dimension_numbers<[1], [0], [0], [1], [0, 0, 1, 1], [], []>} : vector<8x32xf32>, vector<32x32xf32>, vector<8x32xf32> -> vector<8x32xf32>
    %394 = vector.broadcast %95 : vector<1x32xf32> to vector<8x32xf32>
    %395 = arith.addf %393, %394 : vector<8x32xf32>
    %cst_75 = arith.constant dense<0.000000e+00> : vector<8x32xf32>
    %396 = tpu.matmul %303, %89, %cst_75 {dimension_numbers = #tpu.dot_dimension_numbers<[1], [0], [0], [1], [0, 0, 1, 1], [], []>} : vector<8x32xf32>, vector<32x32xf32>, vector<8x32xf32> -> vector<8x32xf32>
    %397 = vector.broadcast %96 : vector<1x32xf32> to vector<8x32xf32>
    %398 = arith.addf %396, %397 : vector<8x32xf32>
    %399 = arith.mulf %382, %398 : vector<8x32xf32>
    %400 = arith.addf %395, %399 : vector<8x32xf32>
    %401 = math.tanh %400 : vector<8x32xf32>
    %cst_76 = arith.constant 1.000000e+00 : f32
    %402 = vector.broadcast %cst_76 : f32 to vector<8x32xf32>
    %403 = arith.subf %402, %392 : vector<8x32xf32>
    %404 = arith.mulf %403, %401 : vector<8x32xf32>
    %405 = arith.mulf %392, %303 : vector<8x32xf32>
    %406 = arith.addf %404, %405 : vector<8x32xf32>
    %407 = tpu.concatenate %84, %200, %303, %406 in 1 : vector<8x32xf32>, vector<8x32xf32>, vector<8x32xf32>, vector<8x32xf32> -> vector<8x128xf32>
    %c0_77 = arith.constant 0 : index
    %c0_78 = arith.constant 0 : index
    %408 = vector.load %arg4[%c0_77, %c0_78] : memref<8x128xf32, #tpu.memory_space<vmem>>, vector<8x128xf32>
    tpu.vector_store %arg4[%c0_77, %c0_78], %407 {strides = array<i32>} : memref<8x128xf32, #tpu.memory_space<vmem>>, vector<8x128xf32>,
    %c64_79 = arith.constant 64 : index
    %c96_80 = arith.constant 96 : index
    %409 = vector.load %arg3[%c64_79, %c96_80] : memref<200x128xf32, #tpu.memory_space<vmem>>, vector<32x32xf32>
    %c96_81 = arith.constant 96 : index
    %c0_82 = arith.constant 0 : index
    %410 = vector.load %arg3[%c96_81, %c0_82] : memref<200x128xf32, #tpu.memory_space<vmem>>, vector<32x32xf32>
    %c96_83 = arith.constant 96 : index
    %c96_84 = arith.constant 96 : index
    %411 = vector.load %arg3[%c96_83, %c96_84] : memref<200x128xf32, #tpu.memory_space<vmem>>, vector<32x1xf32>
    %c194 = arith.constant 194 : index
    %c0_85 = arith.constant 0 : index
    %412 = vector.load %arg3[%c194, %c0_85] : memref<200x128xf32, #tpu.memory_space<vmem>>, vector<1x1xf32>
    %c64_86 = arith.constant 64 : index
    %c64_87 = arith.constant 64 : index
    %413 = vector.load %arg3[%c64_86, %c64_87] : memref<200x128xf32, #tpu.memory_space<vmem>>, vector<32x32xf32>
    %cst_88 = arith.constant dense<0.000000e+00> : vector<8x32xf32>
    %414 = tpu.matmul %0, %413, %cst_88 {dimension_numbers = #tpu.dot_dimension_numbers<[1], [0], [0], [1], [0, 0, 1, 1], [], []>} : vector<8x32xf32>, vector<32x32xf32>, vector<8x32xf32> -> vector<8x32xf32>
    %c193_89 = arith.constant 193 : index
    %c96_90 = arith.constant 96 : index
    %415 = vector.load %arg3[%c193_89, %c96_90] : memref<200x128xf32, #tpu.memory_space<vmem>>, vector<1x32xf32>
    %416 = vector.broadcast %415 : vector<1x32xf32> to vector<8x32xf32>
    %417 = arith.addf %414, %416 : vector<8x32xf32>
    %cst_91 = arith.constant 0.000000e+00 : f32
    %418 = vector.broadcast %cst_91 : f32 to vector<8x1xf32>
    %cst_92 = arith.constant dense<0.000000e+00> : vector<8x32xf32>
    %419 = tpu.matmul %84, %409, %cst_92 {dimension_numbers = #tpu.dot_dimension_numbers<[1], [0], [0], [1], [0, 0, 1, 1], [], []>} : vector<8x32xf32>, vector<32x32xf32>, vector<8x32xf32> -> vector<8x32xf32>
    %420 = arith.addf %417, %419 : vector<8x32xf32>
    %421 = arith.mulf %0, %84 : vector<8x32xf32>
    %cst_93 = arith.constant dense<0.000000e+00> : vector<8x32xf32>
    %422 = tpu.matmul %421, %410, %cst_93 {dimension_numbers = #tpu.dot_dimension_numbers<[1], [0], [0], [1], [0, 0, 1, 1], [], []>} : vector<8x32xf32>, vector<32x32xf32>, vector<8x32xf32> -> vector<8x32xf32>
    %423 = arith.addf %420, %422 : vector<8x32xf32>
    %424 = math.tanh %423 : vector<8x32xf32>
    %cst_94 = arith.constant dense<0.000000e+00> : vector<8x1xf32>
    %425 = tpu.matmul %424, %411, %cst_94 {dimension_numbers = #tpu.dot_dimension_numbers<[1], [0], [0], [1], [0, 0, 1, 1], [], []>} : vector<8x32xf32>, vector<32x1xf32>, vector<8x1xf32> -> vector<8x1xf32>
    %426 = vector.broadcast %412 : vector<1x1xf32> to vector<8x1xf32>
    %427 = arith.addf %425, %426 : vector<8x1xf32>
    %cst_95 = arith.constant dense<0.000000e+00> : vector<8x32xf32>
    %428 = tpu.matmul %200, %409, %cst_95 {dimension_numbers = #tpu.dot_dimension_numbers<[1], [0], [0], [1], [0, 0, 1, 1], [], []>} : vector<8x32xf32>, vector<32x32xf32>, vector<8x32xf32> -> vector<8x32xf32>
    %429 = arith.addf %417, %428 : vector<8x32xf32>
    %430 = arith.mulf %0, %200 : vector<8x32xf32>
    %cst_96 = arith.constant dense<0.000000e+00> : vector<8x32xf32>
    %431 = tpu.matmul %430, %410, %cst_96 {dimension_numbers = #tpu.dot_dimension_numbers<[1], [0], [0], [1], [0, 0, 1, 1], [], []>} : vector<8x32xf32>, vector<32x32xf32>, vector<8x32xf32> -> vector<8x32xf32>
    %432 = arith.addf %429, %431 : vector<8x32xf32>
    %433 = math.tanh %432 : vector<8x32xf32>
    %cst_97 = arith.constant dense<0.000000e+00> : vector<8x1xf32>
    %434 = tpu.matmul %433, %411, %cst_97 {dimension_numbers = #tpu.dot_dimension_numbers<[1], [0], [0], [1], [0, 0, 1, 1], [], []>} : vector<8x32xf32>, vector<32x1xf32>, vector<8x1xf32> -> vector<8x1xf32>
    %435 = vector.broadcast %412 : vector<1x1xf32> to vector<8x1xf32>
    %436 = arith.addf %434, %435 : vector<8x1xf32>
    %437 = arith.cmpf ogt, %436, %427 : vector<8x1xf32>
    %438 = arith.select %437, %436, %427 : vector<8x1xi1>, vector<8x1xf32>
    %cst_98 = arith.constant 1.000000e+00 : f32
    %439 = vector.broadcast %cst_98 : f32 to vector<8x1xf32>
    %440 = arith.select %437, %439, %418 : vector<8x1xi1>, vector<8x1xf32>
    %cst_99 = arith.constant dense<0.000000e+00> : vector<8x32xf32>
    %441 = tpu.matmul %303, %409, %cst_99 {dimension_numbers = #tpu.dot_dimension_numbers<[1], [0], [0], [1], [0, 0, 1, 1], [], []>} : vector<8x32xf32>, vector<32x32xf32>, vector<8x32xf32> -> vector<8x32xf32>
    %442 = arith.addf %417, %441 : vector<8x32xf32>
    %443 = arith.mulf %0, %303 : vector<8x32xf32>
    %cst_100 = arith.constant dense<0.000000e+00> : vector<8x32xf32>
    %444 = tpu.matmul %443, %410, %cst_100 {dimension_numbers = #tpu.dot_dimension_numbers<[1], [0], [0], [1], [0, 0, 1, 1], [], []>} : vector<8x32xf32>, vector<32x32xf32>, vector<8x32xf32> -> vector<8x32xf32>
    %445 = arith.addf %442, %444 : vector<8x32xf32>
    %446 = math.tanh %445 : vector<8x32xf32>
    %cst_101 = arith.constant dense<0.000000e+00> : vector<8x1xf32>
    %447 = tpu.matmul %446, %411, %cst_101 {dimension_numbers = #tpu.dot_dimension_numbers<[1], [0], [0], [1], [0, 0, 1, 1], [], []>} : vector<8x32xf32>, vector<32x1xf32>, vector<8x1xf32> -> vector<8x1xf32>
    %448 = vector.broadcast %412 : vector<1x1xf32> to vector<8x1xf32>
    %449 = arith.addf %447, %448 : vector<8x1xf32>
    %450 = arith.cmpf ogt, %449, %438 : vector<8x1xf32>
    %451 = arith.select %450, %449, %438 : vector<8x1xi1>, vector<8x1xf32>
    %cst_102 = arith.constant 2.000000e+00 : f32
    %452 = vector.broadcast %cst_102 : f32 to vector<8x1xf32>
    %453 = arith.select %450, %452, %440 : vector<8x1xi1>, vector<8x1xf32>
    %cst_103 = arith.constant dense<0.000000e+00> : vector<8x32xf32>
    %454 = tpu.matmul %406, %409, %cst_103 {dimension_numbers = #tpu.dot_dimension_numbers<[1], [0], [0], [1], [0, 0, 1, 1], [], []>} : vector<8x32xf32>, vector<32x32xf32>, vector<8x32xf32> -> vector<8x32xf32>
    %455 = arith.addf %417, %454 : vector<8x32xf32>
    %456 = arith.mulf %0, %406 : vector<8x32xf32>
    %cst_104 = arith.constant dense<0.000000e+00> : vector<8x32xf32>
    %457 = tpu.matmul %456, %410, %cst_104 {dimension_numbers = #tpu.dot_dimension_numbers<[1], [0], [0], [1], [0, 0, 1, 1], [], []>} : vector<8x32xf32>, vector<32x32xf32>, vector<8x32xf32> -> vector<8x32xf32>
    %458 = arith.addf %455, %457 : vector<8x32xf32>
    %459 = math.tanh %458 : vector<8x32xf32>
    %cst_105 = arith.constant dense<0.000000e+00> : vector<8x1xf32>
    %460 = tpu.matmul %459, %411, %cst_105 {dimension_numbers = #tpu.dot_dimension_numbers<[1], [0], [0], [1], [0, 0, 1, 1], [], []>} : vector<8x32xf32>, vector<32x1xf32>, vector<8x1xf32> -> vector<8x1xf32>
    %461 = vector.broadcast %412 : vector<1x1xf32> to vector<8x1xf32>
    %462 = arith.addf %460, %461 : vector<8x1xf32>
    %463 = arith.cmpf ogt, %462, %451 : vector<8x1xf32>
    %464 = arith.select %463, %462, %451 : vector<8x1xi1>, vector<8x1xf32>
    %cst_106 = arith.constant 3.000000e+00 : f32
    %465 = vector.broadcast %cst_106 : f32 to vector<8x1xf32>
    %466 = arith.select %463, %465, %453 : vector<8x1xi1>, vector<8x1xf32>
    %467 = vector.shape_cast %464 : vector<8x1xf32> to vector<8x1xf32>
    %468 = vector.broadcast %467 : vector<8x1xf32> to vector<8x64xf32>
    %469 = vector.shape_cast %466 : vector<8x1xf32> to vector<8x1xf32>
    %470 = vector.broadcast %469 : vector<8x1xf32> to vector<8x64xf32>
    %471 = tpu.concatenate %468, %470 in 1 : vector<8x64xf32>, vector<8x64xf32> -> vector<8x128xf32>
    %c0_107 = arith.constant 0 : index
    %c0_108 = arith.constant 0 : index
    %472 = vector.load %arg5[%c0_107, %c0_108] : memref<8x128xf32, #tpu.memory_space<vmem>>, vector<8x128xf32>
    tpu.vector_store %arg5[%c0_107, %c0_108], %471 {strides = array<i32>} : memref<8x128xf32, #tpu.memory_space<vmem>>, vector<8x128xf32>,
    return
  }
}

</mosaic_0001>

<llo_original>
// kernel: squeeze.2
$region0: #{squeeze.2}
  %s0 = inlined_call_operand.vmem [shape: f32[8], index: 0, kind: input, shape index: {}]
  %s1 = inlined_call_operand.hbm [shape: f32[2,4], index: 1, kind: output, shape index: {}]
  $region1: #{squeeze.2} parent=0
    #allocation0 [shape = 'u8[1024]{0}', space=vmem, size = 0x400, scoped, tag = 'operand span for operand 1']
    #allocation1 [shape = 's32[1]{0}', space=sflag, size = 0x4, scoped, tag = 'scoped memory for squeeze.2']
    #allocation2 [shape = 'u8[4096]{0}', space=vmem, size = 0x1000, scoped, tag = 'scoped mem for output reshape']
    #allocation3 [shape = 'u8[4096]{0}', space=vmem, size = 0x1000, scoped, tag = 'scoped mem for input reshape']
    %2 = vsyncpa [#allocation1], 0
    %s4 = sshll.u32 1, 1
    %s5 = ssub.s32 %s4, 1
    %v6 = vld [vmem:[%s0] sm:%s5]
    %7 = vst [vmem:[#allocation3] sm:%s5] %v6
    %v8 = vld [vmem:[#allocation3] sm:$0x1]
    %vm9 = vcmask 31744
    %10 = vst.msk [vmem:[#allocation2] sm:$0x1] %vm9, %v8
    %v11 = vld [vmem:[#allocation3] sm:$0x1]
    %12 = vrot.lane.b32.xlu0 %v11, 124
    %v13 = vpop.permute.xlu0 %12
    %vm14 = vcmask 31744
    %s15 = scalar_lea.vmem [#allocation2], 1
    %16 = vst.msk [vmem:[%s15] sm:$0x1] %vm14, %v13
    %s18 = sshll.u32 1, 2
    %s19 = ssub.s32 %s18, 1
    %v21 = vld [vmem:[#allocation2] sm:%s19]
    %s22 = sshll.u32 1, 2
    %s23 = ssub.s32 %s22, 1
    %24 = vst [vmem:[#allocation0] sm:%s23] %v21
    %s26 = ssub.s32 32, 32
    %27 = vsyncadd [#allocation1], %s26
    %s29 = sshll.u32 [#allocation0], 4
    %s30 = int_to_ptr.vmem [resolvable:$true] %s29
    %32 = dma.vmem_to_hbm [thread:$0]  %s30, 32, %s1, [#allocation1]
    %33 = dma.done [#allocation1], 32
    %34 = vsyncpa [#allocation1], 1

// kernel: infohopnet_forward.1
$region0: #{infohopnet_forward.1}
  #allocation0 [shape = 'u32[]', space=smem, size = 0x4, offset = 0x4, fixed_abs, tag = 'smem constant byte address 0x4 - core index']
  #allocation1 [shape = 'u32[144,128]{1,0:T(1,128)}', space=vmem, size = 0x12000, scoped, tag = 'internal scratch']
  %s0 = inlined_call_operand.hbm [shape: f32[8,32], index: 0, kind: input, shape index: {}]
  %s1 = inlined_call_operand.hbm [shape: f32[64,32], index: 1, kind: input, shape index: {}]
  %s2 = inlined_call_operand.hbm [shape: f32[64,32], index: 2, kind: input, shape index: {}]
  %s3 = inlined_call_operand.hbm [shape: f32[200,128], index: 3, kind: input, shape index: {}]
  %s4 = inlined_call_operand.vmem [shape: f32[8,128], index: 4, kind: output, shape index: {0}]
  %s5 = inlined_call_operand.vmem [shape: f32[8,128], index: 5, kind: output, shape index: {1}]
  %6 = xla_tuple %s4, %s5
  %s7 = sld [smem:[#allocation0]]
  $region50: #{infohopnet_forward.1} parent=0
    _
  %s9 = ssub.s32 1, %s7
  %s10 = scalar_select 0, %s9, %s7
  $region1: #{infohopnet_forward.1} parent=0
    #allocation2 [shape = 'u8[4096]{0}', space=vmem, size = 0x1000, scoped, tag = 'input window, operand 0, single buffered']
    #allocation3 [shape = 's32[1]{0}', space=sflag, size = 0x4, scoped, tag = 'scoped memory for infohopnet_forward.1']
    #allocation4 [shape = 'u8[32768]{0}', space=vmem, size = 0x8000, scoped, tag = 'input window, operand 1, single buffered']
    #allocation5 [shape = 's32[1]{0}', space=sflag, size = 0x4, scoped, tag = 'scoped memory for infohopnet_forward.1']
    #allocation6 [shape = 'u8[32768]{0}', space=vmem, size = 0x8000, scoped, tag = 'input window, operand 2, single buffered']
    #allocation7 [shape = 'u8[102400]{0}', space=vmem, size = 0x19000, scoped, tag = 'input window, operand 3, single buffered']
    #allocation8 [shape = 's32[1]{0}', space=sflag, size = 0x4, scoped, tag = 'scoped memory for infohopnet_forward.1']
    %11 = vsyncpa [#allocation3], 0
    %12 = vsyncpa [#allocation5], 0
    %13 = vsyncpa [#allocation8], 0
    // Predicated region
    $region2: #{infohopnet_forward.1} parent=1 // pred_check
      _
    $region3: #{infohopnet_forward.1} parent=1 // pred_check_branch
      %15 = sbr.rel (0) target = $region5
    $region4: #{infohopnet_forward.1} parent=1 // pred_region
      %s17 = ssub.s32 128, 128
      %18 = vsyncadd [#allocation3], %s17
      %s20 = sshll.u32 [#allocation2], 4
      %s21 = int_to_ptr.vmem [resolvable:$true] %s20
      %23 = dma.hbm_to_vmem [thread:$0]  %s0, 128, %s21, [#allocation3]
    $region5: #{infohopnet_forward.1} parent=1 // pred_fallthru
      _
    // Predicated region
    $region6: #{infohopnet_forward.1} parent=1 // pred_check
      _
    $region7: #{infohopnet_forward.1} parent=1 // pred_check_branch
      %25 = sbr.rel (0) target = $region9
    $region8: #{infohopnet_forward.1} parent=1 // pred_region
      %s27 = ssub.s32 1024, 1024
      %28 = vsyncadd [#allocation5], %s27
      %s29 = sshll.u32 [#allocation4], 4
      %s30 = int_to_ptr.vmem [resolvable:$true] %s29
      %35 = dma.hbm_to_vmem [thread:$0]  %s1, 1024, %s30, [#allocation5], 128, 128, 8
    $region9: #{infohopnet_forward.1} parent=1 // pred_fallthru
      _
    // Predicated region
    $region10: #{infohopnet_forward.1} parent=1 // pred_check
      _
    $region11: #{infohopnet_forward.1} parent=1 // pred_check_branch
      %37 = sbr.rel (0) target = $region13
    $region12: #{infohopnet_forward.1} parent=1 // pred_region
      %s39 = ssub.s32 1024, 1024
      %40 = vsyncadd [#allocation5], %s39
      %s41 = sshll.u32 [#allocation6], 4
      %s42 = int_to_ptr.vmem [resolvable:$true] %s41
      %47 = dma.hbm_to_vmem [thread:$0]  %s2, 1024, %s42, [#allocation5], 128, 128, 8
    $region13: #{infohopnet_forward.1} parent=1 // pred_fallthru
      _
    // Predicated region
    $region14: #{infohopnet_forward.1} parent=1 // pred_check
      _
    $region15: #{infohopnet_forward.1} parent=1 // pred_check_branch
      %49 = sbr.rel (0) target = $region17
    $region16: #{infohopnet_forward.1} parent=1 // pred_region
      %s51 = ssub.s32 3200, 3200
      %52 = vsyncadd [#allocation8], %s51
      %s53 = sshll.u32 [#allocation7], 4
      %s54 = int_to_ptr.vmem [resolvable:$true] %s53
      %59 = dma.hbm_to_vmem [thread:$0]  %s3, 3200, %s54, [#allocation8], 128, 128, 8
    $region17: #{infohopnet_forward.1} parent=1 // pred_fallthru
      _
    // Predicated region
    $region18: #{infohopnet_forward.1} parent=1 // pred_check
      _
    $region19: #{infohopnet_forward.1} parent=1 // pred_check_branch
      %61 = sbr.rel (0) target = $region21
    $region20: #{infohopnet_forward.1} parent=1 // pred_region
      %62 = dma.done [#allocation3], 128
    $region21: #{infohopnet_forward.1} parent=1 // pred_fallthru
      _
    // Predicated region
    $region22: #{infohopnet_forward.1} parent=1 // pred_check
      _
    $region23: #{infohopnet_forward.1} parent=1 // pred_check_branch
      %64 = sbr.rel (0) target = $region25
    $region24: #{infohopnet_forward.1} parent=1 // pred_region
      %65 = dma.done [#allocation5], 1024
    $region25: #{infohopnet_forward.1} parent=1 // pred_fallthru
      _
    // Predicated region
    $region26: #{infohopnet_forward.1} parent=1 // pred_check
      _
    $region27: #{infohopnet_forward.1} parent=1 // pred_check_branch
      %67 = sbr.rel (0) target = $region29
    $region28: #{infohopnet_forward.1} parent=1 // pred_region
      %68 = dma.done [#allocation5], 1024
    $region29: #{infohopnet_forward.1} parent=1 // pred_fallthru
      _
    // Predicated region
    $region30: #{infohopnet_forward.1} parent=1 // pred_check
      _
    $region31: #{infohopnet_forward.1} parent=1 // pred_check_branch
      %70 = sbr.rel (0) target = $region33
    $region32: #{infohopnet_forward.1} parent=1 // pred_region
      %71 = dma.done [#allocation8], 3200
    $region33: #{infohopnet_forward.1} parent=1 // pred_fallthru
      _
    %v72 = vld [vmem:[#allocation2] sm:$0xff]
    %v73 = vld [vmem:[#allocation4] sm:$0xff]
    %v74 = vld [vmem:[#allocation4 + $0x8] sm:$0xff]
    %v75 = vld [vmem:[#allocation4 + $0x10] sm:$0xff]
    %v76 = vld [vmem:[#allocation4 + $0x18] sm:$0xff]
    %v77 = vld [vmem:[#allocation4 + $0x20] sm:$0xff]
    %v78 = vld [vmem:[#allocation4 + $0x28] sm:$0xff]
    %v79 = vld [vmem:[#allocation4 + $0x30] sm:$0xff]
    %v80 = vld [vmem:[#allocation4 + $0x38] sm:$0xff]
    %v81 = vld [vmem:[#allocation6] sm:$0xff]
    %v82 = vld [vmem:[#allocation6 + $0x8] sm:$0xff]
    %v83 = vld [vmem:[#allocation6 + $0x10] sm:$0xff]
    %v84 = vld [vmem:[#allocation6 + $0x18] sm:$0xff]
    %v85 = vld [vmem:[#allocation6 + $0x20] sm:$0xff]
    %v86 = vld [vmem:[#allocation6 + $0x28] sm:$0xff]
    %v87 = vld [vmem:[#allocation6 + $0x30] sm:$0xff]
    %v88 = vld [vmem:[#allocation6 + $0x38] sm:$0xff]
    %v89 = vld [vmem:[#allocation7 + $0x80] sm:$0xff]
    %v90 = vld [vmem:[#allocation7 + $0x88] sm:$0xff]
    %v91 = vld [vmem:[#allocation7 + $0x90] sm:$0xff]
    %v92 = vld [vmem:[#allocation7 + $0x98] sm:$0xff]
    %v93 = vld [vmem:[#allocation7 + $0xa0] sm:$0xff]
    %v94 = vld [vmem:[#allocation7 + $0xa8] sm:$0xff]
    %v95 = vld [vmem:[#allocation7 + $0xb0] sm:$0xff]
    %v96 = vld [vmem:[#allocation7 + $0xb8] sm:$0xff]
    %vm97 = vcmask 523264
    %v99 = vsel %vm97, %v89, 0
    %v102 = vsel %vm97, %v90, 0
    %v105 = vsel %vm97, %v91, 0
    %v108 = vsel %vm97, %v92, 0
    %v111 = vsel %vm97, %v93, 0
    %v114 = vsel %vm97, %v94, 0
    %v117 = vsel %vm97, %v95, 0
    %v120 = vsel %vm97, %v96, 0
    %122 = vmatprep.subr.mxu0 0.0
    %123 = vmatpush1.msra.mxu0 0.0
    %124 = vmatprep.subr.mxu0 0.0
    %125 = vmatpush1.msra.mxu0 0.0
    %126 = vmatprep.subr.mxu0 0.0
    %127 = vmatpush1.msra.mxu0 0.0
    %128 = vmatprep.subr.mxu0 0.0
    %129 = vmatpush1.msra.mxu0 0.0
    %130 = vmatprep.subr.mxu0 0.0
    %131 = vmatpush1.msra.mxu0 0.0
    %132 = vmatprep.subr.mxu0 0.0
    %133 = vmatpush1.msra.mxu0 0.0
    %134 = vmatprep.subr.mxu0 0.0
    %135 = vmatpush1.msra.mxu0 0.0
    %136 = vmatprep.subr.mxu0 0.0
    %137 = vmatpush1.msra.mxu0 0.0
    %138 = vmatprep.subr.mxu0 0.0
    %139 = vmatpush1.msra.mxu0 %v80
    %140 = vmatprep.subr.mxu0 0.0
    %141 = vmatpush1.msra.mxu0 %v79
    %142 = vmatprep.subr.mxu0 0.0
    %143 = vmatpush1.msra.mxu0 %v78
    %144 = vmatprep.subr.mxu0 0.0
    %145 = vmatpush1.msra.mxu0 %v77
    %146 = vmatprep.subr.mxu0 0.0
    %147 = vmatpush1.msra.mxu0 %v76
    %148 = vmatprep.subr.mxu0 0.0
    %149 = vmatpush1.msra.mxu0 %v75
    %150 = vmatprep.subr.mxu0 0.0
    %151 = vmatpush1.msra.mxu0 %v74
    %152 = vmatprep.subr.mxu0 0.0
    %153 = vmatpush1.msra.mxu0 %v73
    %154 = vmatprep.subr.mxu0 0.0
    %155 = vmatpush2.msra.mxu0 0.0
    %156 = vmatprep.subr.mxu0 0.0
    %157 = vmatpush2.msra.mxu0 0.0
    %158 = vmatprep.subr.mxu0 0.0
    %159 = vmatpush2.msra.mxu0 0.0
    %160 = vmatprep.subr.mxu0 0.0
    %161 = vmatpush2.msra.mxu0 0.0
    %162 = vmatprep.subr.mxu0 0.0
    %163 = vmatpush2.msra.mxu0 0.0
    %164 = vmatprep.subr.mxu0 0.0
    %165 = vmatpush2.msra.mxu0 0.0
    %166 = vmatprep.subr.mxu0 0.0
    %167 = vmatpush2.msra.mxu0 0.0
    %168 = vmatprep.subr.mxu0 0.0
    %169 = vmatpush2.msra.mxu0 0.0
    %170 = vmatprep.subr.mxu0 0.0
    %171 = vmatpush2.msra.mxu0 0.0
    %172 = vmatprep.subr.mxu0 0.0
    %173 = vmatpush2.msra.mxu0 0.0
    %174 = vmatprep.subr.mxu0 0.0
    %175 = vmatpush2.msra.mxu0 0.0
    %176 = vmatprep.subr.mxu0 0.0
    %177 = vmatpush2.msra.mxu0 0.0
    %178 = vmatprep.subr.mxu0 0.0
    %179 = vmatpush2.msra.mxu0 0.0
    %180 = vmatprep.subr.mxu0 0.0
    %181 = vmatpush2.msra.mxu0 0.0
    %182 = vmatprep.subr.mxu0 0.0
    %183 = vmatpush2.msra.mxu0 0.0
    %184 = vmatprep.subr.mxu0 0.0
    %185 = vmatpush2.msra.mxu0 0.0
    %186 = vmatprep.mubr.f32.mxu0 0.0
    %187 = vmatmul.mubr.f32.gmra.mxu0 %v99
    %v188 = vpop.f32.mrf.mxu0
    %v189 = vadd.f32 0.0, %v188
    %v190 = vpop.f32.mrf.mxu0
    %191 = vmatprep.mubr.f32.mxu0 0.0
    %192 = vmatmul.mubr.f32.gmra.mxu0 %v102
    %v193 = vpop.f32.mrf.mxu0
    %v194 = vadd.f32 0.0, %v193
    %v195 = vpop.f32.mrf.mxu0
    %196 = vmatprep.mubr.f32.mxu0 0.0
    %197 = vmatmul.mubr.f32.gmra.mxu0 %v105
    %v198 = vpop.f32.mrf.mxu0
    %v199 = vadd.f32 0.0, %v198
    %v200 = vpop.f32.mrf.mxu0
    %201 = vmatprep.mubr.f32.mxu0 0.0
    %202 = vmatmul.mubr.f32.gmra.mxu0 %v108
    %v203 = vpop.f32.mrf.mxu0
    %v204 = vadd.f32 0.0, %v203
    %v205 = vpop.f32.mrf.mxu0
    %206 = vmatprep.mubr.f32.mxu0 0.0
    %207 = vmatmul.mubr.f32.gmra.mxu0 %v111
    %v208 = vpop.f32.mrf.mxu0
    %v209 = vadd.f32 0.0, %v208
    %v210 = vpop.f32.mrf.mxu0
    %211 = vmatprep.mubr.f32.mxu0 0.0
    %212 = vmatmul.mubr.f32.gmra.mxu0 %v114
    %v213 = vpop.f32.mrf.mxu0
    %v214 = vadd.f32 0.0, %v213
    %v215 = vpop.f32.mrf.mxu0
    %216 = vmatprep.mubr.f32.mxu0 0.0
    %217 = vmatmul.mubr.f32.gmra.mxu0 %v117
    %v218 = vpop.f32.mrf.mxu0
    %v219 = vadd.f32 0.0, %v218
    %v220 = vpop.f32.mrf.mxu0
    %221 = vmatprep.mubr.f32.mxu0 0.0
    %222 = vmatmul.mubr.f32.gmra.mxu0 %v120
    %v223 = vpop.f32.mrf.mxu0
    %v224 = vadd.f32 0.0, %v223
    %v225 = vpop.f32.mrf.mxu0
    %226 = vdwg.mxu0
    %227 = vmatprep.subr.mxu0 0.0
    %228 = vmatpush1.msra.mxu0 0.0
    %229 = vmatprep.subr.mxu0 0.0
    %230 = vmatpush1.msra.mxu0 0.0
    %231 = vmatprep.subr.mxu0 0.0
    %232 = vmatpush1.msra.mxu0 0.0
    %233 = vmatprep.subr.mxu0 0.0
    %234 = vmatpush1.msra.mxu0 0.0
    %235 = vmatprep.subr.mxu0 0.0
    %236 = vmatpush1.msra.mxu0 0.0
    %237 = vmatprep.subr.mxu0 0.0
    %238 = vmatpush1.msra.mxu0 0.0
    %239 = vmatprep.subr.mxu0 0.0
    %240 = vmatpush1.msra.mxu0 0.0
    %241 = vmatprep.subr.mxu0 0.0
    %242 = vmatpush1.msra.mxu0 0.0
    %243 = vmatprep.subr.mxu0 0.0
    %244 = vmatpush1.msra.mxu0 %v88
    %245 = vmatprep.subr.mxu0 0.0
    %246 = vmatpush1.msra.mxu0 %v87
    %247 = vmatprep.subr.mxu0 0.0
    %248 = vmatpush1.msra.mxu0 %v86
    %249 = vmatprep.subr.mxu0 0.0
    %250 = vmatpush1.msra.mxu0 %v85
    %251 = vmatprep.subr.mxu0 0.0
    %252 = vmatpush1.msra.mxu0 %v84
    %253 = vmatprep.subr.mxu0 0.0
    %254 = vmatpush1.msra.mxu0 %v83
    %255 = vmatprep.subr.mxu0 0.0
    %256 = vmatpush1.msra.mxu0 %v82
    %257 = vmatprep.subr.mxu0 0.0
    %258 = vmatpush1.msra.mxu0 %v81
    %259 = vmatprep.subr.mxu0 0.0
    %260 = vmatpush2.msra.mxu0 0.0
    %261 = vmatprep.subr.mxu0 0.0
    %262 = vmatpush2.msra.mxu0 0.0
    %263 = vmatprep.subr.mxu0 0.0
    %264 = vmatpush2.msra.mxu0 0.0
    %265 = vmatprep.subr.mxu0 0.0
    %266 = vmatpush2.msra.mxu0 0.0
    %267 = vmatprep.subr.mxu0 0.0
    %268 = vmatpush2.msra.mxu0 0.0
    %269 = vmatprep.subr.mxu0 0.0
    %270 = vmatpush2.msra.mxu0 0.0
    %271 = vmatprep.subr.mxu0 0.0
    %272 = vmatpush2.msra.mxu0 0.0
    %273 = vmatprep.subr.mxu0 0.0
    %274 = vmatpush2.msra.mxu0 0.0
    %275 = vmatprep.subr.mxu0 0.0
    %276 = vmatpush2.msra.mxu0 0.0
    %277 = vmatprep.subr.mxu0 0.0
    %278 = vmatpush2.msra.mxu0 0.0
    %279 = vmatprep.subr.mxu0 0.0
    %280 = vmatpush2.msra.mxu0 0.0
    %281 = vmatprep.subr.mxu0 0.0
    %282 = vmatpush2.msra.mxu0 0.0
    %283 = vmatprep.subr.mxu0 0.0
    %284 = vmatpush2.msra.mxu0 0.0
    %285 = vmatprep.subr.mxu0 0.0
    %286 = vmatpush2.msra.mxu0 0.0
    %287 = vmatprep.subr.mxu0 0.0
    %288 = vmatpush2.msra.mxu0 0.0
    %289 = vmatprep.subr.mxu0 0.0
    %290 = vmatpush2.msra.mxu0 0.0
    %291 = vmatprep.mubr.f32.mxu0 0.0
    %292 = vmatmul.mubr.f32.gmra.mxu0 %v99
    %v293 = vpop.f32.mrf.mxu0
    %v294 = vadd.f32 0.0, %v293
    %v295 = vpop.f32.mrf.mxu0
    %296 = vmatprep.mubr.f32.mxu0 0.0
    %297 = vmatmul.mubr.f32.gmra.mxu0 %v102
    %v298 = vpop.f32.mrf.mxu0
    %v299 = vadd.f32 0.0, %v298
    %v300 = vpop.f32.mrf.mxu0
    %301 = vmatprep.mubr.f32.mxu0 0.0
    %302 = vmatmul.mubr.f32.gmra.mxu0 %v105
    %v303 = vpop.f32.mrf.mxu0
    %v304 = vadd.f32 0.0, %v303
    %v305 = vpop.f32.mrf.mxu0
    %306 = vmatprep.mubr.f32.mxu0 0.0
    %307 = vmatmul.mubr.f32.gmra.mxu0 %v108
    %v308 = vpop.f32.mrf.mxu0
    %v309 = vadd.f32 0.0, %v308
    %v310 = vpop.f32.mrf.mxu0
    %311 = vmatprep.mubr.f32.mxu0 0.0
    %312 = vmatmul.mubr.f32.gmra.mxu0 %v111
    %v313 = vpop.f32.mrf.mxu0
    %v314 = vadd.f32 0.0, %v313
    %v315 = vpop.f32.mrf.mxu0
    %316 = vmatprep.mubr.f32.mxu0 0.0
    %317 = vmatmul.mubr.f32.gmra.mxu0 %v114
    %v318 = vpop.f32.mrf.mxu0
    %v319 = vadd.f32 0.0, %v318
    %v320 = vpop.f32.mrf.mxu0
    %321 = vmatprep.mubr.f32.mxu0 0.0
    %322 = vmatmul.mubr.f32.gmra.mxu0 %v117
    %v323 = vpop.f32.mrf.mxu0
    %v324 = vadd.f32 0.0, %v323
    %v325 = vpop.f32.mrf.mxu0
    %326 = vmatprep.mubr.f32.mxu0 0.0
    %327 = vmatmul.mubr.f32.gmra.mxu0 %v120
    %v328 = vpop.f32.mrf.mxu0
    %v329 = vadd.f32 0.0, %v328
    %v330 = vpop.f32.mrf.mxu0
    %331 = vdwg.mxu0
    %v332 = vld [vmem:[#allocation7] sm:$0xff]
    %v333 = vld [vmem:[#allocation7 + $0x8] sm:$0xff]
    %v334 = vld [vmem:[#allocation7 + $0x10] sm:$0xff]
    %v335 = vld [vmem:[#allocation7 + $0x18] sm:$0xff]
    %v336 = vld [vmem:[#allocation7 + $0xc0] sm:$0x1]
    %v337 = vlaneseq
    %v338 = vshrl.u32 %v337, 7
    %v339 = vsub.s32 0, %v338
    %v340 = vrot.slane %v336, %v339
    %345 = vrot.lane.b32.xlu0 %v332, 96
    %v346 = vpop.permute.xlu0 %345
    %347 = vrot.lane.b32.xlu0 %v333, 96
    %v348 = vpop.permute.xlu0 %347
    %349 = vrot.lane.b32.xlu0 %v334, 96
    %v350 = vpop.permute.xlu0 %349
    %351 = vrot.lane.b32.xlu0 %v335, 96
    %v352 = vpop.permute.xlu0 %351
    %vm357 = vcmask 261120
    %v359 = vsel %vm357, %v294, 0
    %v362 = vsel %vm357, %v299, 0
    %v365 = vsel %vm357, %v304, 0
    %v368 = vsel %vm357, %v309, 0
    %v371 = vsel %vm357, %v314, 0
    %v374 = vsel %vm357, %v319, 0
    %v377 = vsel %vm357, %v324, 0
    %v380 = vsel %vm357, %v329, 0
    %382 = vmatprep.subr.mxu0 0.0
    %383 = vmatpush1.msra.mxu0 0.0
    %384 = vmatprep.subr.mxu0 0.0
    %385 = vmatpush1.msra.mxu0 0.0
    %386 = vmatprep.subr.mxu0 0.0
    %387 = vmatpush1.msra.mxu0 0.0
    %388 = vmatprep.subr.mxu0 0.0
    %389 = vmatpush1.msra.mxu0 0.0
    %390 = vmatprep.subr.mxu0 0.0
    %391 = vmatpush1.msra.mxu0 0.0
    %392 = vmatprep.subr.mxu0 0.0
    %393 = vmatpush1.msra.mxu0 0.0
    %394 = vmatprep.subr.mxu0 0.0
    %395 = vmatpush1.msra.mxu0 0.0
    %396 = vmatprep.subr.mxu0 0.0
    %397 = vmatpush1.msra.mxu0 0.0
    %398 = vmatprep.subr.mxu0 0.0
    %399 = vmatpush1.msra.mxu0 0.0
    %400 = vmatprep.subr.mxu0 0.0
    %401 = vmatpush1.msra.mxu0 0.0
    %402 = vmatprep.subr.mxu0 0.0
    %403 = vmatpush1.msra.mxu0 0.0
    %404 = vmatprep.subr.mxu0 0.0
    %405 = vmatpush1.msra.mxu0 0.0
    %406 = vmatprep.subr.mxu0 0.0
    %407 = vmatpush1.msra.mxu0 %v352
    %408 = vmatprep.subr.mxu0 0.0
    %409 = vmatpush1.msra.mxu0 %v350
    %410 = vmatprep.subr.mxu0 0.0
    %411 = vmatpush1.msra.mxu0 %v348
    %412 = vmatprep.subr.mxu0 0.0
    %413 = vmatpush1.msra.mxu0 %v346
    %414 = vmatprep.subr.mxu0 0.0
    %415 = vmatpush2.msra.mxu0 0.0
    %416 = vmatprep.subr.mxu0 0.0
    %417 = vmatpush2.msra.mxu0 0.0
    %418 = vmatprep.subr.mxu0 0.0
    %419 = vmatpush2.msra.mxu0 0.0
    %420 = vmatprep.subr.mxu0 0.0
    %421 = vmatpush2.msra.mxu0 0.0
    %422 = vmatprep.subr.mxu0 0.0
    %423 = vmatpush2.msra.mxu0 0.0
    %424 = vmatprep.subr.mxu0 0.0
    %425 = vmatpush2.msra.mxu0 0.0
    %426 = vmatprep.subr.mxu0 0.0
    %427 = vmatpush2.msra.mxu0 0.0
    %428 = vmatprep.subr.mxu0 0.0
    %429 = vmatpush2.msra.mxu0 0.0
    %430 = vmatprep.subr.mxu0 0.0
    %431 = vmatpush2.msra.mxu0 0.0
    %432 = vmatprep.subr.mxu0 0.0
    %433 = vmatpush2.msra.mxu0 0.0
    %434 = vmatprep.subr.mxu0 0.0
    %435 = vmatpush2.msra.mxu0 0.0
    %436 = vmatprep.subr.mxu0 0.0
    %437 = vmatpush2.msra.mxu0 0.0
    %438 = vmatprep.subr.mxu0 0.0
    %439 = vmatpush2.msra.mxu0 0.0
    %440 = vmatprep.subr.mxu0 0.0
    %441 = vmatpush2.msra.mxu0 0.0
    %442 = vmatprep.subr.mxu0 0.0
    %443 = vmatpush2.msra.mxu0 0.0
    %444 = vmatprep.subr.mxu0 0.0
    %445 = vmatpush2.msra.mxu0 0.0
    %446 = vmatprep.mubr.f32.mxu0 0.0
    %447 = vmatmul.mubr.f32.gmra.mxu0 %v359
    %v448 = vpop.f32.mrf.mxu0
    %v449 = vadd.f32 %v340, %v448
    %v450 = vpop.f32.mrf.mxu0
    %451 = vmatprep.mubr.f32.mxu0 0.0
    %452 = vmatmul.mubr.f32.gmra.mxu0 %v362
    %v453 = vpop.f32.mrf.mxu0
    %v454 = vadd.f32 %v340, %v453
    %v455 = vpop.f32.mrf.mxu0
    %456 = vmatprep.mubr.f32.mxu0 0.0
    %457 = vmatmul.mubr.f32.gmra.mxu0 %v365
    %v458 = vpop.f32.mrf.mxu0
    %v459 = vadd.f32 %v340, %v458
    %v460 = vpop.f32.mrf.mxu0
    %461 = vmatprep.mubr.f32.mxu0 0.0
    %462 = vmatmul.mubr.f32.gmra.mxu0 %v368
    %v463 = vpop.f32.mrf.mxu0
    %v464 = vadd.f32 %v340, %v463
    %v465 = vpop.f32.mrf.mxu0
    %466 = vmatprep.mubr.f32.mxu0 0.0
    %467 = vmatmul.mubr.f32.gmra.mxu0 %v371
    %v468 = vpop.f32.mrf.mxu0
    %v469 = vadd.f32 %v340, %v468
    %v470 = vpop.f32.mrf.mxu0
    %471 = vmatprep.mubr.f32.mxu0 0.0
    %472 = vmatmul.mubr.f32.gmra.mxu0 %v374
    %v473 = vpop.f32.mrf.mxu0
    %v474 = vadd.f32 %v340, %v473
    %v475 = vpop.f32.mrf.mxu0
    %476 = vmatprep.mubr.f32.mxu0 0.0
    %477 = vmatmul.mubr.f32.gmra.mxu0 %v377
    %v478 = vpop.f32.mrf.mxu0
    %v479 = vadd.f32 %v340, %v478
    %v480 = vpop.f32.mrf.mxu0
    %481 = vmatprep.mubr.f32.mxu0 0.0
    %482 = vmatmul.mubr.f32.gmra.mxu0 %v380
    %v483 = vpop.f32.mrf.mxu0
    %v484 = vadd.f32 %v340, %v483
    %v485 = vpop.f32.mrf.mxu0
    %486 = vdwg.mxu0
    %487 = vrot.lane.b32.xlu0 %v332, 64
    %v488 = vpop.permute.xlu0 %487
    %489 = vrot.lane.b32.xlu0 %v333, 64
    %v490 = vpop.permute.xlu0 %489
    %491 = vrot.lane.b32.xlu0 %v334, 64
    %v492 = vpop.permute.xlu0 %491
    %493 = vrot.lane.b32.xlu0 %v335, 64
    %v494 = vpop.permute.xlu0 %493
    %500 = vrot.lane.b32.xlu0 %v340, 96
    %v501 = vpop.permute.xlu0 %500
    %503 = vmatprep.subr.mxu0 0.0
    %504 = vmatpush1.msra.mxu0 0.0
    %505 = vmatprep.subr.mxu0 0.0
    %506 = vmatpush1.msra.mxu0 0.0
    %507 = vmatprep.subr.mxu0 0.0
    %508 = vmatpush1.msra.mxu0 0.0
    %509 = vmatprep.subr.mxu0 0.0
    %510 = vmatpush1.msra.mxu0 0.0
    %511 = vmatprep.subr.mxu0 0.0
    %512 = vmatpush1.msra.mxu0 0.0
    %513 = vmatprep.subr.mxu0 0.0
    %514 = vmatpush1.msra.mxu0 0.0
    %515 = vmatprep.subr.mxu0 0.0
    %516 = vmatpush1.msra.mxu0 0.0
    %517 = vmatprep.subr.mxu0 0.0
    %518 = vmatpush1.msra.mxu0 0.0
    %519 = vmatprep.subr.mxu0 0.0
    %520 = vmatpush1.msra.mxu0 0.0
    %521 = vmatprep.subr.mxu0 0.0
    %522 = vmatpush1.msra.mxu0 0.0
    %523 = vmatprep.subr.mxu0 0.0
    %524 = vmatpush1.msra.mxu0 0.0
    %525 = vmatprep.subr.mxu0 0.0
    %526 = vmatpush1.msra.mxu0 0.0
    %527 = vmatprep.subr.mxu0 0.0
    %528 = vmatpush1.msra.mxu0 %v494
    %529 = vmatprep.subr.mxu0 0.0
    %530 = vmatpush1.msra.mxu0 %v492
    %531 = vmatprep.subr.mxu0 0.0
    %532 = vmatpush1.msra.mxu0 %v490
    %533 = vmatprep.subr.mxu0 0.0
    %534 = vmatpush1.msra.mxu0 %v488
    %535 = vmatprep.subr.mxu0 0.0
    %536 = vmatpush2.msra.mxu0 0.0
    %537 = vmatprep.subr.mxu0 0.0
    %538 = vmatpush2.msra.mxu0 0.0
    %539 = vmatprep.subr.mxu0 0.0
    %540 = vmatpush2.msra.mxu0 0.0
    %541 = vmatprep.subr.mxu0 0.0
    %542 = vmatpush2.msra.mxu0 0.0
    %543 = vmatprep.subr.mxu0 0.0
    %544 = vmatpush2.msra.mxu0 0.0
    %545 = vmatprep.subr.mxu0 0.0
    %546 = vmatpush2.msra.mxu0 0.0
    %547 = vmatprep.subr.mxu0 0.0
    %548 = vmatpush2.msra.mxu0 0.0
    %549 = vmatprep.subr.mxu0 0.0
    %550 = vmatpush2.msra.mxu0 0.0
    %551 = vmatprep.subr.mxu0 0.0
    %552 = vmatpush2.msra.mxu0 0.0
    %553 = vmatprep.subr.mxu0 0.0
    %554 = vmatpush2.msra.mxu0 0.0
    %555 = vmatprep.subr.mxu0 0.0
    %556 = vmatpush2.msra.mxu0 0.0
    %557 = vmatprep.subr.mxu0 0.0
    %558 = vmatpush2.msra.mxu0 0.0
    %559 = vmatprep.subr.mxu0 0.0
    %560 = vmatpush2.msra.mxu0 0.0
    %561 = vmatprep.subr.mxu0 0.0
    %562 = vmatpush2.msra.mxu0 0.0
    %563 = vmatprep.subr.mxu0 0.0
    %564 = vmatpush2.msra.mxu0 0.0
    %565 = vmatprep.subr.mxu0 0.0
    %566 = vmatpush2.msra.mxu0 0.0
    %567 = vmatprep.mubr.f32.mxu0 0.0
    %568 = vmatmul.mubr.f32.gmra.mxu0 %v359
    %v569 = vpop.f32.mrf.mxu0
    %v570 = vadd.f32 %v501, %v569
    %v571 = vpop.f32.mrf.mxu0
    %572 = vmatprep.mubr.f32.mxu0 0.0
    %573 = vmatmul.mubr.f32.gmra.mxu0 %v362
    %v574 = vpop.f32.mrf.mxu0
    %v575 = vadd.f32 %v501, %v574
    %v576 = vpop.f32.mrf.mxu0
    %577 = vmatprep.mubr.f32.mxu0 0.0
    %578 = vmatmul.mubr.f32.gmra.mxu0 %v365
    %v579 = vpop.f32.mrf.mxu0
    %v580 = vadd.f32 %v501, %v579
    %v581 = vpop.f32.mrf.mxu0
    %582 = vmatprep.mubr.f32.mxu0 0.0
    %583 = vmatmul.mubr.f32.gmra.mxu0 %v368
    %v584 = vpop.f32.mrf.mxu0
    %v585 = vadd.f32 %v501, %v584
    %v586 = vpop.f32.mrf.mxu0
    %587 = vmatprep.mubr.f32.mxu0 0.0
    %588 = vmatmul.mubr.f32.gmra.mxu0 %v371
    %v589 = vpop.f32.mrf.mxu0
    %v590 = vadd.f32 %v501, %v589
    %v591 = vpop.f32.mrf.mxu0
    %592 = vmatprep.mubr.f32.mxu0 0.0
    %593 = vmatmul.mubr.f32.gmra.mxu0 %v374
    %v594 = vpop.f32.mrf.mxu0
    %v595 = vadd.f32 %v501, %v594
    %v596 = vpop.f32.mrf.mxu0
    %597 = vmatprep.mubr.f32.mxu0 0.0
    %598 = vmatmul.mubr.f32.gmra.mxu0 %v377
    %v599 = vpop.f32.mrf.mxu0
    %v600 = vadd.f32 %v501, %v599
    %v601 = vpop.f32.mrf.mxu0
    %602 = vmatprep.mubr.f32.mxu0 0.0
    %603 = vmatmul.mubr.f32.gmra.mxu0 %v380
    %v604 = vpop.f32.mrf.mxu0
    %v605 = vadd.f32 %v501, %v604
    %v606 = vpop.f32.mrf.mxu0
    %607 = vdwg.mxu0
    %v609 = vsel %vm357, %v72, 0
    %611 = vmatprep.subr.mxu0 0.0
    %612 = vmatpush1.msra.mxu0 0.0
    %613 = vmatprep.subr.mxu0 0.0
    %614 = vmatpush1.msra.mxu0 0.0
    %615 = vmatprep.subr.mxu0 0.0
    %616 = vmatpush1.msra.mxu0 0.0
    %617 = vmatprep.subr.mxu0 0.0
    %618 = vmatpush1.msra.mxu0 0.0
    %619 = vmatprep.subr.mxu0 0.0
    %620 = vmatpush1.msra.mxu0 0.0
    %621 = vmatprep.subr.mxu0 0.0
    %622 = vmatpush1.msra.mxu0 0.0
    %623 = vmatprep.subr.mxu0 0.0
    %624 = vmatpush1.msra.mxu0 0.0
    %625 = vmatprep.subr.mxu0 0.0
    %626 = vmatpush1.msra.mxu0 0.0
    %627 = vmatprep.subr.mxu0 0.0
    %628 = vmatpush1.msra.mxu0 0.0
    %629 = vmatprep.subr.mxu0 0.0
    %630 = vmatpush1.msra.mxu0 0.0
    %631 = vmatprep.subr.mxu0 0.0
    %632 = vmatpush1.msra.mxu0 0.0
    %633 = vmatprep.subr.mxu0 0.0
    %634 = vmatpush1.msra.mxu0 0.0
    %635 = vmatprep.subr.mxu0 0.0
    %636 = vmatpush1.msra.mxu0 %v335
    %637 = vmatprep.subr.mxu0 0.0
    %638 = vmatpush1.msra.mxu0 %v334
    %639 = vmatprep.subr.mxu0 0.0
    %640 = vmatpush1.msra.mxu0 %v333
    %641 = vmatprep.subr.mxu0 0.0
    %642 = vmatpush1.msra.mxu0 %v332
    %643 = vmatprep.subr.mxu0 0.0
    %644 = vmatpush2.msra.mxu0 0.0
    %645 = vmatprep.subr.mxu0 0.0
    %646 = vmatpush2.msra.mxu0 0.0
    %647 = vmatprep.subr.mxu0 0.0
    %648 = vmatpush2.msra.mxu0 0.0
    %649 = vmatprep.subr.mxu0 0.0
    %650 = vmatpush2.msra.mxu0 0.0
    %651 = vmatprep.subr.mxu0 0.0
    %652 = vmatpush2.msra.mxu0 0.0
    %653 = vmatprep.subr.mxu0 0.0
    %654 = vmatpush2.msra.mxu0 0.0
    %655 = vmatprep.subr.mxu0 0.0
    %656 = vmatpush2.msra.mxu0 0.0
    %657 = vmatprep.subr.mxu0 0.0
    %658 = vmatpush2.msra.mxu0 0.0
    %659 = vmatprep.subr.mxu0 0.0
    %660 = vmatpush2.msra.mxu0 0.0
    %661 = vmatprep.subr.mxu0 0.0
    %662 = vmatpush2.msra.mxu0 0.0
    %663 = vmatprep.subr.mxu0 0.0
    %664 = vmatpush2.msra.mxu0 0.0
    %665 = vmatprep.subr.mxu0 0.0
    %666 = vmatpush2.msra.mxu0 0.0
    %667 = vmatprep.subr.mxu0 0.0
    %668 = vmatpush2.msra.mxu0 0.0
    %669 = vmatprep.subr.mxu0 0.0
    %670 = vmatpush2.msra.mxu0 0.0
    %671 = vmatprep.subr.mxu0 0.0
    %672 = vmatpush2.msra.mxu0 0.0
    %673 = vmatprep.subr.mxu0 0.0
    %674 = vmatpush2.msra.mxu0 0.0
    %675 = vmatprep.mubr.f32.mxu0 0.0
    %676 = vmatmul.mubr.f32.gmra.mxu0 %v609
    %v677 = vpop.f32.mrf.mxu0
    %v678 = vadd.f32 0.0, %v677
    %v679 = vpop.f32.mrf.mxu0
    %680 = vdwg.mxu0
    %v681 = vmul.f32 %v678, %v189
    %v682 = vmul.f32 %v678, %v194
    %v683 = vmul.f32 %v678, %v199
    %v684 = vmul.f32 %v678, %v204
    %v685 = vmul.f32 %v678, %v209
    %v686 = vmul.f32 %v678, %v214
    %v687 = vmul.f32 %v678, %v219
    %v688 = vmul.f32 %v678, %v224
    %v689 = vld [vmem:[#allocation7 + $0x60] sm:$0xff]
    %v690 = vld [vmem:[#allocation7 + $0x68] sm:$0xff]
    %v691 = vld [vmem:[#allocation7 + $0x70] sm:$0xff]
    %v692 = vld [vmem:[#allocation7 + $0x78] sm:$0xff]
    %697 = vrot.lane.b32.xlu0 %v689, 96
    %v698 = vpop.permute.xlu0 %697
    %699 = vrot.lane.b32.xlu0 %v690, 96
    %v700 = vpop.permute.xlu0 %699
    %701 = vrot.lane.b32.xlu0 %v691, 96
    %v702 = vpop.permute.xlu0 %701
    %703 = vrot.lane.b32.xlu0 %v692, 96
    %v704 = vpop.permute.xlu0 %703
    %v710 = vsel %vm357, %v681, 0
    %v713 = vsel %vm357, %v682, 0
    %v716 = vsel %vm357, %v683, 0
    %v719 = vsel %vm357, %v684, 0
    %v722 = vsel %vm357, %v685, 0
    %v725 = vsel %vm357, %v686, 0
    %v728 = vsel %vm357, %v687, 0
    %v731 = vsel %vm357, %v688, 0
    %733 = vmatprep.subr.mxu0 0.0
    %734 = vmatpush1.msra.mxu0 0.0
    %735 = vmatprep.subr.mxu0 0.0
    %736 = vmatpush1.msra.mxu0 0.0
    %737 = vmatprep.subr.mxu0 0.0
    %738 = vmatpush1.msra.mxu0 0.0
    %739 = vmatprep.subr.mxu0 0.0
    %740 = vmatpush1.msra.mxu0 0.0
    %741 = vmatprep.subr.mxu0 0.0
    %742 = vmatpush1.msra.mxu0 0.0
    %743 = vmatprep.subr.mxu0 0.0
    %744 = vmatpush1.msra.mxu0 0.0
    %745 = vmatprep.subr.mxu0 0.0
    %746 = vmatpush1.msra.mxu0 0.0
    %747 = vmatprep.subr.mxu0 0.0
    %748 = vmatpush1.msra.mxu0 0.0
    %749 = vmatprep.subr.mxu0 0.0
    %750 = vmatpush1.msra.mxu0 0.0
    %751 = vmatprep.subr.mxu0 0.0
    %752 = vmatpush1.msra.mxu0 0.0
    %753 = vmatprep.subr.mxu0 0.0
    %754 = vmatpush1.msra.mxu0 0.0
    %755 = vmatprep.subr.mxu0 0.0
    %756 = vmatpush1.msra.mxu0 0.0
    %757 = vmatprep.subr.mxu0 0.0
    %758 = vmatpush1.msra.mxu0 %v704
    %759 = vmatprep.subr.mxu0 0.0
    %760 = vmatpush1.msra.mxu0 %v702
    %761 = vmatprep.subr.mxu0 0.0
    %762 = vmatpush1.msra.mxu0 %v700
    %763 = vmatprep.subr.mxu0 0.0
    %764 = vmatpush1.msra.mxu0 %v698
    %765 = vmatprep.subr.mxu0 0.0
    %766 = vmatpush2.msra.mxu0 0.0
    %767 = vmatprep.subr.mxu0 0.0
    %768 = vmatpush2.msra.mxu0 0.0
    %769 = vmatprep.subr.mxu0 0.0
    %770 = vmatpush2.msra.mxu0 0.0
    %771 = vmatprep.subr.mxu0 0.0
    %772 = vmatpush2.msra.mxu0 0.0
    %773 = vmatprep.subr.mxu0 0.0
    %774 = vmatpush2.msra.mxu0 0.0
    %775 = vmatprep.subr.mxu0 0.0
    %776 = vmatpush2.msra.mxu0 0.0
    %777 = vmatprep.subr.mxu0 0.0
    %778 = vmatpush2.msra.mxu0 0.0
    %779 = vmatprep.subr.mxu0 0.0
    %780 = vmatpush2.msra.mxu0 0.0
    %781 = vmatprep.subr.mxu0 0.0
    %782 = vmatpush2.msra.mxu0 0.0
    %783 = vmatprep.subr.mxu0 0.0
    %784 = vmatpush2.msra.mxu0 0.0
    %785 = vmatprep.subr.mxu0 0.0
    %786 = vmatpush2.msra.mxu0 0.0
    %787 = vmatprep.subr.mxu0 0.0
    %788 = vmatpush2.msra.mxu0 0.0
    %789 = vmatprep.subr.mxu0 0.0
    %790 = vmatpush2.msra.mxu0 0.0
    %791 = vmatprep.subr.mxu0 0.0
    %792 = vmatpush2.msra.mxu0 0.0
    %793 = vmatprep.subr.mxu0 0.0
    %794 = vmatpush2.msra.mxu0 0.0
    %795 = vmatprep.subr.mxu0 0.0
    %796 = vmatpush2.msra.mxu0 0.0
    %797 = vmatprep.mubr.f32.mxu0 0.0
    %798 = vmatmul.mubr.f32.gmra.mxu0 %v710
    %v799 = vpop.f32.mrf.mxu0
    %v800 = vadd.f32 0.0, %v799
    %v801 = vpop.f32.mrf.mxu0
    %802 = vmatprep.mubr.f32.mxu0 0.0
    %803 = vmatmul.mubr.f32.gmra.mxu0 %v713
    %v804 = vpop.f32.mrf.mxu0
    %v805 = vadd.f32 0.0, %v804
    %v806 = vpop.f32.mrf.mxu0
    %807 = vmatprep.mubr.f32.mxu0 0.0
    %808 = vmatmul.mubr.f32.gmra.mxu0 %v716
    %v809 = vpop.f32.mrf.mxu0
    %v810 = vadd.f32 0.0, %v809
    %v811 = vpop.f32.mrf.mxu0
    %812 = vmatprep.mubr.f32.mxu0 0.0
    %813 = vmatmul.mubr.f32.gmra.mxu0 %v719
    %v814 = vpop.f32.mrf.mxu0
    %v815 = vadd.f32 0.0, %v814
    %v816 = vpop.f32.mrf.mxu0
    %817 = vmatprep.mubr.f32.mxu0 0.0
    %818 = vmatmul.mubr.f32.gmra.mxu0 %v722
    %v819 = vpop.f32.mrf.mxu0
    %v820 = vadd.f32 0.0, %v819
    %v821 = vpop.f32.mrf.mxu0
    %822 = vmatprep.mubr.f32.mxu0 0.0
    %823 = vmatmul.mubr.f32.gmra.mxu0 %v725
    %v824 = vpop.f32.mrf.mxu0
    %v825 = vadd.f32 0.0, %v824
    %v826 = vpop.f32.mrf.mxu0
    %827 = vmatprep.mubr.f32.mxu0 0.0
    %828 = vmatmul.mubr.f32.gmra.mxu0 %v728
    %v829 = vpop.f32.mrf.mxu0
    %v830 = vadd.f32 0.0, %v829
    %v831 = vpop.f32.mrf.mxu0
    %832 = vmatprep.mubr.f32.mxu0 0.0
    %833 = vmatmul.mubr.f32.gmra.mxu0 %v731
    %v834 = vpop.f32.mrf.mxu0
    %v835 = vadd.f32 0.0, %v834
    %v836 = vpop.f32.mrf.mxu0
    %837 = vdwg.mxu0
    %v838 = vmax.f32 %v800, %v805
    %v839 = vmax.f32 %v838, %v810
    %v840 = vmax.f32 %v839, %v815
    %v841 = vmax.f32 %v840, %v820
    %v842 = vmax.f32 %v841, %v825
    %v843 = vmax.f32 %v842, %v830
    %v844 = vmax.f32 %v843, %v835
    %v845 = vsub.f32 %v800, %v844
    %v846 = vmul.f32 %v845, 1.442695
    %v847 = vpow.pop %v846
    %v848 = vsub.f32 %v805, %v844
    %v849 = vmul.f32 %v848, 1.442695
    %v850 = vpow.pop %v849
    %v851 = vsub.f32 %v810, %v844
    %v852 = vmul.f32 %v851, 1.442695
    %v853 = vpow.pop %v852
    %v854 = vsub.f32 %v815, %v844
    %v855 = vmul.f32 %v854, 1.442695
    %v856 = vpow.pop %v855
    %v857 = vsub.f32 %v820, %v844
    %v858 = vmul.f32 %v857, 1.442695
    %v859 = vpow.pop %v858
    %v860 = vsub.f32 %v825, %v844
    %v861 = vmul.f32 %v860, 1.442695
    %v862 = vpow.pop %v861
    %v863 = vsub.f32 %v830, %v844
    %v864 = vmul.f32 %v863, 1.442695
    %v865 = vpow.pop %v864
    %v866 = vsub.f32 %v835, %v844
    %v867 = vmul.f32 %v866, 1.442695
    %v868 = vpow.pop %v867
    %v869 = vmul.f32 %v847, %v189
    %v870 = vadd.f32 %v847, %v850
    %v871 = vmul.f32 %v850, %v194
    %v872 = vadd.f32 %v869, %v871
    %v873 = vadd.f32 %v870, %v853
    %v874 = vmul.f32 %v853, %v199
    %v875 = vadd.f32 %v872, %v874
    %v876 = vadd.f32 %v873, %v856
    %v877 = vmul.f32 %v856, %v204
    %v878 = vadd.f32 %v875, %v877
    %v879 = vadd.f32 %v876, %v859
    %v880 = vmul.f32 %v859, %v209
    %v881 = vadd.f32 %v878, %v880
    %v882 = vadd.f32 %v879, %v862
    %v883 = vmul.f32 %v862, %v214
    %v884 = vadd.f32 %v881, %v883
    %v885 = vadd.f32 %v882, %v865
    %v886 = vmul.f32 %v865, %v219
    %v887 = vadd.f32 %v884, %v886
    %v888 = vadd.f32 %v885, %v868
    %v889 = vmul.f32 %v868, %v224
    %v890 = vadd.f32 %v887, %v889
    %v891 = vrcp.pop %v888
    %v892 = vmul.f32 %v890, %v891
    %v893 = vld [vmem:[#allocation7 + $0x20] sm:$0xff]
    %v894 = vld [vmem:[#allocation7 + $0x28] sm:$0xff]
    %v895 = vld [vmem:[#allocation7 + $0x30] sm:$0xff]
    %v896 = vld [vmem:[#allocation7 + $0x38] sm:$0xff]
    %v897 = vld [vmem:[#allocation7 + $0x40] sm:$0xff]
    %v898 = vld [vmem:[#allocation7 + $0x48] sm:$0xff]
    %v899 = vld [vmem:[#allocation7 + $0x50] sm:$0xff]
    %v900 = vld [vmem:[#allocation7 + $0x58] sm:$0xff]
    %v901 = vld [vmem:[#allocation7 + $0xc1] sm:$0x1]
    %902 = vrot.lane.b32.xlu0 %v332, 32
    %v903 = vpop.permute.xlu0 %902
    %904 = vrot.lane.b32.xlu0 %v333, 32
    %v905 = vpop.permute.xlu0 %904
    %906 = vrot.lane.b32.xlu0 %v334, 32
    %v907 = vpop.permute.xlu0 %906
    %908 = vrot.lane.b32.xlu0 %v335, 32
    %v909 = vpop.permute.xlu0 %908
    %914 = vrot.lane.b32.xlu0 %v340, 64
    %v915 = vpop.permute.xlu0 %914
    %v918 = vsel %vm357, %v892, 0
    %920 = vmatprep.subr.mxu0 0.0
    %921 = vmatpush1.msra.mxu0 0.0
    %922 = vmatprep.subr.mxu0 0.0
    %923 = vmatpush1.msra.mxu0 0.0
    %924 = vmatprep.subr.mxu0 0.0
    %925 = vmatpush1.msra.mxu0 0.0
    %926 = vmatprep.subr.mxu0 0.0
    %927 = vmatpush1.msra.mxu0 0.0
    %928 = vmatprep.subr.mxu0 0.0
    %929 = vmatpush1.msra.mxu0 0.0
    %930 = vmatprep.subr.mxu0 0.0
    %931 = vmatpush1.msra.mxu0 0.0
    %932 = vmatprep.subr.mxu0 0.0
    %933 = vmatpush1.msra.mxu0 0.0
    %934 = vmatprep.subr.mxu0 0.0
    %935 = vmatpush1.msra.mxu0 0.0
    %936 = vmatprep.subr.mxu0 0.0
    %937 = vmatpush1.msra.mxu0 0.0
    %938 = vmatprep.subr.mxu0 0.0
    %939 = vmatpush1.msra.mxu0 0.0
    %940 = vmatprep.subr.mxu0 0.0
    %941 = vmatpush1.msra.mxu0 0.0
    %942 = vmatprep.subr.mxu0 0.0
    %943 = vmatpush1.msra.mxu0 0.0
    %944 = vmatprep.subr.mxu0 0.0
    %945 = vmatpush1.msra.mxu0 %v909
    %946 = vmatprep.subr.mxu0 0.0
    %947 = vmatpush1.msra.mxu0 %v907
    %948 = vmatprep.subr.mxu0 0.0
    %949 = vmatpush1.msra.mxu0 %v905
    %950 = vmatprep.subr.mxu0 0.0
    %951 = vmatpush1.msra.mxu0 %v903
    %952 = vmatprep.subr.mxu0 0.0
    %953 = vmatpush2.msra.mxu0 0.0
    %954 = vmatprep.subr.mxu0 0.0
    %955 = vmatpush2.msra.mxu0 0.0
    %956 = vmatprep.subr.mxu0 0.0
    %957 = vmatpush2.msra.mxu0 0.0
    %958 = vmatprep.subr.mxu0 0.0
    %959 = vmatpush2.msra.mxu0 0.0
    %960 = vmatprep.subr.mxu0 0.0
    %961 = vmatpush2.msra.mxu0 0.0
    %962 = vmatprep.subr.mxu0 0.0
    %963 = vmatpush2.msra.mxu0 0.0
    %964 = vmatprep.subr.mxu0 0.0
    %965 = vmatpush2.msra.mxu0 0.0
    %966 = vmatprep.subr.mxu0 0.0
    %967 = vmatpush2.msra.mxu0 0.0
    %968 = vmatprep.subr.mxu0 0.0
    %969 = vmatpush2.msra.mxu0 0.0
    %970 = vmatprep.subr.mxu0 0.0
    %971 = vmatpush2.msra.mxu0 0.0
    %972 = vmatprep.subr.mxu0 0.0
    %973 = vmatpush2.msra.mxu0 0.0
    %974 = vmatprep.subr.mxu0 0.0
    %975 = vmatpush2.msra.mxu0 0.0
    %976 = vmatprep.subr.mxu0 0.0
    %977 = vmatpush2.msra.mxu0 0.0
    %978 = vmatprep.subr.mxu0 0.0
    %979 = vmatpush2.msra.mxu0 0.0
    %980 = vmatprep.subr.mxu0 0.0
    %981 = vmatpush2.msra.mxu0 0.0
    %982 = vmatprep.subr.mxu0 0.0
    %983 = vmatpush2.msra.mxu0 0.0
    %984 = vmatprep.mubr.f32.mxu0 0.0
    %985 = vmatmul.mubr.f32.gmra.mxu0 %v918
    %v986 = vpop.f32.mrf.mxu0
    %v987 = vadd.f32 %v915, %v986
    %v988 = vpop.f32.mrf.mxu0
    %989 = vdwg.mxu0
    %v990 = vmul.f32 %v987, %v449
    %v991 = vmul.f32 %v987, %v454
    %v992 = vmul.f32 %v987, %v459
    %v993 = vmul.f32 %v987, %v464
    %v994 = vmul.f32 %v987, %v469
    %v995 = vmul.f32 %v987, %v474
    %v996 = vmul.f32 %v987, %v479
    %v997 = vmul.f32 %v987, %v484
    %998 = vrot.lane.b32.xlu0 %v689, 64
    %v999 = vpop.permute.xlu0 %998
    %1000 = vrot.lane.b32.xlu0 %v690, 64
    %v1001 = vpop.permute.xlu0 %1000
    %1002 = vrot.lane.b32.xlu0 %v691, 64
    %v1003 = vpop.permute.xlu0 %1002
    %1004 = vrot.lane.b32.xlu0 %v692, 64
    %v1005 = vpop.permute.xlu0 %1004
    %v1011 = vsel %vm357, %v990, 0
    %v1014 = vsel %vm357, %v991, 0
    %v1017 = vsel %vm357, %v992, 0
    %v1020 = vsel %vm357, %v993, 0
    %v1023 = vsel %vm357, %v994, 0
    %v1026 = vsel %vm357, %v995, 0
    %v1029 = vsel %vm357, %v996, 0
    %v1032 = vsel %vm357, %v997, 0
    %1034 = vmatprep.subr.mxu0 0.0
    %1035 = vmatpush1.msra.mxu0 0.0
    %1036 = vmatprep.subr.mxu0 0.0
    %1037 = vmatpush1.msra.mxu0 0.0
    %1038 = vmatprep.subr.mxu0 0.0
    %1039 = vmatpush1.msra.mxu0 0.0
    %1040 = vmatprep.subr.mxu0 0.0
    %1041 = vmatpush1.msra.mxu0 0.0
    %1042 = vmatprep.subr.mxu0 0.0
    %1043 = vmatpush1.msra.mxu0 0.0
    %1044 = vmatprep.subr.mxu0 0.0
    %1045 = vmatpush1.msra.mxu0 0.0
    %1046 = vmatprep.subr.mxu0 0.0
    %1047 = vmatpush1.msra.mxu0 0.0
    %1048 = vmatprep.subr.mxu0 0.0
    %1049 = vmatpush1.msra.mxu0 0.0
    %1050 = vmatprep.subr.mxu0 0.0
    %1051 = vmatpush1.msra.mxu0 0.0
    %1052 = vmatprep.subr.mxu0 0.0
    %1053 = vmatpush1.msra.mxu0 0.0
    %1054 = vmatprep.subr.mxu0 0.0
    %1055 = vmatpush1.msra.mxu0 0.0
    %1056 = vmatprep.subr.mxu0 0.0
    %1057 = vmatpush1.msra.mxu0 0.0
    %1058 = vmatprep.subr.mxu0 0.0
    %1059 = vmatpush1.msra.mxu0 %v1005
    %1060 = vmatprep.subr.mxu0 0.0
    %1061 = vmatpush1.msra.mxu0 %v1003
    %1062 = vmatprep.subr.mxu0 0.0
    %1063 = vmatpush1.msra.mxu0 %v1001
    %1064 = vmatprep.subr.mxu0 0.0
    %1065 = vmatpush1.msra.mxu0 %v999
    %1066 = vmatprep.subr.mxu0 0.0
    %1067 = vmatpush2.msra.mxu0 0.0
    %1068 = vmatprep.subr.mxu0 0.0
    %1069 = vmatpush2.msra.mxu0 0.0
    %1070 = vmatprep.subr.mxu0 0.0
    %1071 = vmatpush2.msra.mxu0 0.0
    %1072 = vmatprep.subr.mxu0 0.0
    %1073 = vmatpush2.msra.mxu0 0.0
    %1074 = vmatprep.subr.mxu0 0.0
    %1075 = vmatpush2.msra.mxu0 0.0
    %1076 = vmatprep.subr.mxu0 0.0
    %1077 = vmatpush2.msra.mxu0 0.0
    %1078 = vmatprep.subr.mxu0 0.0
    %1079 = vmatpush2.msra.mxu0 0.0
    %1080 = vmatprep.subr.mxu0 0.0
    %1081 = vmatpush2.msra.mxu0 0.0
    %1082 = vmatprep.subr.mxu0 0.0
    %1083 = vmatpush2.msra.mxu0 0.0
    %1084 = vmatprep.subr.mxu0 0.0
    %1085 = vmatpush2.msra.mxu0 0.0
    %1086 = vmatprep.subr.mxu0 0.0
    %1087 = vmatpush2.msra.mxu0 0.0
    %1088 = vmatprep.subr.mxu0 0.0
    %1089 = vmatpush2.msra.mxu0 0.0
    %1090 = vmatprep.subr.mxu0 0.0
    %1091 = vmatpush2.msra.mxu0 0.0
    %1092 = vmatprep.subr.mxu0 0.0
    %1093 = vmatpush2.msra.mxu0 0.0
    %1094 = vmatprep.subr.mxu0 0.0
    %1095 = vmatpush2.msra.mxu0 0.0
    %1096 = vmatprep.subr.mxu0 0.0
    %1097 = vmatpush2.msra.mxu0 0.0
    %1098 = vmatprep.mubr.f32.mxu0 0.0
    %1099 = vmatmul.mubr.f32.gmra.mxu0 %v1011
    %v1100 = vpop.f32.mrf.mxu0
    %v1101 = vadd.f32 0.0, %v1100
    %v1102 = vpop.f32.mrf.mxu0
    %1103 = vmatprep.mubr.f32.mxu0 0.0
    %1104 = vmatmul.mubr.f32.gmra.mxu0 %v1014
    %v1105 = vpop.f32.mrf.mxu0
    %v1106 = vadd.f32 0.0, %v1105
    %v1107 = vpop.f32.mrf.mxu0
    %1108 = vmatprep.mubr.f32.mxu0 0.0
    %1109 = vmatmul.mubr.f32.gmra.mxu0 %v1017
    %v1110 = vpop.f32.mrf.mxu0
    %v1111 = vadd.f32 0.0, %v1110
    %v1112 = vpop.f32.mrf.mxu0
    %1113 = vmatprep.mubr.f32.mxu0 0.0
    %1114 = vmatmul.mubr.f32.gmra.mxu0 %v1020
    %v1115 = vpop.f32.mrf.mxu0
    %v1116 = vadd.f32 0.0, %v1115
    %v1117 = vpop.f32.mrf.mxu0
    %1118 = vmatprep.mubr.f32.mxu0 0.0
    %1119 = vmatmul.mubr.f32.gmra.mxu0 %v1023
    %v1120 = vpop.f32.mrf.mxu0
    %v1121 = vadd.f32 0.0, %v1120
    %v1122 = vpop.f32.mrf.mxu0
    %1123 = vmatprep.mubr.f32.mxu0 0.0
    %1124 = vmatmul.mubr.f32.gmra.mxu0 %v1026
    %v1125 = vpop.f32.mrf.mxu0
    %v1126 = vadd.f32 0.0, %v1125
    %v1127 = vpop.f32.mrf.mxu0
    %1128 = vmatprep.mubr.f32.mxu0 0.0
    %1129 = vmatmul.mubr.f32.gmra.mxu0 %v1029
    %v1130 = vpop.f32.mrf.mxu0
    %v1131 = vadd.f32 0.0, %v1130
    %v1132 = vpop.f32.mrf.mxu0
    %1133 = vmatprep.mubr.f32.mxu0 0.0
    %1134 = vmatmul.mubr.f32.gmra.mxu0 %v1032
    %v1135 = vpop.f32.mrf.mxu0
    %v1136 = vadd.f32 0.0, %v1135
    %v1137 = vpop.f32.mrf.mxu0
    %1138 = vdwg.mxu0
    %v1139 = vmax.f32 %v1101, %v1106
    %v1140 = vmax.f32 %v1139, %v1111
    %v1141 = vmax.f32 %v1140, %v1116
    %v1142 = vmax.f32 %v1141, %v1121
    %v1143 = vmax.f32 %v1142, %v1126
    %v1144 = vmax.f32 %v1143, %v1131
    %v1145 = vmax.f32 %v1144, %v1136
    %v1146 = vsub.f32 %v1101, %v1145
    %v1147 = vmul.f32 %v1146, 1.442695
    %v1148 = vpow.pop %v1147
    %v1149 = vsub.f32 %v1106, %v1145
    %v1150 = vmul.f32 %v1149, 1.442695
    %v1151 = vpow.pop %v1150
    %v1152 = vsub.f32 %v1111, %v1145
    %v1153 = vmul.f32 %v1152, 1.442695
    %v1154 = vpow.pop %v1153
    %v1155 = vsub.f32 %v1116, %v1145
    %v1156 = vmul.f32 %v1155, 1.442695
    %v1157 = vpow.pop %v1156
    %v1158 = vsub.f32 %v1121, %v1145
    %v1159 = vmul.f32 %v1158, 1.442695
    %v1160 = vpow.pop %v1159
    %v1161 = vsub.f32 %v1126, %v1145
    %v1162 = vmul.f32 %v1161, 1.442695
    %v1163 = vpow.pop %v1162
    %v1164 = vsub.f32 %v1131, %v1145
    %v1165 = vmul.f32 %v1164, 1.442695
    %v1166 = vpow.pop %v1165
    %v1167 = vsub.f32 %v1136, %v1145
    %v1168 = vmul.f32 %v1167, 1.442695
    %v1169 = vpow.pop %v1168
    %v1170 = vmul.f32 %v1148, %v570
    %v1171 = vadd.f32 %v1148, %v1151
    %v1172 = vmul.f32 %v1151, %v575
    %v1173 = vadd.f32 %v1170, %v1172
    %v1174 = vadd.f32 %v1171, %v1154
    %v1175 = vmul.f32 %v1154, %v580
    %v1176 = vadd.f32 %v1173, %v1175
    %v1177 = vadd.f32 %v1174, %v1157
    %v1178 = vmul.f32 %v1157, %v585
    %v1179 = vadd.f32 %v1176, %v1178
    %v1180 = vadd.f32 %v1177, %v1160
    %v1181 = vmul.f32 %v1160, %v590
    %v1182 = vadd.f32 %v1179, %v1181
    %v1183 = vadd.f32 %v1180, %v1163
    %v1184 = vmul.f32 %v1163, %v595
    %v1185 = vadd.f32 %v1182, %v1184
    %v1186 = vadd.f32 %v1183, %v1166
    %v1187 = vmul.f32 %v1166, %v600
    %v1188 = vadd.f32 %v1185, %v1187
    %v1189 = vadd.f32 %v1186, %v1169
    %v1190 = vmul.f32 %v1169, %v605
    %v1191 = vadd.f32 %v1188, %v1190
    %v1192 = vrcp.pop %v1189
    %v1193 = vmul.f32 %v1191, %v1192
    %1194 = vmatprep.subr.mxu0 0.0
    %1195 = vmatpush1.msra.mxu0 0.0
    %1196 = vmatprep.subr.mxu0 0.0
    %1197 = vmatpush1.msra.mxu0 0.0
    %1198 = vmatprep.subr.mxu0 0.0
    %1199 = vmatpush1.msra.mxu0 0.0
    %1200 = vmatprep.subr.mxu0 0.0
    %1201 = vmatpush1.msra.mxu0 0.0
    %1202 = vmatprep.subr.mxu0 0.0
    %1203 = vmatpush1.msra.mxu0 0.0
    %1204 = vmatprep.subr.mxu0 0.0
    %1205 = vmatpush1.msra.mxu0 0.0
    %1206 = vmatprep.subr.mxu0 0.0
    %1207 = vmatpush1.msra.mxu0 0.0
    %1208 = vmatprep.subr.mxu0 0.0
    %1209 = vmatpush1.msra.mxu0 0.0
    %1210 = vmatprep.subr.mxu0 0.0
    %1211 = vmatpush1.msra.mxu0 0.0
    %1212 = vmatprep.subr.mxu0 0.0
    %1213 = vmatpush1.msra.mxu0 0.0
    %1214 = vmatprep.subr.mxu0 0.0
    %1215 = vmatpush1.msra.mxu0 0.0
    %1216 = vmatprep.subr.mxu0 0.0
    %1217 = vmatpush1.msra.mxu0 0.0
    %1218 = vmatprep.subr.mxu0 0.0
    %1219 = vmatpush1.msra.mxu0 %v896
    %1220 = vmatprep.subr.mxu0 0.0
    %1221 = vmatpush1.msra.mxu0 %v895
    %1222 = vmatprep.subr.mxu0 0.0
    %1223 = vmatpush1.msra.mxu0 %v894
    %1224 = vmatprep.subr.mxu0 0.0
    %1225 = vmatpush1.msra.mxu0 %v893
    %1226 = vmatprep.subr.mxu0 0.0
    %1227 = vmatpush2.msra.mxu0 0.0
    %1228 = vmatprep.subr.mxu0 0.0
    %1229 = vmatpush2.msra.mxu0 0.0
    %1230 = vmatprep.subr.mxu0 0.0
    %1231 = vmatpush2.msra.mxu0 0.0
    %1232 = vmatprep.subr.mxu0 0.0
    %1233 = vmatpush2.msra.mxu0 0.0
    %1234 = vmatprep.subr.mxu0 0.0
    %1235 = vmatpush2.msra.mxu0 0.0
    %1236 = vmatprep.subr.mxu0 0.0
    %1237 = vmatpush2.msra.mxu0 0.0
    %1238 = vmatprep.subr.mxu0 0.0
    %1239 = vmatpush2.msra.mxu0 0.0
    %1240 = vmatprep.subr.mxu0 0.0
    %1241 = vmatpush2.msra.mxu0 0.0
    %1242 = vmatprep.subr.mxu0 0.0
    %1243 = vmatpush2.msra.mxu0 0.0
    %1244 = vmatprep.subr.mxu0 0.0
    %1245 = vmatpush2.msra.mxu0 0.0
    %1246 = vmatprep.subr.mxu0 0.0
    %1247 = vmatpush2.msra.mxu0 0.0
    %1248 = vmatprep.subr.mxu0 0.0
    %1249 = vmatpush2.msra.mxu0 0.0
    %1250 = vmatprep.subr.mxu0 0.0
    %1251 = vmatpush2.msra.mxu0 0.0
    %1252 = vmatprep.subr.mxu0 0.0
    %1253 = vmatpush2.msra.mxu0 0.0
    %1254 = vmatprep.subr.mxu0 0.0
    %1255 = vmatpush2.msra.mxu0 0.0
    %1256 = vmatprep.subr.mxu0 0.0
    %1257 = vmatpush2.msra.mxu0 0.0
    %1258 = vmatprep.mubr.f32.mxu0 0.0
    %1259 = vmatmul.mubr.f32.gmra.mxu0 %v918
    %v1260 = vpop.f32.mrf.mxu0
    %v1261 = vadd.f32 0.0, %v1260
    %v1262 = vpop.f32.mrf.mxu0
    %1263 = vdwg.mxu0
    %1268 = vrot.lane.b32.xlu0 %v893, 32
    %v1269 = vpop.permute.xlu0 %1268
    %1270 = vrot.lane.b32.xlu0 %v894, 32
    %v1271 = vpop.permute.xlu0 %1270
    %1272 = vrot.lane.b32.xlu0 %v895, 32
    %v1273 = vpop.permute.xlu0 %1272
    %1274 = vrot.lane.b32.xlu0 %v896, 32
    %v1275 = vpop.permute.xlu0 %1274
    %v1281 = vsel %vm357, %v1193, 0
    %1283 = vmatprep.subr.mxu0 0.0
    %1284 = vmatpush1.msra.mxu0 0.0
    %1285 = vmatprep.subr.mxu0 0.0
    %1286 = vmatpush1.msra.mxu0 0.0
    %1287 = vmatprep.subr.mxu0 0.0
    %1288 = vmatpush1.msra.mxu0 0.0
    %1289 = vmatprep.subr.mxu0 0.0
    %1290 = vmatpush1.msra.mxu0 0.0
    %1291 = vmatprep.subr.mxu0 0.0
    %1292 = vmatpush1.msra.mxu0 0.0
    %1293 = vmatprep.subr.mxu0 0.0
    %1294 = vmatpush1.msra.mxu0 0.0
    %1295 = vmatprep.subr.mxu0 0.0
    %1296 = vmatpush1.msra.mxu0 0.0
    %1297 = vmatprep.subr.mxu0 0.0
    %1298 = vmatpush1.msra.mxu0 0.0
    %1299 = vmatprep.subr.mxu0 0.0
    %1300 = vmatpush1.msra.mxu0 0.0
    %1301 = vmatprep.subr.mxu0 0.0
    %1302 = vmatpush1.msra.mxu0 0.0
    %1303 = vmatprep.subr.mxu0 0.0
    %1304 = vmatpush1.msra.mxu0 0.0
    %1305 = vmatprep.subr.mxu0 0.0
    %1306 = vmatpush1.msra.mxu0 0.0
    %1307 = vmatprep.subr.mxu0 0.0
    %1308 = vmatpush1.msra.mxu0 %v1275
    %1309 = vmatprep.subr.mxu0 0.0
    %1310 = vmatpush1.msra.mxu0 %v1273
    %1311 = vmatprep.subr.mxu0 0.0
    %1312 = vmatpush1.msra.mxu0 %v1271
    %1313 = vmatprep.subr.mxu0 0.0
    %1314 = vmatpush1.msra.mxu0 %v1269
    %1315 = vmatprep.subr.mxu0 0.0
    %1316 = vmatpush2.msra.mxu0 0.0
    %1317 = vmatprep.subr.mxu0 0.0
    %1318 = vmatpush2.msra.mxu0 0.0
    %1319 = vmatprep.subr.mxu0 0.0
    %1320 = vmatpush2.msra.mxu0 0.0
    %1321 = vmatprep.subr.mxu0 0.0
    %1322 = vmatpush2.msra.mxu0 0.0
    %1323 = vmatprep.subr.mxu0 0.0
    %1324 = vmatpush2.msra.mxu0 0.0
    %1325 = vmatprep.subr.mxu0 0.0
    %1326 = vmatpush2.msra.mxu0 0.0
    %1327 = vmatprep.subr.mxu0 0.0
    %1328 = vmatpush2.msra.mxu0 0.0
    %1329 = vmatprep.subr.mxu0 0.0
    %1330 = vmatpush2.msra.mxu0 0.0
    %1331 = vmatprep.subr.mxu0 0.0
    %1332 = vmatpush2.msra.mxu0 0.0
    %1333 = vmatprep.subr.mxu0 0.0
    %1334 = vmatpush2.msra.mxu0 0.0
    %1335 = vmatprep.subr.mxu0 0.0
    %1336 = vmatpush2.msra.mxu0 0.0
    %1337 = vmatprep.subr.mxu0 0.0
    %1338 = vmatpush2.msra.mxu0 0.0
    %1339 = vmatprep.subr.mxu0 0.0
    %1340 = vmatpush2.msra.mxu0 0.0
    %1341 = vmatprep.subr.mxu0 0.0
    %1342 = vmatpush2.msra.mxu0 0.0
    %1343 = vmatprep.subr.mxu0 0.0
    %1344 = vmatpush2.msra.mxu0 0.0
    %1345 = vmatprep.subr.mxu0 0.0
    %1346 = vmatpush2.msra.mxu0 0.0
    %1347 = vmatprep.mubr.f32.mxu0 0.0
    %1348 = vmatmul.mubr.f32.gmra.mxu0 %v1281
    %v1349 = vpop.f32.mrf.mxu0
    %v1350 = vadd.f32 %v1261, %v1349
    %v1351 = vpop.f32.mrf.mxu0
    %1352 = vdwg.mxu0
    %1353 = vrot.lane.b32.xlu0 %v340, 32
    %v1354 = vpop.permute.xlu0 %1353
    %v1356 = vadd.f32 %v1350, %v1354
    %v1357 = vxor.u32 %v1356, 2147483648
    %v1358 = vmul.f32 %v1357, 1.442695
    %v1359 = vpow.pop %v1358
    %v1360 = vadd.f32 %v1359, 1.0
    %v1361 = vrcp.pop %v1360
    %v1362 = vmul.f32 1.0, %v1361
    %1363 = vrot.lane.b32.xlu0 %v893, 96
    %v1364 = vpop.permute.xlu0 %1363
    %1365 = vrot.lane.b32.xlu0 %v894, 96
    %v1366 = vpop.permute.xlu0 %1365
    %1367 = vrot.lane.b32.xlu0 %v895, 96
    %v1368 = vpop.permute.xlu0 %1367
    %1369 = vrot.lane.b32.xlu0 %v896, 96
    %v1370 = vpop.permute.xlu0 %1369
    %1375 = vmatprep.subr.mxu0 0.0
    %1376 = vmatpush1.msra.mxu0 0.0
    %1377 = vmatprep.subr.mxu0 0.0
    %1378 = vmatpush1.msra.mxu0 0.0
    %1379 = vmatprep.subr.mxu0 0.0
    %1380 = vmatpush1.msra.mxu0 0.0
    %1381 = vmatprep.subr.mxu0 0.0
    %1382 = vmatpush1.msra.mxu0 0.0
    %1383 = vmatprep.subr.mxu0 0.0
    %1384 = vmatpush1.msra.mxu0 0.0
    %1385 = vmatprep.subr.mxu0 0.0
    %1386 = vmatpush1.msra.mxu0 0.0
    %1387 = vmatprep.subr.mxu0 0.0
    %1388 = vmatpush1.msra.mxu0 0.0
    %1389 = vmatprep.subr.mxu0 0.0
    %1390 = vmatpush1.msra.mxu0 0.0
    %1391 = vmatprep.subr.mxu0 0.0
    %1392 = vmatpush1.msra.mxu0 0.0
    %1393 = vmatprep.subr.mxu0 0.0
    %1394 = vmatpush1.msra.mxu0 0.0
    %1395 = vmatprep.subr.mxu0 0.0
    %1396 = vmatpush1.msra.mxu0 0.0
    %1397 = vmatprep.subr.mxu0 0.0
    %1398 = vmatpush1.msra.mxu0 0.0
    %1399 = vmatprep.subr.mxu0 0.0
    %1400 = vmatpush1.msra.mxu0 %v1370
    %1401 = vmatprep.subr.mxu0 0.0
    %1402 = vmatpush1.msra.mxu0 %v1368
    %1403 = vmatprep.subr.mxu0 0.0
    %1404 = vmatpush1.msra.mxu0 %v1366
    %1405 = vmatprep.subr.mxu0 0.0
    %1406 = vmatpush1.msra.mxu0 %v1364
    %1407 = vmatprep.subr.mxu0 0.0
    %1408 = vmatpush2.msra.mxu0 0.0
    %1409 = vmatprep.subr.mxu0 0.0
    %1410 = vmatpush2.msra.mxu0 0.0
    %1411 = vmatprep.subr.mxu0 0.0
    %1412 = vmatpush2.msra.mxu0 0.0
    %1413 = vmatprep.subr.mxu0 0.0
    %1414 = vmatpush2.msra.mxu0 0.0
    %1415 = vmatprep.subr.mxu0 0.0
    %1416 = vmatpush2.msra.mxu0 0.0
    %1417 = vmatprep.subr.mxu0 0.0
    %1418 = vmatpush2.msra.mxu0 0.0
    %1419 = vmatprep.subr.mxu0 0.0
    %1420 = vmatpush2.msra.mxu0 0.0
    %1421 = vmatprep.subr.mxu0 0.0
    %1422 = vmatpush2.msra.mxu0 0.0
    %1423 = vmatprep.subr.mxu0 0.0
    %1424 = vmatpush2.msra.mxu0 0.0
    %1425 = vmatprep.subr.mxu0 0.0
    %1426 = vmatpush2.msra.mxu0 0.0
    %1427 = vmatprep.subr.mxu0 0.0
    %1428 = vmatpush2.msra.mxu0 0.0
    %1429 = vmatprep.subr.mxu0 0.0
    %1430 = vmatpush2.msra.mxu0 0.0
    %1431 = vmatprep.subr.mxu0 0.0
    %1432 = vmatpush2.msra.mxu0 0.0
    %1433 = vmatprep.subr.mxu0 0.0
    %1434 = vmatpush2.msra.mxu0 0.0
    %1435 = vmatprep.subr.mxu0 0.0
    %1436 = vmatpush2.msra.mxu0 0.0
    %1437 = vmatprep.subr.mxu0 0.0
    %1438 = vmatpush2.msra.mxu0 0.0
    %1439 = vmatprep.mubr.f32.mxu0 0.0
    %1440 = vmatmul.mubr.f32.gmra.mxu0 %v918
    %v1441 = vpop.f32.mrf.mxu0
    %v1442 = vadd.f32 0.0, %v1441
    %v1443 = vpop.f32.mrf.mxu0
    %1444 = vdwg.mxu0
    %1445 = vmatprep.subr.mxu0 0.0
    %1446 = vmatpush1.msra.mxu0 0.0
    %1447 = vmatprep.subr.mxu0 0.0
    %1448 = vmatpush1.msra.mxu0 0.0
    %1449 = vmatprep.subr.mxu0 0.0
    %1450 = vmatpush1.msra.mxu0 0.0
    %1451 = vmatprep.subr.mxu0 0.0
    %1452 = vmatpush1.msra.mxu0 0.0
    %1453 = vmatprep.subr.mxu0 0.0
    %1454 = vmatpush1.msra.mxu0 0.0
    %1455 = vmatprep.subr.mxu0 0.0
    %1456 = vmatpush1.msra.mxu0 0.0
    %1457 = vmatprep.subr.mxu0 0.0
    %1458 = vmatpush1.msra.mxu0 0.0
    %1459 = vmatprep.subr.mxu0 0.0
    %1460 = vmatpush1.msra.mxu0 0.0
    %1461 = vmatprep.subr.mxu0 0.0
    %1462 = vmatpush1.msra.mxu0 0.0
    %1463 = vmatprep.subr.mxu0 0.0
    %1464 = vmatpush1.msra.mxu0 0.0
    %1465 = vmatprep.subr.mxu0 0.0
    %1466 = vmatpush1.msra.mxu0 0.0
    %1467 = vmatprep.subr.mxu0 0.0
    %1468 = vmatpush1.msra.mxu0 0.0
    %1469 = vmatprep.subr.mxu0 0.0
    %1470 = vmatpush1.msra.mxu0 %v900
    %1471 = vmatprep.subr.mxu0 0.0
    %1472 = vmatpush1.msra.mxu0 %v899
    %1473 = vmatprep.subr.mxu0 0.0
    %1474 = vmatpush1.msra.mxu0 %v898
    %1475 = vmatprep.subr.mxu0 0.0
    %1476 = vmatpush1.msra.mxu0 %v897
    %1477 = vmatprep.subr.mxu0 0.0
    %1478 = vmatpush2.msra.mxu0 0.0
    %1479 = vmatprep.subr.mxu0 0.0
    %1480 = vmatpush2.msra.mxu0 0.0
    %1481 = vmatprep.subr.mxu0 0.0
    %1482 = vmatpush2.msra.mxu0 0.0
    %1483 = vmatprep.subr.mxu0 0.0
    %1484 = vmatpush2.msra.mxu0 0.0
    %1485 = vmatprep.subr.mxu0 0.0
    %1486 = vmatpush2.msra.mxu0 0.0
    %1487 = vmatprep.subr.mxu0 0.0
    %1488 = vmatpush2.msra.mxu0 0.0
    %1489 = vmatprep.subr.mxu0 0.0
    %1490 = vmatpush2.msra.mxu0 0.0
    %1491 = vmatprep.subr.mxu0 0.0
    %1492 = vmatpush2.msra.mxu0 0.0
    %1493 = vmatprep.subr.mxu0 0.0
    %1494 = vmatpush2.msra.mxu0 0.0
    %1495 = vmatprep.subr.mxu0 0.0
    %1496 = vmatpush2.msra.mxu0 0.0
    %1497 = vmatprep.subr.mxu0 0.0
    %1498 = vmatpush2.msra.mxu0 0.0
    %1499 = vmatprep.subr.mxu0 0.0
    %1500 = vmatpush2.msra.mxu0 0.0
    %1501 = vmatprep.subr.mxu0 0.0
    %1502 = vmatpush2.msra.mxu0 0.0
    %1503 = vmatprep.subr.mxu0 0.0
    %1504 = vmatpush2.msra.mxu0 0.0
    %1505 = vmatprep.subr.mxu0 0.0
    %1506 = vmatpush2.msra.mxu0 0.0
    %1507 = vmatprep.subr.mxu0 0.0
    %1508 = vmatpush2.msra.mxu0 0.0
    %1509 = vmatprep.mubr.f32.mxu0 0.0
    %1510 = vmatmul.mubr.f32.gmra.mxu0 %v1281
    %v1511 = vpop.f32.mrf.mxu0
    %v1512 = vadd.f32 %v1442, %v1511
    %v1513 = vpop.f32.mrf.mxu0
    %1514 = vdwg.mxu0
    %v1515 = vlaneseq
    %v1516 = vshrl.u32 %v1515, 7
    %v1517 = vsub.s32 0, %v1516
    %v1518 = vrot.slane %v901, %v1517
    %v1519 = vadd.f32 %v1512, %v1518
    %v1520 = vxor.u32 %v1519, 2147483648
    %v1521 = vmul.f32 %v1520, 1.442695
    %v1522 = vpow.pop %v1521
    %v1523 = vadd.f32 %v1522, 1.0
    %v1524 = vrcp.pop %v1523
    %v1525 = vmul.f32 1.0, %v1524
    %1530 = vrot.lane.b32.xlu0 %v897, 96
    %v1531 = vpop.permute.xlu0 %1530
    %1532 = vrot.lane.b32.xlu0 %v898, 96
    %v1533 = vpop.permute.xlu0 %1532
    %1534 = vrot.lane.b32.xlu0 %v899, 96
    %v1535 = vpop.permute.xlu0 %1534
    %1536 = vrot.lane.b32.xlu0 %v900, 96
    %v1537 = vpop.permute.xlu0 %1536
    %1543 = vrot.lane.b32.xlu0 %v1518, 96
    %v1544 = vpop.permute.xlu0 %1543
    %1546 = vmatprep.subr.mxu0 0.0
    %1547 = vmatpush1.msra.mxu0 0.0
    %1548 = vmatprep.subr.mxu0 0.0
    %1549 = vmatpush1.msra.mxu0 0.0
    %1550 = vmatprep.subr.mxu0 0.0
    %1551 = vmatpush1.msra.mxu0 0.0
    %1552 = vmatprep.subr.mxu0 0.0
    %1553 = vmatpush1.msra.mxu0 0.0
    %1554 = vmatprep.subr.mxu0 0.0
    %1555 = vmatpush1.msra.mxu0 0.0
    %1556 = vmatprep.subr.mxu0 0.0
    %1557 = vmatpush1.msra.mxu0 0.0
    %1558 = vmatprep.subr.mxu0 0.0
    %1559 = vmatpush1.msra.mxu0 0.0
    %1560 = vmatprep.subr.mxu0 0.0
    %1561 = vmatpush1.msra.mxu0 0.0
    %1562 = vmatprep.subr.mxu0 0.0
    %1563 = vmatpush1.msra.mxu0 0.0
    %1564 = vmatprep.subr.mxu0 0.0
    %1565 = vmatpush1.msra.mxu0 0.0
    %1566 = vmatprep.subr.mxu0 0.0
    %1567 = vmatpush1.msra.mxu0 0.0
    %1568 = vmatprep.subr.mxu0 0.0
    %1569 = vmatpush1.msra.mxu0 0.0
    %1570 = vmatprep.subr.mxu0 0.0
    %1571 = vmatpush1.msra.mxu0 %v1537
    %1572 = vmatprep.subr.mxu0 0.0
    %1573 = vmatpush1.msra.mxu0 %v1535
    %1574 = vmatprep.subr.mxu0 0.0
    %1575 = vmatpush1.msra.mxu0 %v1533
    %1576 = vmatprep.subr.mxu0 0.0
    %1577 = vmatpush1.msra.mxu0 %v1531
    %1578 = vmatprep.subr.mxu0 0.0
    %1579 = vmatpush2.msra.mxu0 0.0
    %1580 = vmatprep.subr.mxu0 0.0
    %1581 = vmatpush2.msra.mxu0 0.0
    %1582 = vmatprep.subr.mxu0 0.0
    %1583 = vmatpush2.msra.mxu0 0.0
    %1584 = vmatprep.subr.mxu0 0.0
    %1585 = vmatpush2.msra.mxu0 0.0
    %1586 = vmatprep.subr.mxu0 0.0
    %1587 = vmatpush2.msra.mxu0 0.0
    %1588 = vmatprep.subr.mxu0 0.0
    %1589 = vmatpush2.msra.mxu0 0.0
    %1590 = vmatprep.subr.mxu0 0.0
    %1591 = vmatpush2.msra.mxu0 0.0
    %1592 = vmatprep.subr.mxu0 0.0
    %1593 = vmatpush2.msra.mxu0 0.0
    %1594 = vmatprep.subr.mxu0 0.0
    %1595 = vmatpush2.msra.mxu0 0.0
    %1596 = vmatprep.subr.mxu0 0.0
    %1597 = vmatpush2.msra.mxu0 0.0
    %1598 = vmatprep.subr.mxu0 0.0
    %1599 = vmatpush2.msra.mxu0 0.0
    %1600 = vmatprep.subr.mxu0 0.0
    %1601 = vmatpush2.msra.mxu0 0.0
    %1602 = vmatprep.subr.mxu0 0.0
    %1603 = vmatpush2.msra.mxu0 0.0
    %1604 = vmatprep.subr.mxu0 0.0
    %1605 = vmatpush2.msra.mxu0 0.0
    %1606 = vmatprep.subr.mxu0 0.0
    %1607 = vmatpush2.msra.mxu0 0.0
    %1608 = vmatprep.subr.mxu0 0.0
    %1609 = vmatpush2.msra.mxu0 0.0
    %1610 = vmatprep.mubr.f32.mxu0 0.0
    %1611 = vmatmul.mubr.f32.gmra.mxu0 %v1281
    %v1612 = vpop.f32.mrf.mxu0
    %v1613 = vadd.f32 %v1544, %v1612
    %v1614 = vpop.f32.mrf.mxu0
    %1615 = vdwg.mxu0
    %1616 = vrot.lane.b32.xlu0 %v893, 64
    %v1617 = vpop.permute.xlu0 %1616
    %1618 = vrot.lane.b32.xlu0 %v894, 64
    %v1619 = vpop.permute.xlu0 %1618
    %1620 = vrot.lane.b32.xlu0 %v895, 64
    %v1621 = vpop.permute.xlu0 %1620
    %1622 = vrot.lane.b32.xlu0 %v896, 64
    %v1623 = vpop.permute.xlu0 %1622
    %1628 = vrot.lane.b32.xlu0 %v1518, 64
    %v1629 = vpop.permute.xlu0 %1628
    %1631 = vmatprep.subr.mxu0 0.0
    %1632 = vmatpush1.msra.mxu0 0.0
    %1633 = vmatprep.subr.mxu0 0.0
    %1634 = vmatpush1.msra.mxu0 0.0
    %1635 = vmatprep.subr.mxu0 0.0
    %1636 = vmatpush1.msra.mxu0 0.0
    %1637 = vmatprep.subr.mxu0 0.0
    %1638 = vmatpush1.msra.mxu0 0.0
    %1639 = vmatprep.subr.mxu0 0.0
    %1640 = vmatpush1.msra.mxu0 0.0
    %1641 = vmatprep.subr.mxu0 0.0
    %1642 = vmatpush1.msra.mxu0 0.0
    %1643 = vmatprep.subr.mxu0 0.0
    %1644 = vmatpush1.msra.mxu0 0.0
    %1645 = vmatprep.subr.mxu0 0.0
    %1646 = vmatpush1.msra.mxu0 0.0
    %1647 = vmatprep.subr.mxu0 0.0
    %1648 = vmatpush1.msra.mxu0 0.0
    %1649 = vmatprep.subr.mxu0 0.0
    %1650 = vmatpush1.msra.mxu0 0.0
    %1651 = vmatprep.subr.mxu0 0.0
    %1652 = vmatpush1.msra.mxu0 0.0
    %1653 = vmatprep.subr.mxu0 0.0
    %1654 = vmatpush1.msra.mxu0 0.0
    %1655 = vmatprep.subr.mxu0 0.0
    %1656 = vmatpush1.msra.mxu0 %v1623
    %1657 = vmatprep.subr.mxu0 0.0
    %1658 = vmatpush1.msra.mxu0 %v1621
    %1659 = vmatprep.subr.mxu0 0.0
    %1660 = vmatpush1.msra.mxu0 %v1619
    %1661 = vmatprep.subr.mxu0 0.0
    %1662 = vmatpush1.msra.mxu0 %v1617
    %1663 = vmatprep.subr.mxu0 0.0
    %1664 = vmatpush2.msra.mxu0 0.0
    %1665 = vmatprep.subr.mxu0 0.0
    %1666 = vmatpush2.msra.mxu0 0.0
    %1667 = vmatprep.subr.mxu0 0.0
    %1668 = vmatpush2.msra.mxu0 0.0
    %1669 = vmatprep.subr.mxu0 0.0
    %1670 = vmatpush2.msra.mxu0 0.0
    %1671 = vmatprep.subr.mxu0 0.0
    %1672 = vmatpush2.msra.mxu0 0.0
    %1673 = vmatprep.subr.mxu0 0.0
    %1674 = vmatpush2.msra.mxu0 0.0
    %1675 = vmatprep.subr.mxu0 0.0
    %1676 = vmatpush2.msra.mxu0 0.0
    %1677 = vmatprep.subr.mxu0 0.0
    %1678 = vmatpush2.msra.mxu0 0.0
    %1679 = vmatprep.subr.mxu0 0.0
    %1680 = vmatpush2.msra.mxu0 0.0
    %1681 = vmatprep.subr.mxu0 0.0
    %1682 = vmatpush2.msra.mxu0 0.0
    %1683 = vmatprep.subr.mxu0 0.0
    %1684 = vmatpush2.msra.mxu0 0.0
    %1685 = vmatprep.subr.mxu0 0.0
    %1686 = vmatpush2.msra.mxu0 0.0
    %1687 = vmatprep.subr.mxu0 0.0
    %1688 = vmatpush2.msra.mxu0 0.0
    %1689 = vmatprep.subr.mxu0 0.0
    %1690 = vmatpush2.msra.mxu0 0.0
    %1691 = vmatprep.subr.mxu0 0.0
    %1692 = vmatpush2.msra.mxu0 0.0
    %1693 = vmatprep.subr.mxu0 0.0
    %1694 = vmatpush2.msra.mxu0 0.0
    %1695 = vmatprep.mubr.f32.mxu0 0.0
    %1696 = vmatmul.mubr.f32.gmra.mxu0 %v918
    %v1697 = vpop.f32.mrf.mxu0
    %v1698 = vadd.f32 %v1629, %v1697
    %v1699 = vpop.f32.mrf.mxu0
    %1700 = vdwg.mxu0
    %v1701 = vmul.f32 %v1362, %v1698
    %v1702 = vadd.f32 %v1613, %v1701
    %v1703 = vtanh.pop %v1702
    %v1704 = vsub.f32 1.0, %v1525
    %v1705 = vmul.f32 %v1704, %v1703
    %v1706 = vmul.f32 %v1525, %v892
    %v1707 = vadd.f32 %v1705, %v1706
    %v1709 = vsel %vm357, %v1707, 0
    %1711 = vmatprep.subr.mxu0 0.0
    %1712 = vmatpush1.msra.mxu0 0.0
    %1713 = vmatprep.subr.mxu0 0.0
    %1714 = vmatpush1.msra.mxu0 0.0
    %1715 = vmatprep.subr.mxu0 0.0
    %1716 = vmatpush1.msra.mxu0 0.0
    %1717 = vmatprep.subr.mxu0 0.0
    %1718 = vmatpush1.msra.mxu0 0.0
    %1719 = vmatprep.subr.mxu0 0.0
    %1720 = vmatpush1.msra.mxu0 0.0
    %1721 = vmatprep.subr.mxu0 0.0
    %1722 = vmatpush1.msra.mxu0 0.0
    %1723 = vmatprep.subr.mxu0 0.0
    %1724 = vmatpush1.msra.mxu0 0.0
    %1725 = vmatprep.subr.mxu0 0.0
    %1726 = vmatpush1.msra.mxu0 0.0
    %1727 = vmatprep.subr.mxu0 0.0
    %1728 = vmatpush1.msra.mxu0 0.0
    %1729 = vmatprep.subr.mxu0 0.0
    %1730 = vmatpush1.msra.mxu0 0.0
    %1731 = vmatprep.subr.mxu0 0.0
    %1732 = vmatpush1.msra.mxu0 0.0
    %1733 = vmatprep.subr.mxu0 0.0
    %1734 = vmatpush1.msra.mxu0 0.0
    %1735 = vmatprep.subr.mxu0 0.0
    %1736 = vmatpush1.msra.mxu0 %v909
    %1737 = vmatprep.subr.mxu0 0.0
    %1738 = vmatpush1.msra.mxu0 %v907
    %1739 = vmatprep.subr.mxu0 0.0
    %1740 = vmatpush1.msra.mxu0 %v905
    %1741 = vmatprep.subr.mxu0 0.0
    %1742 = vmatpush1.msra.mxu0 %v903
    %1743 = vmatprep.subr.mxu0 0.0
    %1744 = vmatpush2.msra.mxu0 0.0
    %1745 = vmatprep.subr.mxu0 0.0
    %1746 = vmatpush2.msra.mxu0 0.0
    %1747 = vmatprep.subr.mxu0 0.0
    %1748 = vmatpush2.msra.mxu0 0.0
    %1749 = vmatprep.subr.mxu0 0.0
    %1750 = vmatpush2.msra.mxu0 0.0
    %1751 = vmatprep.subr.mxu0 0.0
    %1752 = vmatpush2.msra.mxu0 0.0
    %1753 = vmatprep.subr.mxu0 0.0
    %1754 = vmatpush2.msra.mxu0 0.0
    %1755 = vmatprep.subr.mxu0 0.0
    %1756 = vmatpush2.msra.mxu0 0.0
    %1757 = vmatprep.subr.mxu0 0.0
    %1758 = vmatpush2.msra.mxu0 0.0
    %1759 = vmatprep.subr.mxu0 0.0
    %1760 = vmatpush2.msra.mxu0 0.0
    %1761 = vmatprep.subr.mxu0 0.0
    %1762 = vmatpush2.msra.mxu0 0.0
    %1763 = vmatprep.subr.mxu0 0.0
    %1764 = vmatpush2.msra.mxu0 0.0
    %1765 = vmatprep.subr.mxu0 0.0
    %1766 = vmatpush2.msra.mxu0 0.0
    %1767 = vmatprep.subr.mxu0 0.0
    %1768 = vmatpush2.msra.mxu0 0.0
    %1769 = vmatprep.subr.mxu0 0.0
    %1770 = vmatpush2.msra.mxu0 0.0
    %1771 = vmatprep.subr.mxu0 0.0
    %1772 = vmatpush2.msra.mxu0 0.0
    %1773 = vmatprep.subr.mxu0 0.0
    %1774 = vmatpush2.msra.mxu0 0.0
    %1775 = vmatprep.mubr.f32.mxu0 0.0
    %1776 = vmatmul.mubr.f32.gmra.mxu0 %v1709
    %v1777 = vpop.f32.mrf.mxu0
    %v1778 = vadd.f32 %v915, %v1777
    %v1779 = vpop.f32.mrf.mxu0
    %1780 = vdwg.mxu0
    %v1781 = vmul.f32 %v1778, %v449
    %v1782 = vmul.f32 %v1778, %v454
    %v1783 = vmul.f32 %v1778, %v459
    %v1784 = vmul.f32 %v1778, %v464
    %v1785 = vmul.f32 %v1778, %v469
    %v1786 = vmul.f32 %v1778, %v474
    %v1787 = vmul.f32 %v1778, %v479
    %v1788 = vmul.f32 %v1778, %v484
    %v1790 = vsel %vm357, %v1781, 0
    %v1793 = vsel %vm357, %v1782, 0
    %v1796 = vsel %vm357, %v1783, 0
    %v1799 = vsel %vm357, %v1784, 0
    %v1802 = vsel %vm357, %v1785, 0
    %v1805 = vsel %vm357, %v1786, 0
    %v1808 = vsel %vm357, %v1787, 0
    %v1811 = vsel %vm357, %v1788, 0
    %1813 = vmatprep.subr.mxu0 0.0
    %1814 = vmatpush1.msra.mxu0 0.0
    %1815 = vmatprep.subr.mxu0 0.0
    %1816 = vmatpush1.msra.mxu0 0.0
    %1817 = vmatprep.subr.mxu0 0.0
    %1818 = vmatpush1.msra.mxu0 0.0
    %1819 = vmatprep.subr.mxu0 0.0
    %1820 = vmatpush1.msra.mxu0 0.0
    %1821 = vmatprep.subr.mxu0 0.0
    %1822 = vmatpush1.msra.mxu0 0.0
    %1823 = vmatprep.subr.mxu0 0.0
    %1824 = vmatpush1.msra.mxu0 0.0
    %1825 = vmatprep.subr.mxu0 0.0
    %1826 = vmatpush1.msra.mxu0 0.0
    %1827 = vmatprep.subr.mxu0 0.0
    %1828 = vmatpush1.msra.mxu0 0.0
    %1829 = vmatprep.subr.mxu0 0.0
    %1830 = vmatpush1.msra.mxu0 0.0
    %1831 = vmatprep.subr.mxu0 0.0
    %1832 = vmatpush1.msra.mxu0 0.0
    %1833 = vmatprep.subr.mxu0 0.0
    %1834 = vmatpush1.msra.mxu0 0.0
    %1835 = vmatprep.subr.mxu0 0.0
    %1836 = vmatpush1.msra.mxu0 0.0
    %1837 = vmatprep.subr.mxu0 0.0
    %1838 = vmatpush1.msra.mxu0 %v1005
    %1839 = vmatprep.subr.mxu0 0.0
    %1840 = vmatpush1.msra.mxu0 %v1003
    %1841 = vmatprep.subr.mxu0 0.0
    %1842 = vmatpush1.msra.mxu0 %v1001
    %1843 = vmatprep.subr.mxu0 0.0
    %1844 = vmatpush1.msra.mxu0 %v999
    %1845 = vmatprep.subr.mxu0 0.0
    %1846 = vmatpush2.msra.mxu0 0.0
    %1847 = vmatprep.subr.mxu0 0.0
    %1848 = vmatpush2.msra.mxu0 0.0
    %1849 = vmatprep.subr.mxu0 0.0
    %1850 = vmatpush2.msra.mxu0 0.0
    %1851 = vmatprep.subr.mxu0 0.0
    %1852 = vmatpush2.msra.mxu0 0.0
    %1853 = vmatprep.subr.mxu0 0.0
    %1854 = vmatpush2.msra.mxu0 0.0
    %1855 = vmatprep.subr.mxu0 0.0
    %1856 = vmatpush2.msra.mxu0 0.0
    %1857 = vmatprep.subr.mxu0 0.0
    %1858 = vmatpush2.msra.mxu0 0.0
    %1859 = vmatprep.subr.mxu0 0.0
    %1860 = vmatpush2.msra.mxu0 0.0
    %1861 = vmatprep.subr.mxu0 0.0
    %1862 = vmatpush2.msra.mxu0 0.0
    %1863 = vmatprep.subr.mxu0 0.0
    %1864 = vmatpush2.msra.mxu0 0.0
    %1865 = vmatprep.subr.mxu0 0.0
    %1866 = vmatpush2.msra.mxu0 0.0
    %1867 = vmatprep.subr.mxu0 0.0
    %1868 = vmatpush2.msra.mxu0 0.0
    %1869 = vmatprep.subr.mxu0 0.0
    %1870 = vmatpush2.msra.mxu0 0.0
    %1871 = vmatprep.subr.mxu0 0.0
    %1872 = vmatpush2.msra.mxu0 0.0
    %1873 = vmatprep.subr.mxu0 0.0
    %1874 = vmatpush2.msra.mxu0 0.0
    %1875 = vmatprep.subr.mxu0 0.0
    %1876 = vmatpush2.msra.mxu0 0.0
    %1877 = vmatprep.mubr.f32.mxu0 0.0
    %1878 = vmatmul.mubr.f32.gmra.mxu0 %v1790
    %v1879 = vpop.f32.mrf.mxu0
    %v1880 = vadd.f32 0.0, %v1879
    %v1881 = vpop.f32.mrf.mxu0
    %1882 = vmatprep.mubr.f32.mxu0 0.0
    %1883 = vmatmul.mubr.f32.gmra.mxu0 %v1793
    %v1884 = vpop.f32.mrf.mxu0
    %v1885 = vadd.f32 0.0, %v1884
    %v1886 = vpop.f32.mrf.mxu0
    %1887 = vmatprep.mubr.f32.mxu0 0.0
    %1888 = vmatmul.mubr.f32.gmra.mxu0 %v1796
    %v1889 = vpop.f32.mrf.mxu0
    %v1890 = vadd.f32 0.0, %v1889
    %v1891 = vpop.f32.mrf.mxu0
    %1892 = vmatprep.mubr.f32.mxu0 0.0
    %1893 = vmatmul.mubr.f32.gmra.mxu0 %v1799
    %v1894 = vpop.f32.mrf.mxu0
    %v1895 = vadd.f32 0.0, %v1894
    %v1896 = vpop.f32.mrf.mxu0
    %1897 = vmatprep.mubr.f32.mxu0 0.0
    %1898 = vmatmul.mubr.f32.gmra.mxu0 %v1802
    %v1899 = vpop.f32.mrf.mxu0
    %v1900 = vadd.f32 0.0, %v1899
    %v1901 = vpop.f32.mrf.mxu0
    %1902 = vmatprep.mubr.f32.mxu0 0.0
    %1903 = vmatmul.mubr.f32.gmra.mxu0 %v1805
    %v1904 = vpop.f32.mrf.mxu0
    %v1905 = vadd.f32 0.0, %v1904
    %v1906 = vpop.f32.mrf.mxu0
    %1907 = vmatprep.mubr.f32.mxu0 0.0
    %1908 = vmatmul.mubr.f32.gmra.mxu0 %v1808
    %v1909 = vpop.f32.mrf.mxu0
    %v1910 = vadd.f32 0.0, %v1909
    %v1911 = vpop.f32.mrf.mxu0
    %1912 = vmatprep.mubr.f32.mxu0 0.0
    %1913 = vmatmul.mubr.f32.gmra.mxu0 %v1811
    %v1914 = vpop.f32.mrf.mxu0
    %v1915 = vadd.f32 0.0, %v1914
    %v1916 = vpop.f32.mrf.mxu0
    %1917 = vdwg.mxu0
    %v1918 = vmax.f32 %v1880, %v1885
    %v1919 = vmax.f32 %v1918, %v1890
    %v1920 = vmax.f32 %v1919, %v1895
    %v1921 = vmax.f32 %v1920, %v1900
    %v1922 = vmax.f32 %v1921, %v1905
    %v1923 = vmax.f32 %v1922, %v1910
    %v1924 = vmax.f32 %v1923, %v1915
    %v1925 = vsub.f32 %v1880, %v1924
    %v1926 = vmul.f32 %v1925, 1.442695
    %v1927 = vpow.pop %v1926
    %v1928 = vsub.f32 %v1885, %v1924
    %v1929 = vmul.f32 %v1928, 1.442695
    %v1930 = vpow.pop %v1929
    %v1931 = vsub.f32 %v1890, %v1924
    %v1932 = vmul.f32 %v1931, 1.442695
    %v1933 = vpow.pop %v1932
    %v1934 = vsub.f32 %v1895, %v1924
    %v1935 = vmul.f32 %v1934, 1.442695
    %v1936 = vpow.pop %v1935
    %v1937 = vsub.f32 %v1900, %v1924
    %v1938 = vmul.f32 %v1937, 1.442695
    %v1939 = vpow.pop %v1938
    %v1940 = vsub.f32 %v1905, %v1924
    %v1941 = vmul.f32 %v1940, 1.442695
    %v1942 = vpow.pop %v1941
    %v1943 = vsub.f32 %v1910, %v1924
    %v1944 = vmul.f32 %v1943, 1.442695
    %v1945 = vpow.pop %v1944
    %v1946 = vsub.f32 %v1915, %v1924
    %v1947 = vmul.f32 %v1946, 1.442695
    %v1948 = vpow.pop %v1947
    %v1949 = vmul.f32 %v1927, %v570
    %v1950 = vadd.f32 %v1927, %v1930
    %v1951 = vmul.f32 %v1930, %v575
    %v1952 = vadd.f32 %v1949, %v1951
    %v1953 = vadd.f32 %v1950, %v1933
    %v1954 = vmul.f32 %v1933, %v580
    %v1955 = vadd.f32 %v1952, %v1954
    %v1956 = vadd.f32 %v1953, %v1936
    %v1957 = vmul.f32 %v1936, %v585
    %v1958 = vadd.f32 %v1955, %v1957
    %v1959 = vadd.f32 %v1956, %v1939
    %v1960 = vmul.f32 %v1939, %v590
    %v1961 = vadd.f32 %v1958, %v1960
    %v1962 = vadd.f32 %v1959, %v1942
    %v1963 = vmul.f32 %v1942, %v595
    %v1964 = vadd.f32 %v1961, %v1963
    %v1965 = vadd.f32 %v1962, %v1945
    %v1966 = vmul.f32 %v1945, %v600
    %v1967 = vadd.f32 %v1964, %v1966
    %v1968 = vadd.f32 %v1965, %v1948
    %v1969 = vmul.f32 %v1948, %v605
    %v1970 = vadd.f32 %v1967, %v1969
    %v1971 = vrcp.pop %v1968
    %v1972 = vmul.f32 %v1970, %v1971
    %1973 = vmatprep.subr.mxu0 0.0
    %1974 = vmatpush1.msra.mxu0 0.0
    %1975 = vmatprep.subr.mxu0 0.0
    %1976 = vmatpush1.msra.mxu0 0.0
    %1977 = vmatprep.subr.mxu0 0.0
    %1978 = vmatpush1.msra.mxu0 0.0
    %1979 = vmatprep.subr.mxu0 0.0
    %1980 = vmatpush1.msra.mxu0 0.0
    %1981 = vmatprep.subr.mxu0 0.0
    %1982 = vmatpush1.msra.mxu0 0.0
    %1983 = vmatprep.subr.mxu0 0.0
    %1984 = vmatpush1.msra.mxu0 0.0
    %1985 = vmatprep.subr.mxu0 0.0
    %1986 = vmatpush1.msra.mxu0 0.0
    %1987 = vmatprep.subr.mxu0 0.0
    %1988 = vmatpush1.msra.mxu0 0.0
    %1989 = vmatprep.subr.mxu0 0.0
    %1990 = vmatpush1.msra.mxu0 0.0
    %1991 = vmatprep.subr.mxu0 0.0
    %1992 = vmatpush1.msra.mxu0 0.0
    %1993 = vmatprep.subr.mxu0 0.0
    %1994 = vmatpush1.msra.mxu0 0.0
    %1995 = vmatprep.subr.mxu0 0.0
    %1996 = vmatpush1.msra.mxu0 0.0
    %1997 = vmatprep.subr.mxu0 0.0
    %1998 = vmatpush1.msra.mxu0 %v896
    %1999 = vmatprep.subr.mxu0 0.0
    %2000 = vmatpush1.msra.mxu0 %v895
    %2001 = vmatprep.subr.mxu0 0.0
    %2002 = vmatpush1.msra.mxu0 %v894
    %2003 = vmatprep.subr.mxu0 0.0
    %2004 = vmatpush1.msra.mxu0 %v893
    %2005 = vmatprep.subr.mxu0 0.0
    %2006 = vmatpush2.msra.mxu0 0.0
    %2007 = vmatprep.subr.mxu0 0.0
    %2008 = vmatpush2.msra.mxu0 0.0
    %2009 = vmatprep.subr.mxu0 0.0
    %2010 = vmatpush2.msra.mxu0 0.0
    %2011 = vmatprep.subr.mxu0 0.0
    %2012 = vmatpush2.msra.mxu0 0.0
    %2013 = vmatprep.subr.mxu0 0.0
    %2014 = vmatpush2.msra.mxu0 0.0
    %2015 = vmatprep.subr.mxu0 0.0
    %2016 = vmatpush2.msra.mxu0 0.0
    %2017 = vmatprep.subr.mxu0 0.0
    %2018 = vmatpush2.msra.mxu0 0.0
    %2019 = vmatprep.subr.mxu0 0.0
    %2020 = vmatpush2.msra.mxu0 0.0
    %2021 = vmatprep.subr.mxu0 0.0
    %2022 = vmatpush2.msra.mxu0 0.0
    %2023 = vmatprep.subr.mxu0 0.0
    %2024 = vmatpush2.msra.mxu0 0.0
    %2025 = vmatprep.subr.mxu0 0.0
    %2026 = vmatpush2.msra.mxu0 0.0
    %2027 = vmatprep.subr.mxu0 0.0
    %2028 = vmatpush2.msra.mxu0 0.0
    %2029 = vmatprep.subr.mxu0 0.0
    %2030 = vmatpush2.msra.mxu0 0.0
    %2031 = vmatprep.subr.mxu0 0.0
    %2032 = vmatpush2.msra.mxu0 0.0
    %2033 = vmatprep.subr.mxu0 0.0
    %2034 = vmatpush2.msra.mxu0 0.0
    %2035 = vmatprep.subr.mxu0 0.0
    %2036 = vmatpush2.msra.mxu0 0.0
    %2037 = vmatprep.mubr.f32.mxu0 0.0
    %2038 = vmatmul.mubr.f32.gmra.mxu0 %v1709
    %v2039 = vpop.f32.mrf.mxu0
    %v2040 = vadd.f32 0.0, %v2039
    %v2041 = vpop.f32.mrf.mxu0
    %2042 = vdwg.mxu0
    %v2044 = vsel %vm357, %v1972, 0
    %2046 = vmatprep.subr.mxu0 0.0
    %2047 = vmatpush1.msra.mxu0 0.0
    %2048 = vmatprep.subr.mxu0 0.0
    %2049 = vmatpush1.msra.mxu0 0.0
    %2050 = vmatprep.subr.mxu0 0.0
    %2051 = vmatpush1.msra.mxu0 0.0
    %2052 = vmatprep.subr.mxu0 0.0
    %2053 = vmatpush1.msra.mxu0 0.0
    %2054 = vmatprep.subr.mxu0 0.0
    %2055 = vmatpush1.msra.mxu0 0.0
    %2056 = vmatprep.subr.mxu0 0.0
    %2057 = vmatpush1.msra.mxu0 0.0
    %2058 = vmatprep.subr.mxu0 0.0
    %2059 = vmatpush1.msra.mxu0 0.0
    %2060 = vmatprep.subr.mxu0 0.0
    %2061 = vmatpush1.msra.mxu0 0.0
    %2062 = vmatprep.subr.mxu0 0.0
    %2063 = vmatpush1.msra.mxu0 0.0
    %2064 = vmatprep.subr.mxu0 0.0
    %2065 = vmatpush1.msra.mxu0 0.0
    %2066 = vmatprep.subr.mxu0 0.0
    %2067 = vmatpush1.msra.mxu0 0.0
    %2068 = vmatprep.subr.mxu0 0.0
    %2069 = vmatpush1.msra.mxu0 0.0
    %2070 = vmatprep.subr.mxu0 0.0
    %2071 = vmatpush1.msra.mxu0 %v1275
    %2072 = vmatprep.subr.mxu0 0.0
    %2073 = vmatpush1.msra.mxu0 %v1273
    %2074 = vmatprep.subr.mxu0 0.0
    %2075 = vmatpush1.msra.mxu0 %v1271
    %2076 = vmatprep.subr.mxu0 0.0
    %2077 = vmatpush1.msra.mxu0 %v1269
    %2078 = vmatprep.subr.mxu0 0.0
    %2079 = vmatpush2.msra.mxu0 0.0
    %2080 = vmatprep.subr.mxu0 0.0
    %2081 = vmatpush2.msra.mxu0 0.0
    %2082 = vmatprep.subr.mxu0 0.0
    %2083 = vmatpush2.msra.mxu0 0.0
    %2084 = vmatprep.subr.mxu0 0.0
    %2085 = vmatpush2.msra.mxu0 0.0
    %2086 = vmatprep.subr.mxu0 0.0
    %2087 = vmatpush2.msra.mxu0 0.0
    %2088 = vmatprep.subr.mxu0 0.0
    %2089 = vmatpush2.msra.mxu0 0.0
    %2090 = vmatprep.subr.mxu0 0.0
    %2091 = vmatpush2.msra.mxu0 0.0
    %2092 = vmatprep.subr.mxu0 0.0
    %2093 = vmatpush2.msra.mxu0 0.0
    %2094 = vmatprep.subr.mxu0 0.0
    %2095 = vmatpush2.msra.mxu0 0.0
    %2096 = vmatprep.subr.mxu0 0.0
    %2097 = vmatpush2.msra.mxu0 0.0
    %2098 = vmatprep.subr.mxu0 0.0
    %2099 = vmatpush2.msra.mxu0 0.0
    %2100 = vmatprep.subr.mxu0 0.0
    %2101 = vmatpush2.msra.mxu0 0.0
    %2102 = vmatprep.subr.mxu0 0.0
    %2103 = vmatpush2.msra.mxu0 0.0
    %2104 = vmatprep.subr.mxu0 0.0
    %2105 = vmatpush2.msra.mxu0 0.0
    %2106 = vmatprep.subr.mxu0 0.0
    %2107 = vmatpush2.msra.mxu0 0.0
    %2108 = vmatprep.subr.mxu0 0.0
    %2109 = vmatpush2.msra.mxu0 0.0
    %2110 = vmatprep.mubr.f32.mxu0 0.0
    %2111 = vmatmul.mubr.f32.gmra.mxu0 %v2044
    %v2112 = vpop.f32.mrf.mxu0
    %v2113 = vadd.f32 %v2040, %v2112
    %v2114 = vpop.f32.mrf.mxu0
    %2115 = vdwg.mxu0
    %v2116 = vadd.f32 %v2113, %v1354
    %v2117 = vxor.u32 %v2116, 2147483648
    %v2118 = vmul.f32 %v2117, 1.442695
    %v2119 = vpow.pop %v2118
    %v2120 = vadd.f32 %v2119, 1.0
    %v2121 = vrcp.pop %v2120
    %v2122 = vmul.f32 1.0, %v2121
    %2123 = vmatprep.subr.mxu0 0.0
    %2124 = vmatpush1.msra.mxu0 0.0
    %2125 = vmatprep.subr.mxu0 0.0
    %2126 = vmatpush1.msra.mxu0 0.0
    %2127 = vmatprep.subr.mxu0 0.0
    %2128 = vmatpush1.msra.mxu0 0.0
    %2129 = vmatprep.subr.mxu0 0.0
    %2130 = vmatpush1.msra.mxu0 0.0
    %2131 = vmatprep.subr.mxu0 0.0
    %2132 = vmatpush1.msra.mxu0 0.0
    %2133 = vmatprep.subr.mxu0 0.0
    %2134 = vmatpush1.msra.mxu0 0.0
    %2135 = vmatprep.subr.mxu0 0.0
    %2136 = vmatpush1.msra.mxu0 0.0
    %2137 = vmatprep.subr.mxu0 0.0
    %2138 = vmatpush1.msra.mxu0 0.0
    %2139 = vmatprep.subr.mxu0 0.0
    %2140 = vmatpush1.msra.mxu0 0.0
    %2141 = vmatprep.subr.mxu0 0.0
    %2142 = vmatpush1.msra.mxu0 0.0
    %2143 = vmatprep.subr.mxu0 0.0
    %2144 = vmatpush1.msra.mxu0 0.0
    %2145 = vmatprep.subr.mxu0 0.0
    %2146 = vmatpush1.msra.mxu0 0.0
    %2147 = vmatprep.subr.mxu0 0.0
    %2148 = vmatpush1.msra.mxu0 %v1370
    %2149 = vmatprep.subr.mxu0 0.0
    %2150 = vmatpush1.msra.mxu0 %v1368
    %2151 = vmatprep.subr.mxu0 0.0
    %2152 = vmatpush1.msra.mxu0 %v1366
    %2153 = vmatprep.subr.mxu0 0.0
    %2154 = vmatpush1.msra.mxu0 %v1364
    %2155 = vmatprep.subr.mxu0 0.0
    %2156 = vmatpush2.msra.mxu0 0.0
    %2157 = vmatprep.subr.mxu0 0.0
    %2158 = vmatpush2.msra.mxu0 0.0
    %2159 = vmatprep.subr.mxu0 0.0
    %2160 = vmatpush2.msra.mxu0 0.0
    %2161 = vmatprep.subr.mxu0 0.0
    %2162 = vmatpush2.msra.mxu0 0.0
    %2163 = vmatprep.subr.mxu0 0.0
    %2164 = vmatpush2.msra.mxu0 0.0
    %2165 = vmatprep.subr.mxu0 0.0
    %2166 = vmatpush2.msra.mxu0 0.0
    %2167 = vmatprep.subr.mxu0 0.0
    %2168 = vmatpush2.msra.mxu0 0.0
    %2169 = vmatprep.subr.mxu0 0.0
    %2170 = vmatpush2.msra.mxu0 0.0
    %2171 = vmatprep.subr.mxu0 0.0
    %2172 = vmatpush2.msra.mxu0 0.0
    %2173 = vmatprep.subr.mxu0 0.0
    %2174 = vmatpush2.msra.mxu0 0.0
    %2175 = vmatprep.subr.mxu0 0.0
    %2176 = vmatpush2.msra.mxu0 0.0
    %2177 = vmatprep.subr.mxu0 0.0
    %2178 = vmatpush2.msra.mxu0 0.0
    %2179 = vmatprep.subr.mxu0 0.0
    %2180 = vmatpush2.msra.mxu0 0.0
    %2181 = vmatprep.subr.mxu0 0.0
    %2182 = vmatpush2.msra.mxu0 0.0
    %2183 = vmatprep.subr.mxu0 0.0
    %2184 = vmatpush2.msra.mxu0 0.0
    %2185 = vmatprep.subr.mxu0 0.0
    %2186 = vmatpush2.msra.mxu0 0.0
    %2187 = vmatprep.mubr.f32.mxu0 0.0
    %2188 = vmatmul.mubr.f32.gmra.mxu0 %v1709
    %v2189 = vpop.f32.mrf.mxu0
    %v2190 = vadd.f32 0.0, %v2189
    %v2191 = vpop.f32.mrf.mxu0
    %2192 = vdwg.mxu0
    %2193 = vmatprep.subr.mxu0 0.0
    %2194 = vmatpush1.msra.mxu0 0.0
    %2195 = vmatprep.subr.mxu0 0.0
    %2196 = vmatpush1.msra.mxu0 0.0
    %2197 = vmatprep.subr.mxu0 0.0
    %2198 = vmatpush1.msra.mxu0 0.0
    %2199 = vmatprep.subr.mxu0 0.0
    %2200 = vmatpush1.msra.mxu0 0.0
    %2201 = vmatprep.subr.mxu0 0.0
    %2202 = vmatpush1.msra.mxu0 0.0
    %2203 = vmatprep.subr.mxu0 0.0
    %2204 = vmatpush1.msra.mxu0 0.0
    %2205 = vmatprep.subr.mxu0 0.0
    %2206 = vmatpush1.msra.mxu0 0.0
    %2207 = vmatprep.subr.mxu0 0.0
    %2208 = vmatpush1.msra.mxu0 0.0
    %2209 = vmatprep.subr.mxu0 0.0
    %2210 = vmatpush1.msra.mxu0 0.0
    %2211 = vmatprep.subr.mxu0 0.0
    %2212 = vmatpush1.msra.mxu0 0.0
    %2213 = vmatprep.subr.mxu0 0.0
    %2214 = vmatpush1.msra.mxu0 0.0
    %2215 = vmatprep.subr.mxu0 0.0
    %2216 = vmatpush1.msra.mxu0 0.0
    %2217 = vmatprep.subr.mxu0 0.0
    %2218 = vmatpush1.msra.mxu0 %v900
    %2219 = vmatprep.subr.mxu0 0.0
    %2220 = vmatpush1.msra.mxu0 %v899
    %2221 = vmatprep.subr.mxu0 0.0
    %2222 = vmatpush1.msra.mxu0 %v898
    %2223 = vmatprep.subr.mxu0 0.0
    %2224 = vmatpush1.msra.mxu0 %v897
    %2225 = vmatprep.subr.mxu0 0.0
    %2226 = vmatpush2.msra.mxu0 0.0
    %2227 = vmatprep.subr.mxu0 0.0
    %2228 = vmatpush2.msra.mxu0 0.0
    %2229 = vmatprep.subr.mxu0 0.0
    %2230 = vmatpush2.msra.mxu0 0.0
    %2231 = vmatprep.subr.mxu0 0.0
    %2232 = vmatpush2.msra.mxu0 0.0
    %2233 = vmatprep.subr.mxu0 0.0
    %2234 = vmatpush2.msra.mxu0 0.0
    %2235 = vmatprep.subr.mxu0 0.0
    %2236 = vmatpush2.msra.mxu0 0.0
    %2237 = vmatprep.subr.mxu0 0.0
    %2238 = vmatpush2.msra.mxu0 0.0
    %2239 = vmatprep.subr.mxu0 0.0
    %2240 = vmatpush2.msra.mxu0 0.0
    %2241 = vmatprep.subr.mxu0 0.0
    %2242 = vmatpush2.msra.mxu0 0.0
    %2243 = vmatprep.subr.mxu0 0.0
    %2244 = vmatpush2.msra.mxu0 0.0
    %2245 = vmatprep.subr.mxu0 0.0
    %2246 = vmatpush2.msra.mxu0 0.0
    %2247 = vmatprep.subr.mxu0 0.0
    %2248 = vmatpush2.msra.mxu0 0.0
    %2249 = vmatprep.subr.mxu0 0.0
    %2250 = vmatpush2.msra.mxu0 0.0
    %2251 = vmatprep.subr.mxu0 0.0
    %2252 = vmatpush2.msra.mxu0 0.0
    %2253 = vmatprep.subr.mxu0 0.0
    %2254 = vmatpush2.msra.mxu0 0.0
    %2255 = vmatprep.subr.mxu0 0.0
    %2256 = vmatpush2.msra.mxu0 0.0
    %2257 = vmatprep.mubr.f32.mxu0 0.0
    %2258 = vmatmul.mubr.f32.gmra.mxu0 %v2044
    %v2259 = vpop.f32.mrf.mxu0
    %v2260 = vadd.f32 %v2190, %v2259
    %v2261 = vpop.f32.mrf.mxu0
    %2262 = vdwg.mxu0
    %v2263 = vadd.f32 %v2260, %v1518
    %v2264 = vxor.u32 %v2263, 2147483648
    %v2265 = vmul.f32 %v2264, 1.442695
    %v2266 = vpow.pop %v2265
    %v2267 = vadd.f32 %v2266, 1.0
    %v2268 = vrcp.pop %v2267
    %v2269 = vmul.f32 1.0, %v2268
    %2270 = vmatprep.subr.mxu0 0.0
    %2271 = vmatpush1.msra.mxu0 0.0
    %2272 = vmatprep.subr.mxu0 0.0
    %2273 = vmatpush1.msra.mxu0 0.0
    %2274 = vmatprep.subr.mxu0 0.0
    %2275 = vmatpush1.msra.mxu0 0.0
    %2276 = vmatprep.subr.mxu0 0.0
    %2277 = vmatpush1.msra.mxu0 0.0
    %2278 = vmatprep.subr.mxu0 0.0
    %2279 = vmatpush1.msra.mxu0 0.0
    %2280 = vmatprep.subr.mxu0 0.0
    %2281 = vmatpush1.msra.mxu0 0.0
    %2282 = vmatprep.subr.mxu0 0.0
    %2283 = vmatpush1.msra.mxu0 0.0
    %2284 = vmatprep.subr.mxu0 0.0
    %2285 = vmatpush1.msra.mxu0 0.0
    %2286 = vmatprep.subr.mxu0 0.0
    %2287 = vmatpush1.msra.mxu0 0.0
    %2288 = vmatprep.subr.mxu0 0.0
    %2289 = vmatpush1.msra.mxu0 0.0
    %2290 = vmatprep.subr.mxu0 0.0
    %2291 = vmatpush1.msra.mxu0 0.0
    %2292 = vmatprep.subr.mxu0 0.0
    %2293 = vmatpush1.msra.mxu0 0.0
    %2294 = vmatprep.subr.mxu0 0.0
    %2295 = vmatpush1.msra.mxu0 %v1537
    %2296 = vmatprep.subr.mxu0 0.0
    %2297 = vmatpush1.msra.mxu0 %v1535
    %2298 = vmatprep.subr.mxu0 0.0
    %2299 = vmatpush1.msra.mxu0 %v1533
    %2300 = vmatprep.subr.mxu0 0.0
    %2301 = vmatpush1.msra.mxu0 %v1531
    %2302 = vmatprep.subr.mxu0 0.0
    %2303 = vmatpush2.msra.mxu0 0.0
    %2304 = vmatprep.subr.mxu0 0.0
    %2305 = vmatpush2.msra.mxu0 0.0
    %2306 = vmatprep.subr.mxu0 0.0
    %2307 = vmatpush2.msra.mxu0 0.0
    %2308 = vmatprep.subr.mxu0 0.0
    %2309 = vmatpush2.msra.mxu0 0.0
    %2310 = vmatprep.subr.mxu0 0.0
    %2311 = vmatpush2.msra.mxu0 0.0
    %2312 = vmatprep.subr.mxu0 0.0
    %2313 = vmatpush2.msra.mxu0 0.0
    %2314 = vmatprep.subr.mxu0 0.0
    %2315 = vmatpush2.msra.mxu0 0.0
    %2316 = vmatprep.subr.mxu0 0.0
    %2317 = vmatpush2.msra.mxu0 0.0
    %2318 = vmatprep.subr.mxu0 0.0
    %2319 = vmatpush2.msra.mxu0 0.0
    %2320 = vmatprep.subr.mxu0 0.0
    %2321 = vmatpush2.msra.mxu0 0.0
    %2322 = vmatprep.subr.mxu0 0.0
    %2323 = vmatpush2.msra.mxu0 0.0
    %2324 = vmatprep.subr.mxu0 0.0
    %2325 = vmatpush2.msra.mxu0 0.0
    %2326 = vmatprep.subr.mxu0 0.0
    %2327 = vmatpush2.msra.mxu0 0.0
    %2328 = vmatprep.subr.mxu0 0.0
    %2329 = vmatpush2.msra.mxu0 0.0
    %2330 = vmatprep.subr.mxu0 0.0
    %2331 = vmatpush2.msra.mxu0 0.0
    %2332 = vmatprep.subr.mxu0 0.0
    %2333 = vmatpush2.msra.mxu0 0.0
    %2334 = vmatprep.mubr.f32.mxu0 0.0
    %2335 = vmatmul.mubr.f32.gmra.mxu0 %v2044
    %v2336 = vpop.f32.mrf.mxu0
    %v2337 = vadd.f32 %v1544, %v2336
    %v2338 = vpop.f32.mrf.mxu0
    %2339 = vdwg.mxu0
    %2340 = vmatprep.subr.mxu0 0.0
    %2341 = vmatpush1.msra.mxu0 0.0
    %2342 = vmatprep.subr.mxu0 0.0
    %2343 = vmatpush1.msra.mxu0 0.0
    %2344 = vmatprep.subr.mxu0 0.0
    %2345 = vmatpush1.msra.mxu0 0.0
    %2346 = vmatprep.subr.mxu0 0.0
    %2347 = vmatpush1.msra.mxu0 0.0
    %2348 = vmatprep.subr.mxu0 0.0
    %2349 = vmatpush1.msra.mxu0 0.0
    %2350 = vmatprep.subr.mxu0 0.0
    %2351 = vmatpush1.msra.mxu0 0.0
    %2352 = vmatprep.subr.mxu0 0.0
    %2353 = vmatpush1.msra.mxu0 0.0
    %2354 = vmatprep.subr.mxu0 0.0
    %2355 = vmatpush1.msra.mxu0 0.0
    %2356 = vmatprep.subr.mxu0 0.0
    %2357 = vmatpush1.msra.mxu0 0.0
    %2358 = vmatprep.subr.mxu0 0.0
    %2359 = vmatpush1.msra.mxu0 0.0
    %2360 = vmatprep.subr.mxu0 0.0
    %2361 = vmatpush1.msra.mxu0 0.0
    %2362 = vmatprep.subr.mxu0 0.0
    %2363 = vmatpush1.msra.mxu0 0.0
    %2364 = vmatprep.subr.mxu0 0.0
    %2365 = vmatpush1.msra.mxu0 %v1623
    %2366 = vmatprep.subr.mxu0 0.0
    %2367 = vmatpush1.msra.mxu0 %v1621
    %2368 = vmatprep.subr.mxu0 0.0
    %2369 = vmatpush1.msra.mxu0 %v1619
    %2370 = vmatprep.subr.mxu0 0.0
    %2371 = vmatpush1.msra.mxu0 %v1617
    %2372 = vmatprep.subr.mxu0 0.0
    %2373 = vmatpush2.msra.mxu0 0.0
    %2374 = vmatprep.subr.mxu0 0.0
    %2375 = vmatpush2.msra.mxu0 0.0
    %2376 = vmatprep.subr.mxu0 0.0
    %2377 = vmatpush2.msra.mxu0 0.0
    %2378 = vmatprep.subr.mxu0 0.0
    %2379 = vmatpush2.msra.mxu0 0.0
    %2380 = vmatprep.subr.mxu0 0.0
    %2381 = vmatpush2.msra.mxu0 0.0
    %2382 = vmatprep.subr.mxu0 0.0
    %2383 = vmatpush2.msra.mxu0 0.0
    %2384 = vmatprep.subr.mxu0 0.0
    %2385 = vmatpush2.msra.mxu0 0.0
    %2386 = vmatprep.subr.mxu0 0.0
    %2387 = vmatpush2.msra.mxu0 0.0
    %2388 = vmatprep.subr.mxu0 0.0
    %2389 = vmatpush2.msra.mxu0 0.0
    %2390 = vmatprep.subr.mxu0 0.0
    %2391 = vmatpush2.msra.mxu0 0.0
    %2392 = vmatprep.subr.mxu0 0.0
    %2393 = vmatpush2.msra.mxu0 0.0
    %2394 = vmatprep.subr.mxu0 0.0
    %2395 = vmatpush2.msra.mxu0 0.0
    %2396 = vmatprep.subr.mxu0 0.0
    %2397 = vmatpush2.msra.mxu0 0.0
    %2398 = vmatprep.subr.mxu0 0.0
    %2399 = vmatpush2.msra.mxu0 0.0
    %2400 = vmatprep.subr.mxu0 0.0
    %2401 = vmatpush2.msra.mxu0 0.0
    %2402 = vmatprep.subr.mxu0 0.0
    %2403 = vmatpush2.msra.mxu0 0.0
    %2404 = vmatprep.mubr.f32.mxu0 0.0
    %2405 = vmatmul.mubr.f32.gmra.mxu0 %v1709
    %v2406 = vpop.f32.mrf.mxu0
    %v2407 = vadd.f32 %v1629, %v2406
    %v2408 = vpop.f32.mrf.mxu0
    %2409 = vdwg.mxu0
    %v2410 = vmul.f32 %v2122, %v2407
    %v2411 = vadd.f32 %v2337, %v2410
    %v2412 = vtanh.pop %v2411
    %v2413 = vsub.f32 1.0, %v2269
    %v2414 = vmul.f32 %v2413, %v2412
    %v2415 = vmul.f32 %v2269, %v1707
    %v2416 = vadd.f32 %v2414, %v2415
    %v2418 = vsel %vm357, %v2416, 0
    %2420 = vmatprep.subr.mxu0 0.0
    %2421 = vmatpush1.msra.mxu0 0.0
    %2422 = vmatprep.subr.mxu0 0.0
    %2423 = vmatpush1.msra.mxu0 0.0
    %2424 = vmatprep.subr.mxu0 0.0
    %2425 = vmatpush1.msra.mxu0 0.0
    %2426 = vmatprep.subr.mxu0 0.0
    %2427 = vmatpush1.msra.mxu0 0.0
    %2428 = vmatprep.subr.mxu0 0.0
    %2429 = vmatpush1.msra.mxu0 0.0
    %2430 = vmatprep.subr.mxu0 0.0
    %2431 = vmatpush1.msra.mxu0 0.0
    %2432 = vmatprep.subr.mxu0 0.0
    %2433 = vmatpush1.msra.mxu0 0.0
    %2434 = vmatprep.subr.mxu0 0.0
    %2435 = vmatpush1.msra.mxu0 0.0
    %2436 = vmatprep.subr.mxu0 0.0
    %2437 = vmatpush1.msra.mxu0 0.0
    %2438 = vmatprep.subr.mxu0 0.0
    %2439 = vmatpush1.msra.mxu0 0.0
    %2440 = vmatprep.subr.mxu0 0.0
    %2441 = vmatpush1.msra.mxu0 0.0
    %2442 = vmatprep.subr.mxu0 0.0
    %2443 = vmatpush1.msra.mxu0 0.0
    %2444 = vmatprep.subr.mxu0 0.0
    %2445 = vmatpush1.msra.mxu0 %v909
    %2446 = vmatprep.subr.mxu0 0.0
    %2447 = vmatpush1.msra.mxu0 %v907
    %2448 = vmatprep.subr.mxu0 0.0
    %2449 = vmatpush1.msra.mxu0 %v905
    %2450 = vmatprep.subr.mxu0 0.0
    %2451 = vmatpush1.msra.mxu0 %v903
    %2452 = vmatprep.subr.mxu0 0.0
    %2453 = vmatpush2.msra.mxu0 0.0
    %2454 = vmatprep.subr.mxu0 0.0
    %2455 = vmatpush2.msra.mxu0 0.0
    %2456 = vmatprep.subr.mxu0 0.0
    %2457 = vmatpush2.msra.mxu0 0.0
    %2458 = vmatprep.subr.mxu0 0.0
    %2459 = vmatpush2.msra.mxu0 0.0
    %2460 = vmatprep.subr.mxu0 0.0
    %2461 = vmatpush2.msra.mxu0 0.0
    %2462 = vmatprep.subr.mxu0 0.0
    %2463 = vmatpush2.msra.mxu0 0.0
    %2464 = vmatprep.subr.mxu0 0.0
    %2465 = vmatpush2.msra.mxu0 0.0
    %2466 = vmatprep.subr.mxu0 0.0
    %2467 = vmatpush2.msra.mxu0 0.0
    %2468 = vmatprep.subr.mxu0 0.0
    %2469 = vmatpush2.msra.mxu0 0.0
    %2470 = vmatprep.subr.mxu0 0.0
    %2471 = vmatpush2.msra.mxu0 0.0
    %2472 = vmatprep.subr.mxu0 0.0
    %2473 = vmatpush2.msra.mxu0 0.0
    %2474 = vmatprep.subr.mxu0 0.0
    %2475 = vmatpush2.msra.mxu0 0.0
    %2476 = vmatprep.subr.mxu0 0.0
    %2477 = vmatpush2.msra.mxu0 0.0
    %2478 = vmatprep.subr.mxu0 0.0
    %2479 = vmatpush2.msra.mxu0 0.0
    %2480 = vmatprep.subr.mxu0 0.0
    %2481 = vmatpush2.msra.mxu0 0.0
    %2482 = vmatprep.subr.mxu0 0.0
    %2483 = vmatpush2.msra.mxu0 0.0
    %2484 = vmatprep.mubr.f32.mxu0 0.0
    %2485 = vmatmul.mubr.f32.gmra.mxu0 %v2418
    %v2486 = vpop.f32.mrf.mxu0
    %v2487 = vadd.f32 %v915, %v2486
    %v2488 = vpop.f32.mrf.mxu0
    %2489 = vdwg.mxu0
    %v2490 = vmul.f32 %v2487, %v449
    %v2491 = vmul.f32 %v2487, %v454
    %v2492 = vmul.f32 %v2487, %v459
    %v2493 = vmul.f32 %v2487, %v464
    %v2494 = vmul.f32 %v2487, %v469
    %v2495 = vmul.f32 %v2487, %v474
    %v2496 = vmul.f32 %v2487, %v479
    %v2497 = vmul.f32 %v2487, %v484
    %v2499 = vsel %vm357, %v2490, 0
    %v2502 = vsel %vm357, %v2491, 0
    %v2505 = vsel %vm357, %v2492, 0
    %v2508 = vsel %vm357, %v2493, 0
    %v2511 = vsel %vm357, %v2494, 0
    %v2514 = vsel %vm357, %v2495, 0
    %v2517 = vsel %vm357, %v2496, 0
    %v2520 = vsel %vm357, %v2497, 0
    %2522 = vmatprep.subr.mxu0 0.0
    %2523 = vmatpush1.msra.mxu0 0.0
    %2524 = vmatprep.subr.mxu0 0.0
    %2525 = vmatpush1.msra.mxu0 0.0
    %2526 = vmatprep.subr.mxu0 0.0
    %2527 = vmatpush1.msra.mxu0 0.0
    %2528 = vmatprep.subr.mxu0 0.0
    %2529 = vmatpush1.msra.mxu0 0.0
    %2530 = vmatprep.subr.mxu0 0.0
    %2531 = vmatpush1.msra.mxu0 0.0
    %2532 = vmatprep.subr.mxu0 0.0
    %2533 = vmatpush1.msra.mxu0 0.0
    %2534 = vmatprep.subr.mxu0 0.0
    %2535 = vmatpush1.msra.mxu0 0.0
    %2536 = vmatprep.subr.mxu0 0.0
    %2537 = vmatpush1.msra.mxu0 0.0
    %2538 = vmatprep.subr.mxu0 0.0
    %2539 = vmatpush1.msra.mxu0 0.0
    %2540 = vmatprep.subr.mxu0 0.0
    %2541 = vmatpush1.msra.mxu0 0.0
    %2542 = vmatprep.subr.mxu0 0.0
    %2543 = vmatpush1.msra.mxu0 0.0
    %2544 = vmatprep.subr.mxu0 0.0
    %2545 = vmatpush1.msra.mxu0 0.0
    %2546 = vmatprep.subr.mxu0 0.0
    %2547 = vmatpush1.msra.mxu0 %v1005
    %2548 = vmatprep.subr.mxu0 0.0
    %2549 = vmatpush1.msra.mxu0 %v1003
    %2550 = vmatprep.subr.mxu0 0.0
    %2551 = vmatpush1.msra.mxu0 %v1001
    %2552 = vmatprep.subr.mxu0 0.0
    %2553 = vmatpush1.msra.mxu0 %v999
    %2554 = vmatprep.subr.mxu0 0.0
    %2555 = vmatpush2.msra.mxu0 0.0
    %2556 = vmatprep.subr.mxu0 0.0
    %2557 = vmatpush2.msra.mxu0 0.0
    %2558 = vmatprep.subr.mxu0 0.0
    %2559 = vmatpush2.msra.mxu0 0.0
    %2560 = vmatprep.subr.mxu0 0.0
    %2561 = vmatpush2.msra.mxu0 0.0
    %2562 = vmatprep.subr.mxu0 0.0
    %2563 = vmatpush2.msra.mxu0 0.0
    %2564 = vmatprep.subr.mxu0 0.0
    %2565 = vmatpush2.msra.mxu0 0.0
    %2566 = vmatprep.subr.mxu0 0.0
    %2567 = vmatpush2.msra.mxu0 0.0
    %2568 = vmatprep.subr.mxu0 0.0
    %2569 = vmatpush2.msra.mxu0 0.0
    %2570 = vmatprep.subr.mxu0 0.0
    %2571 = vmatpush2.msra.mxu0 0.0
    %2572 = vmatprep.subr.mxu0 0.0
    %2573 = vmatpush2.msra.mxu0 0.0
    %2574 = vmatprep.subr.mxu0 0.0
    %2575 = vmatpush2.msra.mxu0 0.0
    %2576 = vmatprep.subr.mxu0 0.0
    %2577 = vmatpush2.msra.mxu0 0.0
    %2578 = vmatprep.subr.mxu0 0.0
    %2579 = vmatpush2.msra.mxu0 0.0
    %2580 = vmatprep.subr.mxu0 0.0
    %2581 = vmatpush2.msra.mxu0 0.0
    %2582 = vmatprep.subr.mxu0 0.0
    %2583 = vmatpush2.msra.mxu0 0.0
    %2584 = vmatprep.subr.mxu0 0.0
    %2585 = vmatpush2.msra.mxu0 0.0
    %2586 = vmatprep.mubr.f32.mxu0 0.0
    %2587 = vmatmul.mubr.f32.gmra.mxu0 %v2499
    %v2588 = vpop.f32.mrf.mxu0
    %v2589 = vadd.f32 0.0, %v2588
    %v2590 = vpop.f32.mrf.mxu0
    %2591 = vmatprep.mubr.f32.mxu0 0.0
    %2592 = vmatmul.mubr.f32.gmra.mxu0 %v2502
    %v2593 = vpop.f32.mrf.mxu0
    %v2594 = vadd.f32 0.0, %v2593
    %v2595 = vpop.f32.mrf.mxu0
    %2596 = vmatprep.mubr.f32.mxu0 0.0
    %2597 = vmatmul.mubr.f32.gmra.mxu0 %v2505
    %v2598 = vpop.f32.mrf.mxu0
    %v2599 = vadd.f32 0.0, %v2598
    %v2600 = vpop.f32.mrf.mxu0
    %2601 = vmatprep.mubr.f32.mxu0 0.0
    %2602 = vmatmul.mubr.f32.gmra.mxu0 %v2508
    %v2603 = vpop.f32.mrf.mxu0
    %v2604 = vadd.f32 0.0, %v2603
    %v2605 = vpop.f32.mrf.mxu0
    %2606 = vmatprep.mubr.f32.mxu0 0.0
    %2607 = vmatmul.mubr.f32.gmra.mxu0 %v2511
    %v2608 = vpop.f32.mrf.mxu0
    %v2609 = vadd.f32 0.0, %v2608
    %v2610 = vpop.f32.mrf.mxu0
    %2611 = vmatprep.mubr.f32.mxu0 0.0
    %2612 = vmatmul.mubr.f32.gmra.mxu0 %v2514
    %v2613 = vpop.f32.mrf.mxu0
    %v2614 = vadd.f32 0.0, %v2613
    %v2615 = vpop.f32.mrf.mxu0
    %2616 = vmatprep.mubr.f32.mxu0 0.0
    %2617 = vmatmul.mubr.f32.gmra.mxu0 %v2517
    %v2618 = vpop.f32.mrf.mxu0
    %v2619 = vadd.f32 0.0, %v2618
    %v2620 = vpop.f32.mrf.mxu0
    %2621 = vmatprep.mubr.f32.mxu0 0.0
    %2622 = vmatmul.mubr.f32.gmra.mxu0 %v2520
    %v2623 = vpop.f32.mrf.mxu0
    %v2624 = vadd.f32 0.0, %v2623
    %v2625 = vpop.f32.mrf.mxu0
    %2626 = vdwg.mxu0
    %v2627 = vmax.f32 %v2589, %v2594
    %v2628 = vmax.f32 %v2627, %v2599
    %v2629 = vmax.f32 %v2628, %v2604
    %v2630 = vmax.f32 %v2629, %v2609
    %v2631 = vmax.f32 %v2630, %v2614
    %v2632 = vmax.f32 %v2631, %v2619
    %v2633 = vmax.f32 %v2632, %v2624
    %v2634 = vsub.f32 %v2589, %v2633
    %v2635 = vmul.f32 %v2634, 1.442695
    %v2636 = vpow.pop %v2635
    %v2637 = vsub.f32 %v2594, %v2633
    %v2638 = vmul.f32 %v2637, 1.442695
    %v2639 = vpow.pop %v2638
    %v2640 = vsub.f32 %v2599, %v2633
    %v2641 = vmul.f32 %v2640, 1.442695
    %v2642 = vpow.pop %v2641
    %v2643 = vsub.f32 %v2604, %v2633
    %v2644 = vmul.f32 %v2643, 1.442695
    %v2645 = vpow.pop %v2644
    %v2646 = vsub.f32 %v2609, %v2633
    %v2647 = vmul.f32 %v2646, 1.442695
    %v2648 = vpow.pop %v2647
    %v2649 = vsub.f32 %v2614, %v2633
    %v2650 = vmul.f32 %v2649, 1.442695
    %v2651 = vpow.pop %v2650
    %v2652 = vsub.f32 %v2619, %v2633
    %v2653 = vmul.f32 %v2652, 1.442695
    %v2654 = vpow.pop %v2653
    %v2655 = vsub.f32 %v2624, %v2633
    %v2656 = vmul.f32 %v2655, 1.442695
    %v2657 = vpow.pop %v2656
    %v2658 = vmul.f32 %v2636, %v570
    %v2659 = vadd.f32 %v2636, %v2639
    %v2660 = vmul.f32 %v2639, %v575
    %v2661 = vadd.f32 %v2658, %v2660
    %v2662 = vadd.f32 %v2659, %v2642
    %v2663 = vmul.f32 %v2642, %v580
    %v2664 = vadd.f32 %v2661, %v2663
    %v2665 = vadd.f32 %v2662, %v2645
    %v2666 = vmul.f32 %v2645, %v585
    %v2667 = vadd.f32 %v2664, %v2666
    %v2668 = vadd.f32 %v2665, %v2648
    %v2669 = vmul.f32 %v2648, %v590
    %v2670 = vadd.f32 %v2667, %v2669
    %v2671 = vadd.f32 %v2668, %v2651
    %v2672 = vmul.f32 %v2651, %v595
    %v2673 = vadd.f32 %v2670, %v2672
    %v2674 = vadd.f32 %v2671, %v2654
    %v2675 = vmul.f32 %v2654, %v600
    %v2676 = vadd.f32 %v2673, %v2675
    %v2677 = vadd.f32 %v2674, %v2657
    %v2678 = vmul.f32 %v2657, %v605
    %v2679 = vadd.f32 %v2676, %v2678
    %v2680 = vrcp.pop %v2677
    %v2681 = vmul.f32 %v2679, %v2680
    %2682 = vmatprep.subr.mxu0 0.0
    %2683 = vmatpush1.msra.mxu0 0.0
    %2684 = vmatprep.subr.mxu0 0.0
    %2685 = vmatpush1.msra.mxu0 0.0
    %2686 = vmatprep.subr.mxu0 0.0
    %2687 = vmatpush1.msra.mxu0 0.0
    %2688 = vmatprep.subr.mxu0 0.0
    %2689 = vmatpush1.msra.mxu0 0.0
    %2690 = vmatprep.subr.mxu0 0.0
    %2691 = vmatpush1.msra.mxu0 0.0
    %2692 = vmatprep.subr.mxu0 0.0
    %2693 = vmatpush1.msra.mxu0 0.0
    %2694 = vmatprep.subr.mxu0 0.0
    %2695 = vmatpush1.msra.mxu0 0.0
    %2696 = vmatprep.subr.mxu0 0.0
    %2697 = vmatpush1.msra.mxu0 0.0
    %2698 = vmatprep.subr.mxu0 0.0
    %2699 = vmatpush1.msra.mxu0 0.0
    %2700 = vmatprep.subr.mxu0 0.0
    %2701 = vmatpush1.msra.mxu0 0.0
    %2702 = vmatprep.subr.mxu0 0.0
    %2703 = vmatpush1.msra.mxu0 0.0
    %2704 = vmatprep.subr.mxu0 0.0
    %2705 = vmatpush1.msra.mxu0 0.0
    %2706 = vmatprep.subr.mxu0 0.0
    %2707 = vmatpush1.msra.mxu0 %v896
    %2708 = vmatprep.subr.mxu0 0.0
    %2709 = vmatpush1.msra.mxu0 %v895
    %2710 = vmatprep.subr.mxu0 0.0
    %2711 = vmatpush1.msra.mxu0 %v894
    %2712 = vmatprep.subr.mxu0 0.0
    %2713 = vmatpush1.msra.mxu0 %v893
    %2714 = vmatprep.subr.mxu0 0.0
    %2715 = vmatpush2.msra.mxu0 0.0
    %2716 = vmatprep.subr.mxu0 0.0
    %2717 = vmatpush2.msra.mxu0 0.0
    %2718 = vmatprep.subr.mxu0 0.0
    %2719 = vmatpush2.msra.mxu0 0.0
    %2720 = vmatprep.subr.mxu0 0.0
    %2721 = vmatpush2.msra.mxu0 0.0
    %2722 = vmatprep.subr.mxu0 0.0
    %2723 = vmatpush2.msra.mxu0 0.0
    %2724 = vmatprep.subr.mxu0 0.0
    %2725 = vmatpush2.msra.mxu0 0.0
    %2726 = vmatprep.subr.mxu0 0.0
    %2727 = vmatpush2.msra.mxu0 0.0
    %2728 = vmatprep.subr.mxu0 0.0
    %2729 = vmatpush2.msra.mxu0 0.0
    %2730 = vmatprep.subr.mxu0 0.0
    %2731 = vmatpush2.msra.mxu0 0.0
    %2732 = vmatprep.subr.mxu0 0.0
    %2733 = vmatpush2.msra.mxu0 0.0
    %2734 = vmatprep.subr.mxu0 0.0
    %2735 = vmatpush2.msra.mxu0 0.0
    %2736 = vmatprep.subr.mxu0 0.0
    %2737 = vmatpush2.msra.mxu0 0.0
    %2738 = vmatprep.subr.mxu0 0.0
    %2739 = vmatpush2.msra.mxu0 0.0
    %2740 = vmatprep.subr.mxu0 0.0
    %2741 = vmatpush2.msra.mxu0 0.0
    %2742 = vmatprep.subr.mxu0 0.0
    %2743 = vmatpush2.msra.mxu0 0.0
    %2744 = vmatprep.subr.mxu0 0.0
    %2745 = vmatpush2.msra.mxu0 0.0
    %2746 = vmatprep.mubr.f32.mxu0 0.0
    %2747 = vmatmul.mubr.f32.gmra.mxu0 %v2418
    %v2748 = vpop.f32.mrf.mxu0
    %v2749 = vadd.f32 0.0, %v2748
    %v2750 = vpop.f32.mrf.mxu0
    %2751 = vdwg.mxu0
    %v2753 = vsel %vm357, %v2681, 0
    %2755 = vmatprep.subr.mxu0 0.0
    %2756 = vmatpush1.msra.mxu0 0.0
    %2757 = vmatprep.subr.mxu0 0.0
    %2758 = vmatpush1.msra.mxu0 0.0
    %2759 = vmatprep.subr.mxu0 0.0
    %2760 = vmatpush1.msra.mxu0 0.0
    %2761 = vmatprep.subr.mxu0 0.0
    %2762 = vmatpush1.msra.mxu0 0.0
    %2763 = vmatprep.subr.mxu0 0.0
    %2764 = vmatpush1.msra.mxu0 0.0
    %2765 = vmatprep.subr.mxu0 0.0
    %2766 = vmatpush1.msra.mxu0 0.0
    %2767 = vmatprep.subr.mxu0 0.0
    %2768 = vmatpush1.msra.mxu0 0.0
    %2769 = vmatprep.subr.mxu0 0.0
    %2770 = vmatpush1.msra.mxu0 0.0
    %2771 = vmatprep.subr.mxu0 0.0
    %2772 = vmatpush1.msra.mxu0 0.0
    %2773 = vmatprep.subr.mxu0 0.0
    %2774 = vmatpush1.msra.mxu0 0.0
    %2775 = vmatprep.subr.mxu0 0.0
    %2776 = vmatpush1.msra.mxu0 0.0
    %2777 = vmatprep.subr.mxu0 0.0
    %2778 = vmatpush1.msra.mxu0 0.0
    %2779 = vmatprep.subr.mxu0 0.0
    %2780 = vmatpush1.msra.mxu0 %v1275
    %2781 = vmatprep.subr.mxu0 0.0
    %2782 = vmatpush1.msra.mxu0 %v1273
    %2783 = vmatprep.subr.mxu0 0.0
    %2784 = vmatpush1.msra.mxu0 %v1271
    %2785 = vmatprep.subr.mxu0 0.0
    %2786 = vmatpush1.msra.mxu0 %v1269
    %2787 = vmatprep.subr.mxu0 0.0
    %2788 = vmatpush2.msra.mxu0 0.0
    %2789 = vmatprep.subr.mxu0 0.0
    %2790 = vmatpush2.msra.mxu0 0.0
    %2791 = vmatprep.subr.mxu0 0.0
    %2792 = vmatpush2.msra.mxu0 0.0
    %2793 = vmatprep.subr.mxu0 0.0
    %2794 = vmatpush2.msra.mxu0 0.0
    %2795 = vmatprep.subr.mxu0 0.0
    %2796 = vmatpush2.msra.mxu0 0.0
    %2797 = vmatprep.subr.mxu0 0.0
    %2798 = vmatpush2.msra.mxu0 0.0
    %2799 = vmatprep.subr.mxu0 0.0
    %2800 = vmatpush2.msra.mxu0 0.0
    %2801 = vmatprep.subr.mxu0 0.0
    %2802 = vmatpush2.msra.mxu0 0.0
    %2803 = vmatprep.subr.mxu0 0.0
    %2804 = vmatpush2.msra.mxu0 0.0
    %2805 = vmatprep.subr.mxu0 0.0
    %2806 = vmatpush2.msra.mxu0 0.0
    %2807 = vmatprep.subr.mxu0 0.0
    %2808 = vmatpush2.msra.mxu0 0.0
    %2809 = vmatprep.subr.mxu0 0.0
    %2810 = vmatpush2.msra.mxu0 0.0
    %2811 = vmatprep.subr.mxu0 0.0
    %2812 = vmatpush2.msra.mxu0 0.0
    %2813 = vmatprep.subr.mxu0 0.0
    %2814 = vmatpush2.msra.mxu0 0.0
    %2815 = vmatprep.subr.mxu0 0.0
    %2816 = vmatpush2.msra.mxu0 0.0
    %2817 = vmatprep.subr.mxu0 0.0
    %2818 = vmatpush2.msra.mxu0 0.0
    %2819 = vmatprep.mubr.f32.mxu0 0.0
    %2820 = vmatmul.mubr.f32.gmra.mxu0 %v2753
    %v2821 = vpop.f32.mrf.mxu0
    %v2822 = vadd.f32 %v2749, %v2821
    %v2823 = vpop.f32.mrf.mxu0
    %2824 = vdwg.mxu0
    %v2825 = vadd.f32 %v2822, %v1354
    %v2826 = vxor.u32 %v2825, 2147483648
    %v2827 = vmul.f32 %v2826, 1.442695
    %v2828 = vpow.pop %v2827
    %v2829 = vadd.f32 %v2828, 1.0
    %v2830 = vrcp.pop %v2829
    %v2831 = vmul.f32 1.0, %v2830
    %2832 = vmatprep.subr.mxu0 0.0
    %2833 = vmatpush1.msra.mxu0 0.0
    %2834 = vmatprep.subr.mxu0 0.0
    %2835 = vmatpush1.msra.mxu0 0.0
    %2836 = vmatprep.subr.mxu0 0.0
    %2837 = vmatpush1.msra.mxu0 0.0
    %2838 = vmatprep.subr.mxu0 0.0
    %2839 = vmatpush1.msra.mxu0 0.0
    %2840 = vmatprep.subr.mxu0 0.0
    %2841 = vmatpush1.msra.mxu0 0.0
    %2842 = vmatprep.subr.mxu0 0.0
    %2843 = vmatpush1.msra.mxu0 0.0
    %2844 = vmatprep.subr.mxu0 0.0
    %2845 = vmatpush1.msra.mxu0 0.0
    %2846 = vmatprep.subr.mxu0 0.0
    %2847 = vmatpush1.msra.mxu0 0.0
    %2848 = vmatprep.subr.mxu0 0.0
    %2849 = vmatpush1.msra.mxu0 0.0
    %2850 = vmatprep.subr.mxu0 0.0
    %2851 = vmatpush1.msra.mxu0 0.0
    %2852 = vmatprep.subr.mxu0 0.0
    %2853 = vmatpush1.msra.mxu0 0.0
    %2854 = vmatprep.subr.mxu0 0.0
    %2855 = vmatpush1.msra.mxu0 0.0
    %2856 = vmatprep.subr.mxu0 0.0
    %2857 = vmatpush1.msra.mxu0 %v1370
    %2858 = vmatprep.subr.mxu0 0.0
    %2859 = vmatpush1.msra.mxu0 %v1368
    %2860 = vmatprep.subr.mxu0 0.0
    %2861 = vmatpush1.msra.mxu0 %v1366
    %2862 = vmatprep.subr.mxu0 0.0
    %2863 = vmatpush1.msra.mxu0 %v1364
    %2864 = vmatprep.subr.mxu0 0.0
    %2865 = vmatpush2.msra.mxu0 0.0
    %2866 = vmatprep.subr.mxu0 0.0
    %2867 = vmatpush2.msra.mxu0 0.0
    %2868 = vmatprep.subr.mxu0 0.0
    %2869 = vmatpush2.msra.mxu0 0.0
    %2870 = vmatprep.subr.mxu0 0.0
    %2871 = vmatpush2.msra.mxu0 0.0
    %2872 = vmatprep.subr.mxu0 0.0
    %2873 = vmatpush2.msra.mxu0 0.0
    %2874 = vmatprep.subr.mxu0 0.0
    %2875 = vmatpush2.msra.mxu0 0.0
    %2876 = vmatprep.subr.mxu0 0.0
    %2877 = vmatpush2.msra.mxu0 0.0
    %2878 = vmatprep.subr.mxu0 0.0
    %2879 = vmatpush2.msra.mxu0 0.0
    %2880 = vmatprep.subr.mxu0 0.0
    %2881 = vmatpush2.msra.mxu0 0.0
    %2882 = vmatprep.subr.mxu0 0.0
    %2883 = vmatpush2.msra.mxu0 0.0
    %2884 = vmatprep.subr.mxu0 0.0
    %2885 = vmatpush2.msra.mxu0 0.0
    %2886 = vmatprep.subr.mxu0 0.0
    %2887 = vmatpush2.msra.mxu0 0.0
    %2888 = vmatprep.subr.mxu0 0.0
    %2889 = vmatpush2.msra.mxu0 0.0
    %2890 = vmatprep.subr.mxu0 0.0
    %2891 = vmatpush2.msra.mxu0 0.0
    %2892 = vmatprep.subr.mxu0 0.0
    %2893 = vmatpush2.msra.mxu0 0.0
    %2894 = vmatprep.subr.mxu0 0.0
    %2895 = vmatpush2.msra.mxu0 0.0
    %2896 = vmatprep.mubr.f32.mxu0 0.0
    %2897 = vmatmul.mubr.f32.gmra.mxu0 %v2418
    %v2898 = vpop.f32.mrf.mxu0
    %v2899 = vadd.f32 0.0, %v2898
    %v2900 = vpop.f32.mrf.mxu0
    %2901 = vdwg.mxu0
    %2902 = vmatprep.subr.mxu0 0.0
    %2903 = vmatpush1.msra.mxu0 0.0
    %2904 = vmatprep.subr.mxu0 0.0
    %2905 = vmatpush1.msra.mxu0 0.0
    %2906 = vmatprep.subr.mxu0 0.0
    %2907 = vmatpush1.msra.mxu0 0.0
    %2908 = vmatprep.subr.mxu0 0.0
    %2909 = vmatpush1.msra.mxu0 0.0
    %2910 = vmatprep.subr.mxu0 0.0
    %2911 = vmatpush1.msra.mxu0 0.0
    %2912 = vmatprep.subr.mxu0 0.0
    %2913 = vmatpush1.msra.mxu0 0.0
    %2914 = vmatprep.subr.mxu0 0.0
    %2915 = vmatpush1.msra.mxu0 0.0
    %2916 = vmatprep.subr.mxu0 0.0
    %2917 = vmatpush1.msra.mxu0 0.0
    %2918 = vmatprep.subr.mxu0 0.0
    %2919 = vmatpush1.msra.mxu0 0.0
    %2920 = vmatprep.subr.mxu0 0.0
    %2921 = vmatpush1.msra.mxu0 0.0
    %2922 = vmatprep.subr.mxu0 0.0
    %2923 = vmatpush1.msra.mxu0 0.0
    %2924 = vmatprep.subr.mxu0 0.0
    %2925 = vmatpush1.msra.mxu0 0.0
    %2926 = vmatprep.subr.mxu0 0.0
    %2927 = vmatpush1.msra.mxu0 %v900
    %2928 = vmatprep.subr.mxu0 0.0
    %2929 = vmatpush1.msra.mxu0 %v899
    %2930 = vmatprep.subr.mxu0 0.0
    %2931 = vmatpush1.msra.mxu0 %v898
    %2932 = vmatprep.subr.mxu0 0.0
    %2933 = vmatpush1.msra.mxu0 %v897
    %2934 = vmatprep.subr.mxu0 0.0
    %2935 = vmatpush2.msra.mxu0 0.0
    %2936 = vmatprep.subr.mxu0 0.0
    %2937 = vmatpush2.msra.mxu0 0.0
    %2938 = vmatprep.subr.mxu0 0.0
    %2939 = vmatpush2.msra.mxu0 0.0
    %2940 = vmatprep.subr.mxu0 0.0
    %2941 = vmatpush2.msra.mxu0 0.0
    %2942 = vmatprep.subr.mxu0 0.0
    %2943 = vmatpush2.msra.mxu0 0.0
    %2944 = vmatprep.subr.mxu0 0.0
    %2945 = vmatpush2.msra.mxu0 0.0
    %2946 = vmatprep.subr.mxu0 0.0
    %2947 = vmatpush2.msra.mxu0 0.0
    %2948 = vmatprep.subr.mxu0 0.0
    %2949 = vmatpush2.msra.mxu0 0.0
    %2950 = vmatprep.subr.mxu0 0.0
    %2951 = vmatpush2.msra.mxu0 0.0
    %2952 = vmatprep.subr.mxu0 0.0
    %2953 = vmatpush2.msra.mxu0 0.0
    %2954 = vmatprep.subr.mxu0 0.0
    %2955 = vmatpush2.msra.mxu0 0.0
    %2956 = vmatprep.subr.mxu0 0.0
    %2957 = vmatpush2.msra.mxu0 0.0
    %2958 = vmatprep.subr.mxu0 0.0
    %2959 = vmatpush2.msra.mxu0 0.0
    %2960 = vmatprep.subr.mxu0 0.0
    %2961 = vmatpush2.msra.mxu0 0.0
    %2962 = vmatprep.subr.mxu0 0.0
    %2963 = vmatpush2.msra.mxu0 0.0
    %2964 = vmatprep.subr.mxu0 0.0
    %2965 = vmatpush2.msra.mxu0 0.0
    %2966 = vmatprep.mubr.f32.mxu0 0.0
    %2967 = vmatmul.mubr.f32.gmra.mxu0 %v2753
    %v2968 = vpop.f32.mrf.mxu0
    %v2969 = vadd.f32 %v2899, %v2968
    %v2970 = vpop.f32.mrf.mxu0
    %2971 = vdwg.mxu0
    %v2972 = vadd.f32 %v2969, %v1518
    %v2973 = vxor.u32 %v2972, 2147483648
    %v2974 = vmul.f32 %v2973, 1.442695
    %v2975 = vpow.pop %v2974
    %v2976 = vadd.f32 %v2975, 1.0
    %v2977 = vrcp.pop %v2976
    %v2978 = vmul.f32 1.0, %v2977
    %2979 = vmatprep.subr.mxu0 0.0
    %2980 = vmatpush1.msra.mxu0 0.0
    %2981 = vmatprep.subr.mxu0 0.0
    %2982 = vmatpush1.msra.mxu0 0.0
    %2983 = vmatprep.subr.mxu0 0.0
    %2984 = vmatpush1.msra.mxu0 0.0
    %2985 = vmatprep.subr.mxu0 0.0
    %2986 = vmatpush1.msra.mxu0 0.0
    %2987 = vmatprep.subr.mxu0 0.0
    %2988 = vmatpush1.msra.mxu0 0.0
    %2989 = vmatprep.subr.mxu0 0.0
    %2990 = vmatpush1.msra.mxu0 0.0
    %2991 = vmatprep.subr.mxu0 0.0
    %2992 = vmatpush1.msra.mxu0 0.0
    %2993 = vmatprep.subr.mxu0 0.0
    %2994 = vmatpush1.msra.mxu0 0.0
    %2995 = vmatprep.subr.mxu0 0.0
    %2996 = vmatpush1.msra.mxu0 0.0
    %2997 = vmatprep.subr.mxu0 0.0
    %2998 = vmatpush1.msra.mxu0 0.0
    %2999 = vmatprep.subr.mxu0 0.0
    %3000 = vmatpush1.msra.mxu0 0.0
    %3001 = vmatprep.subr.mxu0 0.0
    %3002 = vmatpush1.msra.mxu0 0.0
    %3003 = vmatprep.subr.mxu0 0.0
    %3004 = vmatpush1.msra.mxu0 %v1537
    %3005 = vmatprep.subr.mxu0 0.0
    %3006 = vmatpush1.msra.mxu0 %v1535
    %3007 = vmatprep.subr.mxu0 0.0
    %3008 = vmatpush1.msra.mxu0 %v1533
    %3009 = vmatprep.subr.mxu0 0.0
    %3010 = vmatpush1.msra.mxu0 %v1531
    %3011 = vmatprep.subr.mxu0 0.0
    %3012 = vmatpush2.msra.mxu0 0.0
    %3013 = vmatprep.subr.mxu0 0.0
    %3014 = vmatpush2.msra.mxu0 0.0
    %3015 = vmatprep.subr.mxu0 0.0
    %3016 = vmatpush2.msra.mxu0 0.0
    %3017 = vmatprep.subr.mxu0 0.0
    %3018 = vmatpush2.msra.mxu0 0.0
    %3019 = vmatprep.subr.mxu0 0.0
    %3020 = vmatpush2.msra.mxu0 0.0
    %3021 = vmatprep.subr.mxu0 0.0
    %3022 = vmatpush2.msra.mxu0 0.0
    %3023 = vmatprep.subr.mxu0 0.0
    %3024 = vmatpush2.msra.mxu0 0.0
    %3025 = vmatprep.subr.mxu0 0.0
    %3026 = vmatpush2.msra.mxu0 0.0
    %3027 = vmatprep.subr.mxu0 0.0
    %3028 = vmatpush2.msra.mxu0 0.0
    %3029 = vmatprep.subr.mxu0 0.0
    %3030 = vmatpush2.msra.mxu0 0.0
    %3031 = vmatprep.subr.mxu0 0.0
    %3032 = vmatpush2.msra.mxu0 0.0
    %3033 = vmatprep.subr.mxu0 0.0
    %3034 = vmatpush2.msra.mxu0 0.0
    %3035 = vmatprep.subr.mxu0 0.0
    %3036 = vmatpush2.msra.mxu0 0.0
    %3037 = vmatprep.subr.mxu0 0.0
    %3038 = vmatpush2.msra.mxu0 0.0
    %3039 = vmatprep.subr.mxu0 0.0
    %3040 = vmatpush2.msra.mxu0 0.0
    %3041 = vmatprep.subr.mxu0 0.0
    %3042 = vmatpush2.msra.mxu0 0.0
    %3043 = vmatprep.mubr.f32.mxu0 0.0
    %3044 = vmatmul.mubr.f32.gmra.mxu0 %v2753
    %v3045 = vpop.f32.mrf.mxu0
    %v3046 = vadd.f32 %v1544, %v3045
    %v3047 = vpop.f32.mrf.mxu0
    %3048 = vdwg.mxu0
    %3049 = vmatprep.subr.mxu0 0.0
    %3050 = vmatpush1.msra.mxu0 0.0
    %3051 = vmatprep.subr.mxu0 0.0
    %3052 = vmatpush1.msra.mxu0 0.0
    %3053 = vmatprep.subr.mxu0 0.0
    %3054 = vmatpush1.msra.mxu0 0.0
    %3055 = vmatprep.subr.mxu0 0.0
    %3056 = vmatpush1.msra.mxu0 0.0
    %3057 = vmatprep.subr.mxu0 0.0
    %3058 = vmatpush1.msra.mxu0 0.0
    %3059 = vmatprep.subr.mxu0 0.0
    %3060 = vmatpush1.msra.mxu0 0.0
    %3061 = vmatprep.subr.mxu0 0.0
    %3062 = vmatpush1.msra.mxu0 0.0
    %3063 = vmatprep.subr.mxu0 0.0
    %3064 = vmatpush1.msra.mxu0 0.0
    %3065 = vmatprep.subr.mxu0 0.0
    %3066 = vmatpush1.msra.mxu0 0.0
    %3067 = vmatprep.subr.mxu0 0.0
    %3068 = vmatpush1.msra.mxu0 0.0
    %3069 = vmatprep.subr.mxu0 0.0
    %3070 = vmatpush1.msra.mxu0 0.0
    %3071 = vmatprep.subr.mxu0 0.0
    %3072 = vmatpush1.msra.mxu0 0.0
    %3073 = vmatprep.subr.mxu0 0.0
    %3074 = vmatpush1.msra.mxu0 %v1623
    %3075 = vmatprep.subr.mxu0 0.0
    %3076 = vmatpush1.msra.mxu0 %v1621
    %3077 = vmatprep.subr.mxu0 0.0
    %3078 = vmatpush1.msra.mxu0 %v1619
    %3079 = vmatprep.subr.mxu0 0.0
    %3080 = vmatpush1.msra.mxu0 %v1617
    %3081 = vmatprep.subr.mxu0 0.0
    %3082 = vmatpush2.msra.mxu0 0.0
    %3083 = vmatprep.subr.mxu0 0.0
    %3084 = vmatpush2.msra.mxu0 0.0
    %3085 = vmatprep.subr.mxu0 0.0
    %3086 = vmatpush2.msra.mxu0 0.0
    %3087 = vmatprep.subr.mxu0 0.0
    %3088 = vmatpush2.msra.mxu0 0.0
    %3089 = vmatprep.subr.mxu0 0.0
    %3090 = vmatpush2.msra.mxu0 0.0
    %3091 = vmatprep.subr.mxu0 0.0
    %3092 = vmatpush2.msra.mxu0 0.0
    %3093 = vmatprep.subr.mxu0 0.0
    %3094 = vmatpush2.msra.mxu0 0.0
    %3095 = vmatprep.subr.mxu0 0.0
    %3096 = vmatpush2.msra.mxu0 0.0
    %3097 = vmatprep.subr.mxu0 0.0
    %3098 = vmatpush2.msra.mxu0 0.0
    %3099 = vmatprep.subr.mxu0 0.0
    %3100 = vmatpush2.msra.mxu0 0.0
    %3101 = vmatprep.subr.mxu0 0.0
    %3102 = vmatpush2.msra.mxu0 0.0
    %3103 = vmatprep.subr.mxu0 0.0
    %3104 = vmatpush2.msra.mxu0 0.0
    %3105 = vmatprep.subr.mxu0 0.0
    %3106 = vmatpush2.msra.mxu0 0.0
    %3107 = vmatprep.subr.mxu0 0.0
    %3108 = vmatpush2.msra.mxu0 0.0
    %3109 = vmatprep.subr.mxu0 0.0
    %3110 = vmatpush2.msra.mxu0 0.0
    %3111 = vmatprep.subr.mxu0 0.0
    %3112 = vmatpush2.msra.mxu0 0.0
    %3113 = vmatprep.mubr.f32.mxu0 0.0
    %3114 = vmatmul.mubr.f32.gmra.mxu0 %v2418
    %v3115 = vpop.f32.mrf.mxu0
    %v3116 = vadd.f32 %v1629, %v3115
    %v3117 = vpop.f32.mrf.mxu0
    %3118 = vdwg.mxu0
    %v3119 = vmul.f32 %v2831, %v3116
    %v3120 = vadd.f32 %v3046, %v3119
    %v3121 = vtanh.pop %v3120
    %v3122 = vsub.f32 1.0, %v2978
    %v3123 = vmul.f32 %v3122, %v3121
    %v3124 = vmul.f32 %v2978, %v2416
    %v3125 = vadd.f32 %v3123, %v3124
    %3126 = vrot.lane.b32.xlu0 %v1707, 32
    %v3127 = vpop.permute.xlu0 %3126
    %3129 = vrot.lane.b32.xlu0 %v2416, 64
    %v3130 = vpop.permute.xlu0 %3129
    %3133 = vrot.lane.b32.xlu0 %v3125, 96
    %v3134 = vpop.permute.xlu0 %3133
    %v3136 = vsel %vm357, %v892, %v3127
    %v3137 = vsel %vm97, %v3136, %v3130
    %vm3138 = vcmask 785408
    %v3139 = vsel %vm3138, %v3137, %v3134
    %3140 = vst [vmem:[%s4] sm:$0xff] %v3139
    %v3141 = vld [vmem:[#allocation7 + $0x40] sm:$0xff]
    %v3142 = vld [vmem:[#allocation7 + $0x48] sm:$0xff]
    %v3143 = vld [vmem:[#allocation7 + $0x50] sm:$0xff]
    %v3144 = vld [vmem:[#allocation7 + $0x58] sm:$0xff]
    %v3145 = vld [vmem:[#allocation7 + $0x60] sm:$0xff]
    %v3146 = vld [vmem:[#allocation7 + $0x68] sm:$0xff]
    %v3147 = vld [vmem:[#allocation7 + $0x70] sm:$0xff]
    %v3148 = vld [vmem:[#allocation7 + $0x78] sm:$0xff]
    %v3149 = vld [vmem:[#allocation7 + $0xc2] sm:$0x1]
    %v3150 = vld [vmem:[#allocation7 + $0xc1] sm:$0x1]
    %v3151 = vlaneseq
    %v3152 = vshrl.u32 %v3151, 7
    %v3153 = vsub.s32 0, %v3152
    %v3154 = vrot.slane %v3150, %v3153
    %3159 = vrot.lane.b32.xlu0 %v3141, 64
    %v3160 = vpop.permute.xlu0 %3159
    %3161 = vrot.lane.b32.xlu0 %v3142, 64
    %v3162 = vpop.permute.xlu0 %3161
    %3163 = vrot.lane.b32.xlu0 %v3143, 64
    %v3164 = vpop.permute.xlu0 %3163
    %3165 = vrot.lane.b32.xlu0 %v3144, 64
    %v3166 = vpop.permute.xlu0 %3165
    %3172 = vrot.lane.b32.xlu0 %v3154, 32
    %v3173 = vpop.permute.xlu0 %3172
    %3175 = vmatprep.subr.mxu0 0.0
    %3176 = vmatpush1.msra.mxu0 0.0
    %3177 = vmatprep.subr.mxu0 0.0
    %3178 = vmatpush1.msra.mxu0 0.0
    %3179 = vmatprep.subr.mxu0 0.0
    %3180 = vmatpush1.msra.mxu0 0.0
    %3181 = vmatprep.subr.mxu0 0.0
    %3182 = vmatpush1.msra.mxu0 0.0
    %3183 = vmatprep.subr.mxu0 0.0
    %3184 = vmatpush1.msra.mxu0 0.0
    %3185 = vmatprep.subr.mxu0 0.0
    %3186 = vmatpush1.msra.mxu0 0.0
    %3187 = vmatprep.subr.mxu0 0.0
    %3188 = vmatpush1.msra.mxu0 0.0
    %3189 = vmatprep.subr.mxu0 0.0
    %3190 = vmatpush1.msra.mxu0 0.0
    %3191 = vmatprep.subr.mxu0 0.0
    %3192 = vmatpush1.msra.mxu0 0.0
    %3193 = vmatprep.subr.mxu0 0.0
    %3194 = vmatpush1.msra.mxu0 0.0
    %3195 = vmatprep.subr.mxu0 0.0
    %3196 = vmatpush1.msra.mxu0 0.0
    %3197 = vmatprep.subr.mxu0 0.0
    %3198 = vmatpush1.msra.mxu0 0.0
    %3199 = vmatprep.subr.mxu0 0.0
    %3200 = vmatpush1.msra.mxu0 %v3166
    %3201 = vmatprep.subr.mxu0 0.0
    %3202 = vmatpush1.msra.mxu0 %v3164
    %3203 = vmatprep.subr.mxu0 0.0
    %3204 = vmatpush1.msra.mxu0 %v3162
    %3205 = vmatprep.subr.mxu0 0.0
    %3206 = vmatpush1.msra.mxu0 %v3160
    %3207 = vmatprep.subr.mxu0 0.0
    %3208 = vmatpush2.msra.mxu0 0.0
    %3209 = vmatprep.subr.mxu0 0.0
    %3210 = vmatpush2.msra.mxu0 0.0
    %3211 = vmatprep.subr.mxu0 0.0
    %3212 = vmatpush2.msra.mxu0 0.0
    %3213 = vmatprep.subr.mxu0 0.0
    %3214 = vmatpush2.msra.mxu0 0.0
    %3215 = vmatprep.subr.mxu0 0.0
    %3216 = vmatpush2.msra.mxu0 0.0
    %3217 = vmatprep.subr.mxu0 0.0
    %3218 = vmatpush2.msra.mxu0 0.0
    %3219 = vmatprep.subr.mxu0 0.0
    %3220 = vmatpush2.msra.mxu0 0.0
    %3221 = vmatprep.subr.mxu0 0.0
    %3222 = vmatpush2.msra.mxu0 0.0
    %3223 = vmatprep.subr.mxu0 0.0
    %3224 = vmatpush2.msra.mxu0 0.0
    %3225 = vmatprep.subr.mxu0 0.0
    %3226 = vmatpush2.msra.mxu0 0.0
    %3227 = vmatprep.subr.mxu0 0.0
    %3228 = vmatpush2.msra.mxu0 0.0
    %3229 = vmatprep.subr.mxu0 0.0
    %3230 = vmatpush2.msra.mxu0 0.0
    %3231 = vmatprep.subr.mxu0 0.0
    %3232 = vmatpush2.msra.mxu0 0.0
    %3233 = vmatprep.subr.mxu0 0.0
    %3234 = vmatpush2.msra.mxu0 0.0
    %3235 = vmatprep.subr.mxu0 0.0
    %3236 = vmatpush2.msra.mxu0 0.0
    %3237 = vmatprep.subr.mxu0 0.0
    %3238 = vmatpush2.msra.mxu0 0.0
    %3239 = vmatprep.mubr.f32.mxu0 0.0
    %3240 = vmatmul.mubr.f32.gmra.mxu0 %v609
    %v3241 = vpop.f32.mrf.mxu0
    %v3242 = vadd.f32 %v3173, %v3241
    %v3243 = vpop.f32.mrf.mxu0
    %3244 = vdwg.mxu0
    %3245 = vrot.lane.b32.xlu0 %v3141, 32
    %v3246 = vpop.permute.xlu0 %3245
    %3247 = vrot.lane.b32.xlu0 %v3142, 32
    %v3248 = vpop.permute.xlu0 %3247
    %3249 = vrot.lane.b32.xlu0 %v3143, 32
    %v3250 = vpop.permute.xlu0 %3249
    %3251 = vrot.lane.b32.xlu0 %v3144, 32
    %v3252 = vpop.permute.xlu0 %3251
    %3257 = vmatprep.subr.mxu0 0.0
    %3258 = vmatpush1.msra.mxu0 0.0
    %3259 = vmatprep.subr.mxu0 0.0
    %3260 = vmatpush1.msra.mxu0 0.0
    %3261 = vmatprep.subr.mxu0 0.0
    %3262 = vmatpush1.msra.mxu0 0.0
    %3263 = vmatprep.subr.mxu0 0.0
    %3264 = vmatpush1.msra.mxu0 0.0
    %3265 = vmatprep.subr.mxu0 0.0
    %3266 = vmatpush1.msra.mxu0 0.0
    %3267 = vmatprep.subr.mxu0 0.0
    %3268 = vmatpush1.msra.mxu0 0.0
    %3269 = vmatprep.subr.mxu0 0.0
    %3270 = vmatpush1.msra.mxu0 0.0
    %3271 = vmatprep.subr.mxu0 0.0
    %3272 = vmatpush1.msra.mxu0 0.0
    %3273 = vmatprep.subr.mxu0 0.0
    %3274 = vmatpush1.msra.mxu0 0.0
    %3275 = vmatprep.subr.mxu0 0.0
    %3276 = vmatpush1.msra.mxu0 0.0
    %3277 = vmatprep.subr.mxu0 0.0
    %3278 = vmatpush1.msra.mxu0 0.0
    %3279 = vmatprep.subr.mxu0 0.0
    %3280 = vmatpush1.msra.mxu0 0.0
    %3281 = vmatprep.subr.mxu0 0.0
    %3282 = vmatpush1.msra.mxu0 %v3252
    %3283 = vmatprep.subr.mxu0 0.0
    %3284 = vmatpush1.msra.mxu0 %v3250
    %3285 = vmatprep.subr.mxu0 0.0
    %3286 = vmatpush1.msra.mxu0 %v3248
    %3287 = vmatprep.subr.mxu0 0.0
    %3288 = vmatpush1.msra.mxu0 %v3246
    %3289 = vmatprep.subr.mxu0 0.0
    %3290 = vmatpush2.msra.mxu0 0.0
    %3291 = vmatprep.subr.mxu0 0.0
    %3292 = vmatpush2.msra.mxu0 0.0
    %3293 = vmatprep.subr.mxu0 0.0
    %3294 = vmatpush2.msra.mxu0 0.0
    %3295 = vmatprep.subr.mxu0 0.0
    %3296 = vmatpush2.msra.mxu0 0.0
    %3297 = vmatprep.subr.mxu0 0.0
    %3298 = vmatpush2.msra.mxu0 0.0
    %3299 = vmatprep.subr.mxu0 0.0
    %3300 = vmatpush2.msra.mxu0 0.0
    %3301 = vmatprep.subr.mxu0 0.0
    %3302 = vmatpush2.msra.mxu0 0.0
    %3303 = vmatprep.subr.mxu0 0.0
    %3304 = vmatpush2.msra.mxu0 0.0
    %3305 = vmatprep.subr.mxu0 0.0
    %3306 = vmatpush2.msra.mxu0 0.0
    %3307 = vmatprep.subr.mxu0 0.0
    %3308 = vmatpush2.msra.mxu0 0.0
    %3309 = vmatprep.subr.mxu0 0.0
    %3310 = vmatpush2.msra.mxu0 0.0
    %3311 = vmatprep.subr.mxu0 0.0
    %3312 = vmatpush2.msra.mxu0 0.0
    %3313 = vmatprep.subr.mxu0 0.0
    %3314 = vmatpush2.msra.mxu0 0.0
    %3315 = vmatprep.subr.mxu0 0.0
    %3316 = vmatpush2.msra.mxu0 0.0
    %3317 = vmatprep.subr.mxu0 0.0
    %3318 = vmatpush2.msra.mxu0 0.0
    %3319 = vmatprep.subr.mxu0 0.0
    %3320 = vmatpush2.msra.mxu0 0.0
    %3321 = vmatprep.mubr.f32.mxu0 0.0
    %3322 = vmatmul.mubr.f32.gmra.mxu0 %v918
    %v3323 = vpop.f32.mrf.mxu0
    %v3324 = vadd.f32 0.0, %v3323
    %v3325 = vpop.f32.mrf.mxu0
    %3326 = vdwg.mxu0
    %v3327 = vadd.f32 %v3242, %v3324
    %v3328 = vmul.f32 %v72, %v892
    %v3330 = vsel %vm357, %v3328, 0
    %3332 = vmatprep.subr.mxu0 0.0
    %3333 = vmatpush1.msra.mxu0 0.0
    %3334 = vmatprep.subr.mxu0 0.0
    %3335 = vmatpush1.msra.mxu0 0.0
    %3336 = vmatprep.subr.mxu0 0.0
    %3337 = vmatpush1.msra.mxu0 0.0
    %3338 = vmatprep.subr.mxu0 0.0
    %3339 = vmatpush1.msra.mxu0 0.0
    %3340 = vmatprep.subr.mxu0 0.0
    %3341 = vmatpush1.msra.mxu0 0.0
    %3342 = vmatprep.subr.mxu0 0.0
    %3343 = vmatpush1.msra.mxu0 0.0
    %3344 = vmatprep.subr.mxu0 0.0
    %3345 = vmatpush1.msra.mxu0 0.0
    %3346 = vmatprep.subr.mxu0 0.0
    %3347 = vmatpush1.msra.mxu0 0.0
    %3348 = vmatprep.subr.mxu0 0.0
    %3349 = vmatpush1.msra.mxu0 0.0
    %3350 = vmatprep.subr.mxu0 0.0
    %3351 = vmatpush1.msra.mxu0 0.0
    %3352 = vmatprep.subr.mxu0 0.0
    %3353 = vmatpush1.msra.mxu0 0.0
    %3354 = vmatprep.subr.mxu0 0.0
    %3355 = vmatpush1.msra.mxu0 0.0
    %3356 = vmatprep.subr.mxu0 0.0
    %3357 = vmatpush1.msra.mxu0 %v3148
    %3358 = vmatprep.subr.mxu0 0.0
    %3359 = vmatpush1.msra.mxu0 %v3147
    %3360 = vmatprep.subr.mxu0 0.0
    %3361 = vmatpush1.msra.mxu0 %v3146
    %3362 = vmatprep.subr.mxu0 0.0
    %3363 = vmatpush1.msra.mxu0 %v3145
    %3364 = vmatprep.subr.mxu0 0.0
    %3365 = vmatpush2.msra.mxu0 0.0
    %3366 = vmatprep.subr.mxu0 0.0
    %3367 = vmatpush2.msra.mxu0 0.0
    %3368 = vmatprep.subr.mxu0 0.0
    %3369 = vmatpush2.msra.mxu0 0.0
    %3370 = vmatprep.subr.mxu0 0.0
    %3371 = vmatpush2.msra.mxu0 0.0
    %3372 = vmatprep.subr.mxu0 0.0
    %3373 = vmatpush2.msra.mxu0 0.0
    %3374 = vmatprep.subr.mxu0 0.0
    %3375 = vmatpush2.msra.mxu0 0.0
    %3376 = vmatprep.subr.mxu0 0.0
    %3377 = vmatpush2.msra.mxu0 0.0
    %3378 = vmatprep.subr.mxu0 0.0
    %3379 = vmatpush2.msra.mxu0 0.0
    %3380 = vmatprep.subr.mxu0 0.0
    %3381 = vmatpush2.msra.mxu0 0.0
    %3382 = vmatprep.subr.mxu0 0.0
    %3383 = vmatpush2.msra.mxu0 0.0
    %3384 = vmatprep.subr.mxu0 0.0
    %3385 = vmatpush2.msra.mxu0 0.0
    %3386 = vmatprep.subr.mxu0 0.0
    %3387 = vmatpush2.msra.mxu0 0.0
    %3388 = vmatprep.subr.mxu0 0.0
    %3389 = vmatpush2.msra.mxu0 0.0
    %3390 = vmatprep.subr.mxu0 0.0
    %3391 = vmatpush2.msra.mxu0 0.0
    %3392 = vmatprep.subr.mxu0 0.0
    %3393 = vmatpush2.msra.mxu0 0.0
    %3394 = vmatprep.subr.mxu0 0.0
    %3395 = vmatpush2.msra.mxu0 0.0
    %3396 = vmatprep.mubr.f32.mxu0 0.0
    %3397 = vmatmul.mubr.f32.gmra.mxu0 %v3330
    %v3398 = vpop.f32.mrf.mxu0
    %v3399 = vadd.f32 0.0, %v3398
    %v3400 = vpop.f32.mrf.mxu0
    %3401 = vdwg.mxu0
    %v3402 = vadd.f32 %v3327, %v3399
    %v3403 = vtanh.pop %v3402
    %v3404 = vlaneseq
    %v3405 = vshrl.u32 %v3404, 7
    %v3406 = vsub.s32 0, %v3405
    %v3407 = vrot.slane %v3149, %v3406
    %3412 = vrot.lane.b32.xlu0 %v3145, 32
    %v3413 = vpop.permute.xlu0 %3412
    %3414 = vrot.lane.b32.xlu0 %v3146, 32
    %v3415 = vpop.permute.xlu0 %3414
    %3416 = vrot.lane.b32.xlu0 %v3147, 32
    %v3417 = vpop.permute.xlu0 %3416
    %3418 = vrot.lane.b32.xlu0 %v3148, 32
    %v3419 = vpop.permute.xlu0 %3418
    %v3425 = vsel %vm357, %v3403, 0
    %3427 = vmatprep.subr.mxu0 0.0
    %3428 = vmatpush1.msra.mxu0 0.0
    %3429 = vmatprep.subr.mxu0 0.0
    %3430 = vmatpush1.msra.mxu0 0.0
    %3431 = vmatprep.subr.mxu0 0.0
    %3432 = vmatpush1.msra.mxu0 0.0
    %3433 = vmatprep.subr.mxu0 0.0
    %3434 = vmatpush1.msra.mxu0 0.0
    %3435 = vmatprep.subr.mxu0 0.0
    %3436 = vmatpush1.msra.mxu0 0.0
    %3437 = vmatprep.subr.mxu0 0.0
    %3438 = vmatpush1.msra.mxu0 0.0
    %3439 = vmatprep.subr.mxu0 0.0
    %3440 = vmatpush1.msra.mxu0 0.0
    %3441 = vmatprep.subr.mxu0 0.0
    %3442 = vmatpush1.msra.mxu0 0.0
    %3443 = vmatprep.subr.mxu0 0.0
    %3444 = vmatpush1.msra.mxu0 0.0
    %3445 = vmatprep.subr.mxu0 0.0
    %3446 = vmatpush1.msra.mxu0 0.0
    %3447 = vmatprep.subr.mxu0 0.0
    %3448 = vmatpush1.msra.mxu0 0.0
    %3449 = vmatprep.subr.mxu0 0.0
    %3450 = vmatpush1.msra.mxu0 0.0
    %3451 = vmatprep.subr.mxu0 0.0
    %3452 = vmatpush1.msra.mxu0 %v3419
    %3453 = vmatprep.subr.mxu0 0.0
    %3454 = vmatpush1.msra.mxu0 %v3417
    %3455 = vmatprep.subr.mxu0 0.0
    %3456 = vmatpush1.msra.mxu0 %v3415
    %3457 = vmatprep.subr.mxu0 0.0
    %3458 = vmatpush1.msra.mxu0 %v3413
    %3459 = vmatprep.subr.mxu0 0.0
    %3460 = vmatpush2.msra.mxu0 0.0
    %3461 = vmatprep.subr.mxu0 0.0
    %3462 = vmatpush2.msra.mxu0 0.0
    %3463 = vmatprep.subr.mxu0 0.0
    %3464 = vmatpush2.msra.mxu0 0.0
    %3465 = vmatprep.subr.mxu0 0.0
    %3466 = vmatpush2.msra.mxu0 0.0
    %3467 = vmatprep.subr.mxu0 0.0
    %3468 = vmatpush2.msra.mxu0 0.0
    %3469 = vmatprep.subr.mxu0 0.0
    %3470 = vmatpush2.msra.mxu0 0.0
    %3471 = vmatprep.subr.mxu0 0.0
    %3472 = vmatpush2.msra.mxu0 0.0
    %3473 = vmatprep.subr.mxu0 0.0
    %3474 = vmatpush2.msra.mxu0 0.0
    %3475 = vmatprep.subr.mxu0 0.0
    %3476 = vmatpush2.msra.mxu0 0.0
    %3477 = vmatprep.subr.mxu0 0.0
    %3478 = vmatpush2.msra.mxu0 0.0
    %3479 = vmatprep.subr.mxu0 0.0
    %3480 = vmatpush2.msra.mxu0 0.0
    %3481 = vmatprep.subr.mxu0 0.0
    %3482 = vmatpush2.msra.mxu0 0.0
    %3483 = vmatprep.subr.mxu0 0.0
    %3484 = vmatpush2.msra.mxu0 0.0
    %3485 = vmatprep.subr.mxu0 0.0
    %3486 = vmatpush2.msra.mxu0 0.0
    %3487 = vmatprep.subr.mxu0 0.0
    %3488 = vmatpush2.msra.mxu0 0.0
    %3489 = vmatprep.subr.mxu0 0.0
    %3490 = vmatpush2.msra.mxu0 0.0
    %3491 = vmatprep.mubr.f32.mxu0 0.0
    %3492 = vmatmul.mubr.f32.gmra.mxu0 %v3425
    %v3493 = vpop.f32.mrf.mxu0
    %v3494 = vadd.f32 %v3407, %v3493
    %v3495 = vpop.f32.mrf.mxu0
    %3496 = vdwg.mxu0
    %3497 = vmatprep.subr.mxu0 0.0
    %3498 = vmatpush1.msra.mxu0 0.0
    %3499 = vmatprep.subr.mxu0 0.0
    %3500 = vmatpush1.msra.mxu0 0.0
    %3501 = vmatprep.subr.mxu0 0.0
    %3502 = vmatpush1.msra.mxu0 0.0
    %3503 = vmatprep.subr.mxu0 0.0
    %3504 = vmatpush1.msra.mxu0 0.0
    %3505 = vmatprep.subr.mxu0 0.0
    %3506 = vmatpush1.msra.mxu0 0.0
    %3507 = vmatprep.subr.mxu0 0.0
    %3508 = vmatpush1.msra.mxu0 0.0
    %3509 = vmatprep.subr.mxu0 0.0
    %3510 = vmatpush1.msra.mxu0 0.0
    %3511 = vmatprep.subr.mxu0 0.0
    %3512 = vmatpush1.msra.mxu0 0.0
    %3513 = vmatprep.subr.mxu0 0.0
    %3514 = vmatpush1.msra.mxu0 0.0
    %3515 = vmatprep.subr.mxu0 0.0
    %3516 = vmatpush1.msra.mxu0 0.0
    %3517 = vmatprep.subr.mxu0 0.0
    %3518 = vmatpush1.msra.mxu0 0.0
    %3519 = vmatprep.subr.mxu0 0.0
    %3520 = vmatpush1.msra.mxu0 0.0
    %3521 = vmatprep.subr.mxu0 0.0
    %3522 = vmatpush1.msra.mxu0 %v3252
    %3523 = vmatprep.subr.mxu0 0.0
    %3524 = vmatpush1.msra.mxu0 %v3250
    %3525 = vmatprep.subr.mxu0 0.0
    %3526 = vmatpush1.msra.mxu0 %v3248
    %3527 = vmatprep.subr.mxu0 0.0
    %3528 = vmatpush1.msra.mxu0 %v3246
    %3529 = vmatprep.subr.mxu0 0.0
    %3530 = vmatpush2.msra.mxu0 0.0
    %3531 = vmatprep.subr.mxu0 0.0
    %3532 = vmatpush2.msra.mxu0 0.0
    %3533 = vmatprep.subr.mxu0 0.0
    %3534 = vmatpush2.msra.mxu0 0.0
    %3535 = vmatprep.subr.mxu0 0.0
    %3536 = vmatpush2.msra.mxu0 0.0
    %3537 = vmatprep.subr.mxu0 0.0
    %3538 = vmatpush2.msra.mxu0 0.0
    %3539 = vmatprep.subr.mxu0 0.0
    %3540 = vmatpush2.msra.mxu0 0.0
    %3541 = vmatprep.subr.mxu0 0.0
    %3542 = vmatpush2.msra.mxu0 0.0
    %3543 = vmatprep.subr.mxu0 0.0
    %3544 = vmatpush2.msra.mxu0 0.0
    %3545 = vmatprep.subr.mxu0 0.0
    %3546 = vmatpush2.msra.mxu0 0.0
    %3547 = vmatprep.subr.mxu0 0.0
    %3548 = vmatpush2.msra.mxu0 0.0
    %3549 = vmatprep.subr.mxu0 0.0
    %3550 = vmatpush2.msra.mxu0 0.0
    %3551 = vmatprep.subr.mxu0 0.0
    %3552 = vmatpush2.msra.mxu0 0.0
    %3553 = vmatprep.subr.mxu0 0.0
    %3554 = vmatpush2.msra.mxu0 0.0
    %3555 = vmatprep.subr.mxu0 0.0
    %3556 = vmatpush2.msra.mxu0 0.0
    %3557 = vmatprep.subr.mxu0 0.0
    %3558 = vmatpush2.msra.mxu0 0.0
    %3559 = vmatprep.subr.mxu0 0.0
    %3560 = vmatpush2.msra.mxu0 0.0
    %3561 = vmatprep.mubr.f32.mxu0 0.0
    %3562 = vmatmul.mubr.f32.gmra.mxu0 %v1709
    %v3563 = vpop.f32.mrf.mxu0
    %v3564 = vadd.f32 0.0, %v3563
    %v3565 = vpop.f32.mrf.mxu0
    %3566 = vdwg.mxu0
    %v3567 = vadd.f32 %v3242, %v3564
    %v3568 = vmul.f32 %v72, %v1707
    %v3570 = vsel %vm357, %v3568, 0
    %3572 = vmatprep.subr.mxu0 0.0
    %3573 = vmatpush1.msra.mxu0 0.0
    %3574 = vmatprep.subr.mxu0 0.0
    %3575 = vmatpush1.msra.mxu0 0.0
    %3576 = vmatprep.subr.mxu0 0.0
    %3577 = vmatpush1.msra.mxu0 0.0
    %3578 = vmatprep.subr.mxu0 0.0
    %3579 = vmatpush1.msra.mxu0 0.0
    %3580 = vmatprep.subr.mxu0 0.0
    %3581 = vmatpush1.msra.mxu0 0.0
    %3582 = vmatprep.subr.mxu0 0.0
    %3583 = vmatpush1.msra.mxu0 0.0
    %3584 = vmatprep.subr.mxu0 0.0
    %3585 = vmatpush1.msra.mxu0 0.0
    %3586 = vmatprep.subr.mxu0 0.0
    %3587 = vmatpush1.msra.mxu0 0.0
    %3588 = vmatprep.subr.mxu0 0.0
    %3589 = vmatpush1.msra.mxu0 0.0
    %3590 = vmatprep.subr.mxu0 0.0
    %3591 = vmatpush1.msra.mxu0 0.0
    %3592 = vmatprep.subr.mxu0 0.0
    %3593 = vmatpush1.msra.mxu0 0.0
    %3594 = vmatprep.subr.mxu0 0.0
    %3595 = vmatpush1.msra.mxu0 0.0
    %3596 = vmatprep.subr.mxu0 0.0
    %3597 = vmatpush1.msra.mxu0 %v3148
    %3598 = vmatprep.subr.mxu0 0.0
    %3599 = vmatpush1.msra.mxu0 %v3147
    %3600 = vmatprep.subr.mxu0 0.0
    %3601 = vmatpush1.msra.mxu0 %v3146
    %3602 = vmatprep.subr.mxu0 0.0
    %3603 = vmatpush1.msra.mxu0 %v3145
    %3604 = vmatprep.subr.mxu0 0.0
    %3605 = vmatpush2.msra.mxu0 0.0
    %3606 = vmatprep.subr.mxu0 0.0
    %3607 = vmatpush2.msra.mxu0 0.0
    %3608 = vmatprep.subr.mxu0 0.0
    %3609 = vmatpush2.msra.mxu0 0.0
    %3610 = vmatprep.subr.mxu0 0.0
    %3611 = vmatpush2.msra.mxu0 0.0
    %3612 = vmatprep.subr.mxu0 0.0
    %3613 = vmatpush2.msra.mxu0 0.0
    %3614 = vmatprep.subr.mxu0 0.0
    %3615 = vmatpush2.msra.mxu0 0.0
    %3616 = vmatprep.subr.mxu0 0.0
    %3617 = vmatpush2.msra.mxu0 0.0
    %3618 = vmatprep.subr.mxu0 0.0
    %3619 = vmatpush2.msra.mxu0 0.0
    %3620 = vmatprep.subr.mxu0 0.0
    %3621 = vmatpush2.msra.mxu0 0.0
    %3622 = vmatprep.subr.mxu0 0.0
    %3623 = vmatpush2.msra.mxu0 0.0
    %3624 = vmatprep.subr.mxu0 0.0
    %3625 = vmatpush2.msra.mxu0 0.0
    %3626 = vmatprep.subr.mxu0 0.0
    %3627 = vmatpush2.msra.mxu0 0.0
    %3628 = vmatprep.subr.mxu0 0.0
    %3629 = vmatpush2.msra.mxu0 0.0
    %3630 = vmatprep.subr.mxu0 0.0
    %3631 = vmatpush2.msra.mxu0 0.0
    %3632 = vmatprep.subr.mxu0 0.0
    %3633 = vmatpush2.msra.mxu0 0.0
    %3634 = vmatprep.subr.mxu0 0.0
    %3635 = vmatpush2.msra.mxu0 0.0
    %3636 = vmatprep.mubr.f32.mxu0 0.0
    %3637 = vmatmul.mubr.f32.gmra.mxu0 %v3570
    %v3638 = vpop.f32.mrf.mxu0
    %v3639 = vadd.f32 0.0, %v3638
    %v3640 = vpop.f32.mrf.mxu0
    %3641 = vdwg.mxu0
    %v3642 = vadd.f32 %v3567, %v3639
    %v3643 = vtanh.pop %v3642
    %v3645 = vsel %vm357, %v3643, 0
    %3647 = vmatprep.subr.mxu0 0.0
    %3648 = vmatpush1.msra.mxu0 0.0
    %3649 = vmatprep.subr.mxu0 0.0
    %3650 = vmatpush1.msra.mxu0 0.0
    %3651 = vmatprep.subr.mxu0 0.0
    %3652 = vmatpush1.msra.mxu0 0.0
    %3653 = vmatprep.subr.mxu0 0.0
    %3654 = vmatpush1.msra.mxu0 0.0
    %3655 = vmatprep.subr.mxu0 0.0
    %3656 = vmatpush1.msra.mxu0 0.0
    %3657 = vmatprep.subr.mxu0 0.0
    %3658 = vmatpush1.msra.mxu0 0.0
    %3659 = vmatprep.subr.mxu0 0.0
    %3660 = vmatpush1.msra.mxu0 0.0
    %3661 = vmatprep.subr.mxu0 0.0
    %3662 = vmatpush1.msra.mxu0 0.0
    %3663 = vmatprep.subr.mxu0 0.0
    %3664 = vmatpush1.msra.mxu0 0.0
    %3665 = vmatprep.subr.mxu0 0.0
    %3666 = vmatpush1.msra.mxu0 0.0
    %3667 = vmatprep.subr.mxu0 0.0
    %3668 = vmatpush1.msra.mxu0 0.0
    %3669 = vmatprep.subr.mxu0 0.0
    %3670 = vmatpush1.msra.mxu0 0.0
    %3671 = vmatprep.subr.mxu0 0.0
    %3672 = vmatpush1.msra.mxu0 %v3419
    %3673 = vmatprep.subr.mxu0 0.0
    %3674 = vmatpush1.msra.mxu0 %v3417
    %3675 = vmatprep.subr.mxu0 0.0
    %3676 = vmatpush1.msra.mxu0 %v3415
    %3677 = vmatprep.subr.mxu0 0.0
    %3678 = vmatpush1.msra.mxu0 %v3413
    %3679 = vmatprep.subr.mxu0 0.0
    %3680 = vmatpush2.msra.mxu0 0.0
    %3681 = vmatprep.subr.mxu0 0.0
    %3682 = vmatpush2.msra.mxu0 0.0
    %3683 = vmatprep.subr.mxu0 0.0
    %3684 = vmatpush2.msra.mxu0 0.0
    %3685 = vmatprep.subr.mxu0 0.0
    %3686 = vmatpush2.msra.mxu0 0.0
    %3687 = vmatprep.subr.mxu0 0.0
    %3688 = vmatpush2.msra.mxu0 0.0
    %3689 = vmatprep.subr.mxu0 0.0
    %3690 = vmatpush2.msra.mxu0 0.0
    %3691 = vmatprep.subr.mxu0 0.0
    %3692 = vmatpush2.msra.mxu0 0.0
    %3693 = vmatprep.subr.mxu0 0.0
    %3694 = vmatpush2.msra.mxu0 0.0
    %3695 = vmatprep.subr.mxu0 0.0
    %3696 = vmatpush2.msra.mxu0 0.0
    %3697 = vmatprep.subr.mxu0 0.0
    %3698 = vmatpush2.msra.mxu0 0.0
    %3699 = vmatprep.subr.mxu0 0.0
    %3700 = vmatpush2.msra.mxu0 0.0
    %3701 = vmatprep.subr.mxu0 0.0
    %3702 = vmatpush2.msra.mxu0 0.0
    %3703 = vmatprep.subr.mxu0 0.0
    %3704 = vmatpush2.msra.mxu0 0.0
    %3705 = vmatprep.subr.mxu0 0.0
    %3706 = vmatpush2.msra.mxu0 0.0
    %3707 = vmatprep.subr.mxu0 0.0
    %3708 = vmatpush2.msra.mxu0 0.0
    %3709 = vmatprep.subr.mxu0 0.0
    %3710 = vmatpush2.msra.mxu0 0.0
    %3711 = vmatprep.mubr.f32.mxu0 0.0
    %3712 = vmatmul.mubr.f32.gmra.mxu0 %v3645
    %v3713 = vpop.f32.mrf.mxu0
    %v3714 = vadd.f32 %v3407, %v3713
    %v3715 = vpop.f32.mrf.mxu0
    %3716 = vdwg.mxu0
    %vm3717 = vcmp.gt.f32.partialorder %v3714, %v3494
    %v3718 = vsel %vm3717, %v3714, %v3494
    %v3719 = vsel %vm3717, 1.0, 0.0
    %3720 = vmatprep.subr.mxu0 0.0
    %3721 = vmatpush1.msra.mxu0 0.0
    %3722 = vmatprep.subr.mxu0 0.0
    %3723 = vmatpush1.msra.mxu0 0.0
    %3724 = vmatprep.subr.mxu0 0.0
    %3725 = vmatpush1.msra.mxu0 0.0
    %3726 = vmatprep.subr.mxu0 0.0
    %3727 = vmatpush1.msra.mxu0 0.0
    %3728 = vmatprep.subr.mxu0 0.0
    %3729 = vmatpush1.msra.mxu0 0.0
    %3730 = vmatprep.subr.mxu0 0.0
    %3731 = vmatpush1.msra.mxu0 0.0
    %3732 = vmatprep.subr.mxu0 0.0
    %3733 = vmatpush1.msra.mxu0 0.0
    %3734 = vmatprep.subr.mxu0 0.0
    %3735 = vmatpush1.msra.mxu0 0.0
    %3736 = vmatprep.subr.mxu0 0.0
    %3737 = vmatpush1.msra.mxu0 0.0
    %3738 = vmatprep.subr.mxu0 0.0
    %3739 = vmatpush1.msra.mxu0 0.0
    %3740 = vmatprep.subr.mxu0 0.0
    %3741 = vmatpush1.msra.mxu0 0.0
    %3742 = vmatprep.subr.mxu0 0.0
    %3743 = vmatpush1.msra.mxu0 0.0
    %3744 = vmatprep.subr.mxu0 0.0
    %3745 = vmatpush1.msra.mxu0 %v3252
    %3746 = vmatprep.subr.mxu0 0.0
    %3747 = vmatpush1.msra.mxu0 %v3250
    %3748 = vmatprep.subr.mxu0 0.0
    %3749 = vmatpush1.msra.mxu0 %v3248
    %3750 = vmatprep.subr.mxu0 0.0
    %3751 = vmatpush1.msra.mxu0 %v3246
    %3752 = vmatprep.subr.mxu0 0.0
    %3753 = vmatpush2.msra.mxu0 0.0
    %3754 = vmatprep.subr.mxu0 0.0
    %3755 = vmatpush2.msra.mxu0 0.0
    %3756 = vmatprep.subr.mxu0 0.0
    %3757 = vmatpush2.msra.mxu0 0.0
    %3758 = vmatprep.subr.mxu0 0.0
    %3759 = vmatpush2.msra.mxu0 0.0
    %3760 = vmatprep.subr.mxu0 0.0
    %3761 = vmatpush2.msra.mxu0 0.0
    %3762 = vmatprep.subr.mxu0 0.0
    %3763 = vmatpush2.msra.mxu0 0.0
    %3764 = vmatprep.subr.mxu0 0.0
    %3765 = vmatpush2.msra.mxu0 0.0
    %3766 = vmatprep.subr.mxu0 0.0
    %3767 = vmatpush2.msra.mxu0 0.0
    %3768 = vmatprep.subr.mxu0 0.0
    %3769 = vmatpush2.msra.mxu0 0.0
    %3770 = vmatprep.subr.mxu0 0.0
    %3771 = vmatpush2.msra.mxu0 0.0
    %3772 = vmatprep.subr.mxu0 0.0
    %3773 = vmatpush2.msra.mxu0 0.0
    %3774 = vmatprep.subr.mxu0 0.0
    %3775 = vmatpush2.msra.mxu0 0.0
    %3776 = vmatprep.subr.mxu0 0.0
    %3777 = vmatpush2.msra.mxu0 0.0
    %3778 = vmatprep.subr.mxu0 0.0
    %3779 = vmatpush2.msra.mxu0 0.0
    %3780 = vmatprep.subr.mxu0 0.0
    %3781 = vmatpush2.msra.mxu0 0.0
    %3782 = vmatprep.subr.mxu0 0.0
    %3783 = vmatpush2.msra.mxu0 0.0
    %3784 = vmatprep.mubr.f32.mxu0 0.0
    %3785 = vmatmul.mubr.f32.gmra.mxu0 %v2418
    %v3786 = vpop.f32.mrf.mxu0
    %v3787 = vadd.f32 0.0, %v3786
    %v3788 = vpop.f32.mrf.mxu0
    %3789 = vdwg.mxu0
    %v3790 = vadd.f32 %v3242, %v3787
    %v3791 = vmul.f32 %v72, %v2416
    %v3793 = vsel %vm357, %v3791, 0
    %3795 = vmatprep.subr.mxu0 0.0
    %3796 = vmatpush1.msra.mxu0 0.0
    %3797 = vmatprep.subr.mxu0 0.0
    %3798 = vmatpush1.msra.mxu0 0.0
    %3799 = vmatprep.subr.mxu0 0.0
    %3800 = vmatpush1.msra.mxu0 0.0
    %3801 = vmatprep.subr.mxu0 0.0
    %3802 = vmatpush1.msra.mxu0 0.0
    %3803 = vmatprep.subr.mxu0 0.0
    %3804 = vmatpush1.msra.mxu0 0.0
    %3805 = vmatprep.subr.mxu0 0.0
    %3806 = vmatpush1.msra.mxu0 0.0
    %3807 = vmatprep.subr.mxu0 0.0
    %3808 = vmatpush1.msra.mxu0 0.0
    %3809 = vmatprep.subr.mxu0 0.0
    %3810 = vmatpush1.msra.mxu0 0.0
    %3811 = vmatprep.subr.mxu0 0.0
    %3812 = vmatpush1.msra.mxu0 0.0
    %3813 = vmatprep.subr.mxu0 0.0
    %3814 = vmatpush1.msra.mxu0 0.0
    %3815 = vmatprep.subr.mxu0 0.0
    %3816 = vmatpush1.msra.mxu0 0.0
    %3817 = vmatprep.subr.mxu0 0.0
    %3818 = vmatpush1.msra.mxu0 0.0
    %3819 = vmatprep.subr.mxu0 0.0
    %3820 = vmatpush1.msra.mxu0 %v3148
    %3821 = vmatprep.subr.mxu0 0.0
    %3822 = vmatpush1.msra.mxu0 %v3147
    %3823 = vmatprep.subr.mxu0 0.0
    %3824 = vmatpush1.msra.mxu0 %v3146
    %3825 = vmatprep.subr.mxu0 0.0
    %3826 = vmatpush1.msra.mxu0 %v3145
    %3827 = vmatprep.subr.mxu0 0.0
    %3828 = vmatpush2.msra.mxu0 0.0
    %3829 = vmatprep.subr.mxu0 0.0
    %3830 = vmatpush2.msra.mxu0 0.0
    %3831 = vmatprep.subr.mxu0 0.0
    %3832 = vmatpush2.msra.mxu0 0.0
    %3833 = vmatprep.subr.mxu0 0.0
    %3834 = vmatpush2.msra.mxu0 0.0
    %3835 = vmatprep.subr.mxu0 0.0
    %3836 = vmatpush2.msra.mxu0 0.0
    %3837 = vmatprep.subr.mxu0 0.0
    %3838 = vmatpush2.msra.mxu0 0.0
    %3839 = vmatprep.subr.mxu0 0.0
    %3840 = vmatpush2.msra.mxu0 0.0
    %3841 = vmatprep.subr.mxu0 0.0
    %3842 = vmatpush2.msra.mxu0 0.0
    %3843 = vmatprep.subr.mxu0 0.0
    %3844 = vmatpush2.msra.mxu0 0.0
    %3845 = vmatprep.subr.mxu0 0.0
    %3846 = vmatpush2.msra.mxu0 0.0
    %3847 = vmatprep.subr.mxu0 0.0
    %3848 = vmatpush2.msra.mxu0 0.0
    %3849 = vmatprep.subr.mxu0 0.0
    %3850 = vmatpush2.msra.mxu0 0.0
    %3851 = vmatprep.subr.mxu0 0.0
    %3852 = vmatpush2.msra.mxu0 0.0
    %3853 = vmatprep.subr.mxu0 0.0
    %3854 = vmatpush2.msra.mxu0 0.0
    %3855 = vmatprep.subr.mxu0 0.0
    %3856 = vmatpush2.msra.mxu0 0.0
    %3857 = vmatprep.subr.mxu0 0.0
    %3858 = vmatpush2.msra.mxu0 0.0
    %3859 = vmatprep.mubr.f32.mxu0 0.0
    %3860 = vmatmul.mubr.f32.gmra.mxu0 %v3793
    %v3861 = vpop.f32.mrf.mxu0
    %v3862 = vadd.f32 0.0, %v3861
    %v3863 = vpop.f32.mrf.mxu0
    %3864 = vdwg.mxu0
    %v3865 = vadd.f32 %v3790, %v3862
    %v3866 = vtanh.pop %v3865
    %v3868 = vsel %vm357, %v3866, 0
    %3870 = vmatprep.subr.mxu0 0.0
    %3871 = vmatpush1.msra.mxu0 0.0
    %3872 = vmatprep.subr.mxu0 0.0
    %3873 = vmatpush1.msra.mxu0 0.0
    %3874 = vmatprep.subr.mxu0 0.0
    %3875 = vmatpush1.msra.mxu0 0.0
    %3876 = vmatprep.subr.mxu0 0.0
    %3877 = vmatpush1.msra.mxu0 0.0
    %3878 = vmatprep.subr.mxu0 0.0
    %3879 = vmatpush1.msra.mxu0 0.0
    %3880 = vmatprep.subr.mxu0 0.0
    %3881 = vmatpush1.msra.mxu0 0.0
    %3882 = vmatprep.subr.mxu0 0.0
    %3883 = vmatpush1.msra.mxu0 0.0
    %3884 = vmatprep.subr.mxu0 0.0
    %3885 = vmatpush1.msra.mxu0 0.0
    %3886 = vmatprep.subr.mxu0 0.0
    %3887 = vmatpush1.msra.mxu0 0.0
    %3888 = vmatprep.subr.mxu0 0.0
    %3889 = vmatpush1.msra.mxu0 0.0
    %3890 = vmatprep.subr.mxu0 0.0
    %3891 = vmatpush1.msra.mxu0 0.0
    %3892 = vmatprep.subr.mxu0 0.0
    %3893 = vmatpush1.msra.mxu0 0.0
    %3894 = vmatprep.subr.mxu0 0.0
    %3895 = vmatpush1.msra.mxu0 %v3419
    %3896 = vmatprep.subr.mxu0 0.0
    %3897 = vmatpush1.msra.mxu0 %v3417
    %3898 = vmatprep.subr.mxu0 0.0
    %3899 = vmatpush1.msra.mxu0 %v3415
    %3900 = vmatprep.subr.mxu0 0.0
    %3901 = vmatpush1.msra.mxu0 %v3413
    %3902 = vmatprep.subr.mxu0 0.0
    %3903 = vmatpush2.msra.mxu0 0.0
    %3904 = vmatprep.subr.mxu0 0.0
    %3905 = vmatpush2.msra.mxu0 0.0
    %3906 = vmatprep.subr.mxu0 0.0
    %3907 = vmatpush2.msra.mxu0 0.0
    %3908 = vmatprep.subr.mxu0 0.0
    %3909 = vmatpush2.msra.mxu0 0.0
    %3910 = vmatprep.subr.mxu0 0.0
    %3911 = vmatpush2.msra.mxu0 0.0
    %3912 = vmatprep.subr.mxu0 0.0
    %3913 = vmatpush2.msra.mxu0 0.0
    %3914 = vmatprep.subr.mxu0 0.0
    %3915 = vmatpush2.msra.mxu0 0.0
    %3916 = vmatprep.subr.mxu0 0.0
    %3917 = vmatpush2.msra.mxu0 0.0
    %3918 = vmatprep.subr.mxu0 0.0
    %3919 = vmatpush2.msra.mxu0 0.0
    %3920 = vmatprep.subr.mxu0 0.0
    %3921 = vmatpush2.msra.mxu0 0.0
    %3922 = vmatprep.subr.mxu0 0.0
    %3923 = vmatpush2.msra.mxu0 0.0
    %3924 = vmatprep.subr.mxu0 0.0
    %3925 = vmatpush2.msra.mxu0 0.0
    %3926 = vmatprep.subr.mxu0 0.0
    %3927 = vmatpush2.msra.mxu0 0.0
    %3928 = vmatprep.subr.mxu0 0.0
    %3929 = vmatpush2.msra.mxu0 0.0
    %3930 = vmatprep.subr.mxu0 0.0
    %3931 = vmatpush2.msra.mxu0 0.0
    %3932 = vmatprep.subr.mxu0 0.0
    %3933 = vmatpush2.msra.mxu0 0.0
    %3934 = vmatprep.mubr.f32.mxu0 0.0
    %3935 = vmatmul.mubr.f32.gmra.mxu0 %v3868
    %v3936 = vpop.f32.mrf.mxu0
    %v3937 = vadd.f32 %v3407, %v3936
    %v3938 = vpop.f32.mrf.mxu0
    %3939 = vdwg.mxu0
    %vm3940 = vcmp.gt.f32.partialorder %v3937, %v3718
    %v3941 = vsel %vm3940, %v3937, %v3718
    %v3942 = vsel %vm3940, 2.0, %v3719
    %v3943 = vsel %vm357, %v3125, 0
    %3945 = vmatprep.subr.mxu0 0.0
    %3946 = vmatpush1.msra.mxu0 0.0
    %3947 = vmatprep.subr.mxu0 0.0
    %3948 = vmatpush1.msra.mxu0 0.0
    %3949 = vmatprep.subr.mxu0 0.0
    %3950 = vmatpush1.msra.mxu0 0.0
    %3951 = vmatprep.subr.mxu0 0.0
    %3952 = vmatpush1.msra.mxu0 0.0
    %3953 = vmatprep.subr.mxu0 0.0
    %3954 = vmatpush1.msra.mxu0 0.0
    %3955 = vmatprep.subr.mxu0 0.0
    %3956 = vmatpush1.msra.mxu0 0.0
    %3957 = vmatprep.subr.mxu0 0.0
    %3958 = vmatpush1.msra.mxu0 0.0
    %3959 = vmatprep.subr.mxu0 0.0
    %3960 = vmatpush1.msra.mxu0 0.0
    %3961 = vmatprep.subr.mxu0 0.0
    %3962 = vmatpush1.msra.mxu0 0.0
    %3963 = vmatprep.subr.mxu0 0.0
    %3964 = vmatpush1.msra.mxu0 0.0
    %3965 = vmatprep.subr.mxu0 0.0
    %3966 = vmatpush1.msra.mxu0 0.0
    %3967 = vmatprep.subr.mxu0 0.0
    %3968 = vmatpush1.msra.mxu0 0.0
    %3969 = vmatprep.subr.mxu0 0.0
    %3970 = vmatpush1.msra.mxu0 %v3252
    %3971 = vmatprep.subr.mxu0 0.0
    %3972 = vmatpush1.msra.mxu0 %v3250
    %3973 = vmatprep.subr.mxu0 0.0
    %3974 = vmatpush1.msra.mxu0 %v3248
    %3975 = vmatprep.subr.mxu0 0.0
    %3976 = vmatpush1.msra.mxu0 %v3246
    %3977 = vmatprep.subr.mxu0 0.0
    %3978 = vmatpush2.msra.mxu0 0.0
    %3979 = vmatprep.subr.mxu0 0.0
    %3980 = vmatpush2.msra.mxu0 0.0
    %3981 = vmatprep.subr.mxu0 0.0
    %3982 = vmatpush2.msra.mxu0 0.0
    %3983 = vmatprep.subr.mxu0 0.0
    %3984 = vmatpush2.msra.mxu0 0.0
    %3985 = vmatprep.subr.mxu0 0.0
    %3986 = vmatpush2.msra.mxu0 0.0
    %3987 = vmatprep.subr.mxu0 0.0
    %3988 = vmatpush2.msra.mxu0 0.0
    %3989 = vmatprep.subr.mxu0 0.0
    %3990 = vmatpush2.msra.mxu0 0.0
    %3991 = vmatprep.subr.mxu0 0.0
    %3992 = vmatpush2.msra.mxu0 0.0
    %3993 = vmatprep.subr.mxu0 0.0
    %3994 = vmatpush2.msra.mxu0 0.0
    %3995 = vmatprep.subr.mxu0 0.0
    %3996 = vmatpush2.msra.mxu0 0.0
    %3997 = vmatprep.subr.mxu0 0.0
    %3998 = vmatpush2.msra.mxu0 0.0
    %3999 = vmatprep.subr.mxu0 0.0
    %4000 = vmatpush2.msra.mxu0 0.0
    %4001 = vmatprep.subr.mxu0 0.0
    %4002 = vmatpush2.msra.mxu0 0.0
    %4003 = vmatprep.subr.mxu0 0.0
    %4004 = vmatpush2.msra.mxu0 0.0
    %4005 = vmatprep.subr.mxu0 0.0
    %4006 = vmatpush2.msra.mxu0 0.0
    %4007 = vmatprep.subr.mxu0 0.0
    %4008 = vmatpush2.msra.mxu0 0.0
    %4009 = vmatprep.mubr.f32.mxu0 0.0
    %4010 = vmatmul.mubr.f32.gmra.mxu0 %v3943
    %v4011 = vpop.f32.mrf.mxu0
    %v4012 = vadd.f32 0.0, %v4011
    %v4013 = vpop.f32.mrf.mxu0
    %4014 = vdwg.mxu0
    %v4015 = vadd.f32 %v3242, %v4012
    %v4016 = vmul.f32 %v72, %v3125
    %v4018 = vsel %vm357, %v4016, 0
    %4020 = vmatprep.subr.mxu0 0.0
    %4021 = vmatpush1.msra.mxu0 0.0
    %4022 = vmatprep.subr.mxu0 0.0
    %4023 = vmatpush1.msra.mxu0 0.0
    %4024 = vmatprep.subr.mxu0 0.0
    %4025 = vmatpush1.msra.mxu0 0.0
    %4026 = vmatprep.subr.mxu0 0.0
    %4027 = vmatpush1.msra.mxu0 0.0
    %4028 = vmatprep.subr.mxu0 0.0
    %4029 = vmatpush1.msra.mxu0 0.0
    %4030 = vmatprep.subr.mxu0 0.0
    %4031 = vmatpush1.msra.mxu0 0.0
    %4032 = vmatprep.subr.mxu0 0.0
    %4033 = vmatpush1.msra.mxu0 0.0
    %4034 = vmatprep.subr.mxu0 0.0
    %4035 = vmatpush1.msra.mxu0 0.0
    %4036 = vmatprep.subr.mxu0 0.0
    %4037 = vmatpush1.msra.mxu0 0.0
    %4038 = vmatprep.subr.mxu0 0.0
    %4039 = vmatpush1.msra.mxu0 0.0
    %4040 = vmatprep.subr.mxu0 0.0
    %4041 = vmatpush1.msra.mxu0 0.0
    %4042 = vmatprep.subr.mxu0 0.0
    %4043 = vmatpush1.msra.mxu0 0.0
    %4044 = vmatprep.subr.mxu0 0.0
    %4045 = vmatpush1.msra.mxu0 %v3148
    %4046 = vmatprep.subr.mxu0 0.0
    %4047 = vmatpush1.msra.mxu0 %v3147
    %4048 = vmatprep.subr.mxu0 0.0
    %4049 = vmatpush1.msra.mxu0 %v3146
    %4050 = vmatprep.subr.mxu0 0.0
    %4051 = vmatpush1.msra.mxu0 %v3145
    %4052 = vmatprep.subr.mxu0 0.0
    %4053 = vmatpush2.msra.mxu0 0.0
    %4054 = vmatprep.subr.mxu0 0.0
    %4055 = vmatpush2.msra.mxu0 0.0
    %4056 = vmatprep.subr.mxu0 0.0
    %4057 = vmatpush2.msra.mxu0 0.0
    %4058 = vmatprep.subr.mxu0 0.0
    %4059 = vmatpush2.msra.mxu0 0.0
    %4060 = vmatprep.subr.mxu0 0.0
    %4061 = vmatpush2.msra.mxu0 0.0
    %4062 = vmatprep.subr.mxu0 0.0
    %4063 = vmatpush2.msra.mxu0 0.0
    %4064 = vmatprep.subr.mxu0 0.0
    %4065 = vmatpush2.msra.mxu0 0.0
    %4066 = vmatprep.subr.mxu0 0.0
    %4067 = vmatpush2.msra.mxu0 0.0
    %4068 = vmatprep.subr.mxu0 0.0
    %4069 = vmatpush2.msra.mxu0 0.0
    %4070 = vmatprep.subr.mxu0 0.0
    %4071 = vmatpush2.msra.mxu0 0.0
    %4072 = vmatprep.subr.mxu0 0.0
    %4073 = vmatpush2.msra.mxu0 0.0
    %4074 = vmatprep.subr.mxu0 0.0
    %4075 = vmatpush2.msra.mxu0 0.0
    %4076 = vmatprep.subr.mxu0 0.0
    %4077 = vmatpush2.msra.mxu0 0.0
    %4078 = vmatprep.subr.mxu0 0.0
    %4079 = vmatpush2.msra.mxu0 0.0
    %4080 = vmatprep.subr.mxu0 0.0
    %4081 = vmatpush2.msra.mxu0 0.0
    %4082 = vmatprep.subr.mxu0 0.0
    %4083 = vmatpush2.msra.mxu0 0.0
    %4084 = vmatprep.mubr.f32.mxu0 0.0
    %4085 = vmatmul.mubr.f32.gmra.mxu0 %v4018
    %v4086 = vpop.f32.mrf.mxu0
    %v4087 = vadd.f32 0.0, %v4086
    %v4088 = vpop.f32.mrf.mxu0
    %4089 = vdwg.mxu0
    %v4090 = vadd.f32 %v4015, %v4087
    %v4091 = vtanh.pop %v4090
    %v4093 = vsel %vm357, %v4091, 0
    %4095 = vmatprep.subr.mxu0 0.0
    %4096 = vmatpush1.msra.mxu0 0.0
    %4097 = vmatprep.subr.mxu0 0.0
    %4098 = vmatpush1.msra.mxu0 0.0
    %4099 = vmatprep.subr.mxu0 0.0
    %4100 = vmatpush1.msra.mxu0 0.0
    %4101 = vmatprep.subr.mxu0 0.0
    %4102 = vmatpush1.msra.mxu0 0.0
    %4103 = vmatprep.subr.mxu0 0.0
    %4104 = vmatpush1.msra.mxu0 0.0
    %4105 = vmatprep.subr.mxu0 0.0
    %4106 = vmatpush1.msra.mxu0 0.0
    %4107 = vmatprep.subr.mxu0 0.0
    %4108 = vmatpush1.msra.mxu0 0.0
    %4109 = vmatprep.subr.mxu0 0.0
    %4110 = vmatpush1.msra.mxu0 0.0
    %4111 = vmatprep.subr.mxu0 0.0
    %4112 = vmatpush1.msra.mxu0 0.0
    %4113 = vmatprep.subr.mxu0 0.0
    %4114 = vmatpush1.msra.mxu0 0.0
    %4115 = vmatprep.subr.mxu0 0.0
    %4116 = vmatpush1.msra.mxu0 0.0
    %4117 = vmatprep.subr.mxu0 0.0
    %4118 = vmatpush1.msra.mxu0 0.0
    %4119 = vmatprep.subr.mxu0 0.0
    %4120 = vmatpush1.msra.mxu0 %v3419
    %4121 = vmatprep.subr.mxu0 0.0
    %4122 = vmatpush1.msra.mxu0 %v3417
    %4123 = vmatprep.subr.mxu0 0.0
    %4124 = vmatpush1.msra.mxu0 %v3415
    %4125 = vmatprep.subr.mxu0 0.0
    %4126 = vmatpush1.msra.mxu0 %v3413
    %4127 = vmatprep.subr.mxu0 0.0
    %4128 = vmatpush2.msra.mxu0 0.0
    %4129 = vmatprep.subr.mxu0 0.0
    %4130 = vmatpush2.msra.mxu0 0.0
    %4131 = vmatprep.subr.mxu0 0.0
    %4132 = vmatpush2.msra.mxu0 0.0
    %4133 = vmatprep.subr.mxu0 0.0
    %4134 = vmatpush2.msra.mxu0 0.0
    %4135 = vmatprep.subr.mxu0 0.0
    %4136 = vmatpush2.msra.mxu0 0.0
    %4137 = vmatprep.subr.mxu0 0.0
    %4138 = vmatpush2.msra.mxu0 0.0
    %4139 = vmatprep.subr.mxu0 0.0
    %4140 = vmatpush2.msra.mxu0 0.0
    %4141 = vmatprep.subr.mxu0 0.0
    %4142 = vmatpush2.msra.mxu0 0.0
    %4143 = vmatprep.subr.mxu0 0.0
    %4144 = vmatpush2.msra.mxu0 0.0
    %4145 = vmatprep.subr.mxu0 0.0
    %4146 = vmatpush2.msra.mxu0 0.0
    %4147 = vmatprep.subr.mxu0 0.0
    %4148 = vmatpush2.msra.mxu0 0.0
    %4149 = vmatprep.subr.mxu0 0.0
    %4150 = vmatpush2.msra.mxu0 0.0
    %4151 = vmatprep.subr.mxu0 0.0
    %4152 = vmatpush2.msra.mxu0 0.0
    %4153 = vmatprep.subr.mxu0 0.0
    %4154 = vmatpush2.msra.mxu0 0.0
    %4155 = vmatprep.subr.mxu0 0.0
    %4156 = vmatpush2.msra.mxu0 0.0
    %4157 = vmatprep.subr.mxu0 0.0
    %4158 = vmatpush2.msra.mxu0 0.0
    %4159 = vmatprep.mubr.f32.mxu0 0.0
    %4160 = vmatmul.mubr.f32.gmra.mxu0 %v4093
    %v4161 = vpop.f32.mrf.mxu0
    %v4162 = vadd.f32 %v3407, %v4161
    %v4163 = vpop.f32.mrf.mxu0
    %4164 = vdwg.mxu0
    %vm4165 = vcmp.gt.f32.partialorder %v4162, %v3941
    %v4166 = vsel %vm4165, %v4162, %v3941
    %v4167 = vsel %vm4165, 3.0, %v3942
    %4169 = vset.pattern.permute.xlu0 0
    %4170 = vperm.xlu0 %4169, %v4166
    %v4171 = vpop.permute.xlu0 %4170
    %4174 = vset.pattern.permute.xlu0 0
    %4175 = vperm.xlu0 %4174, %v4167
    %v4176 = vpop.permute.xlu0 %4175
    %v4178 = vsel %vm97, %v4171, %v4176
    %4179 = vst [vmem:[%s5] sm:$0xff] %v4178
    // Predicated region
    $region34: #{infohopnet_forward.1} parent=1 // pred_check
      _
    $region35: #{infohopnet_forward.1} parent=1 // pred_check_branch
      %4181 = sbr.rel (0) target = $region37
    $region36: #{infohopnet_forward.1} parent=1 // pred_region
      _
    $region37: #{infohopnet_forward.1} parent=1 // pred_fallthru
      _
    // Predicated region
    $region38: #{infohopnet_forward.1} parent=1 // pred_check
      _
    $region39: #{infohopnet_forward.1} parent=1 // pred_check_branch
      %4183 = sbr.rel (0) target = $region41
    $region40: #{infohopnet_forward.1} parent=1 // pred_region
      _
    $region41: #{infohopnet_forward.1} parent=1 // pred_fallthru
      _
    // Predicated region
    $region42: #{infohopnet_forward.1} parent=1 // pred_check
      _
    $region43: #{infohopnet_forward.1} parent=1 // pred_check_branch
      %4185 = sbr.rel (0) target = $region45
    $region44: #{infohopnet_forward.1} parent=1 // pred_region
      _
    $region45: #{infohopnet_forward.1} parent=1 // pred_fallthru
      _
    // Predicated region
    $region46: #{infohopnet_forward.1} parent=1 // pred_check
      _
    $region47: #{infohopnet_forward.1} parent=1 // pred_check_branch
      %4187 = sbr.rel (0) target = $region49
    $region48: #{infohopnet_forward.1} parent=1 // pred_region
      _
    $region49: #{infohopnet_forward.1} parent=1 // pred_fallthru
      _
    %4188 = vsyncpa [#allocation3], 1
    %4189 = vsyncpa [#allocation5], 1
    %4190 = vsyncpa [#allocation8], 1

</llo_original>
